<compile_context>
chip_gen: v7x
topology: tpu7x:2x2x1
jax: 0.10.0
libtpu: 0.0.40
codegen_flags: <defaults>
</compile_context>

<pallas_src>
import jax
import jax.numpy as jnp
from jax.experimental import pallas as pl
from jax.experimental.pallas import tpu as pltpu

OUT_DIM = 784  # 28 * 28


def _round_up(x, m):
    return ((x + m - 1) // m) * m


def _leaky_relu(x, slope=0.2):
    return jnp.where(x > 0, x, slope * x)


def generator_kernel(z_ref,
                     w1_ref, b1_ref,
                     w2_ref, b2_ref,
                     w3_ref, b3_ref,
                     w4_ref, b4_ref,
                     out_ref):
    # Matmuls: bf16 x bf16 on the MXU with f32 accumulation.
    # Elementwise (bias, leaky-relu, tanh) in f32 on VPU/EUP.
    h = jnp.dot(z_ref[...].astype(jnp.bfloat16), w1_ref[...],
                preferred_element_type=jnp.float32)
    h = _leaky_relu(h + b1_ref[...])

    h = jnp.dot(h.astype(jnp.bfloat16), w2_ref[...],
                preferred_element_type=jnp.float32)
    h = _leaky_relu(h + b2_ref[...])

    h = jnp.dot(h.astype(jnp.bfloat16), w3_ref[...],
                preferred_element_type=jnp.float32)
    h = _leaky_relu(h + b3_ref[...])

    h = jnp.dot(h.astype(jnp.bfloat16), w4_ref[...],
                preferred_element_type=jnp.float32)
    out_ref[...] = jnp.tanh(h + b4_ref[...]).astype(out_ref.dtype)


def _choose_batch_tile(B, batch_tile):
    """Pick a batch tile (multiple of 8) that balances per-step overhead,
    padded-row waste and megacore utilisation."""
    if B <= 8:
        return 8
    if B <= batch_tile:
        # Once the batch is big enough that compute matters, split into two
        # tiles so both v7x TensorCores get work (duplicated weight DMA is
        # ~1 us and amortized).
        if B >= 256:
            return _round_up(pl.cdiv(B, 2), 8)
        return _round_up(B, 8)
    # Large batch: among multiples of 8 in [64, batch_tile], minimize padded
    # rows; ties go to the largest tile (lower per-grid-step overhead).
    best_tb = batch_tile
    best_pad = _round_up(B, batch_tile) - B
    for tb in range(batch_tile - 8, 63, -8):
        pad = _round_up(B, tb) - B
        if pad < best_pad:
            best_tb, best_pad = tb, pad
    return best_tb


def generator_forward(z, params, *, batch_tile=256):
    """z: (B, latent_dim) f32 -> (B, 1, 28, 28) f32."""
    (w1, b1), (w2, b2), (w3, b3), (w4, b4) = params
    B, latent = z.shape

    tb = _choose_batch_tile(B, batch_tile)
    b_pad = _round_up(B, tb)
    if b_pad != B:
        z = jnp.pad(z, ((0, b_pad - B), (0, 0)))
    grid = (b_pad // tb,)

    def tiled(shape):
        # Batch-tiled arrays: advance with the grid index.
        return pl.BlockSpec(shape, lambda i: (i, 0))

    def resident(shape):
        # Weights / biases: constant block index -> loaded once, stay in VMEM
        # while batch tiles stream through.
        return pl.BlockSpec(shape, lambda i: (0, 0))

    out = pl.pallas_call(
        generator_kernel,
        out_shape=jax.ShapeDtypeStruct((b_pad, OUT_DIM), jnp.float32),
        grid=grid,
        in_specs=[
            tiled((tb, latent)),
            resident(w1.shape), resident(b1.shape),
            resident(w2.shape), resident(b2.shape),
            resident(w3.shape), resident(b3.shape),
            resident(w4.shape), resident(b4.shape),
        ],
        out_specs=tiled((tb, OUT_DIM)),
        compiler_params=pltpu.CompilerParams(
            dimension_semantics=("parallel",),
            vmem_limit_bytes=32 * 1024 * 1024),
    )(z, w1, b1, w2, b2, w3, b3, w4, b4)

    if b_pad != B:
        out = out[:B]
    return out.reshape(B, 1, 28, 28)


def init_params(key, latent_dim):
    """torch.nn.Linear-style init (U(-1/sqrt(fan_in), +1/sqrt(fan_in)));
    weights stored bf16, biases f32."""
    dims = [latent_dim, 256, 512, 1024, OUT_DIM]
    params = []
    for i in range(4):
        fan_in, fan_out = dims[i], dims[i + 1]
        key, kw, kb = jax.random.split(key, 3)
        bound = 1.0 / (fan_in ** 0.5)
        w = jax.random.uniform(kw, (fan_in, fan_out), jnp.float32, -bound, bound)
        b = jax.random.uniform(kb, (1, fan_out), jnp.float32, -bound, bound)
        params.append((w.astype(jnp.bfloat16), b))
    return params


def reference_forward(z, params):
    """Plain-JAX reference using the same bf16 weights / f32 accumulation."""
    h = z
    for i, (w, b) in enumerate(params):
        h = jnp.dot(h.astype(jnp.bfloat16), w,
                    preferred_element_type=jnp.float32) + b
        h = jnp.where(h > 0, h, 0.2 * h) if i < 3 else jnp.tanh(h)
    return h.reshape(z.shape[0], 1, 28, 28)


if __name__ == "__main__":
    latent_dim = 64
    batch = 8

    key = jax.random.PRNGKey(0)
    key_z, key_p = jax.random.split(key)
    z = jax.random.normal(key_z, (batch, latent_dim), dtype=jnp.float32)
    params = init_params(key_p, latent_dim)

    img = generator_forward(z, params)
    img = jax.block_until_ready(img)

    ref = reference_forward(z, params)
    assert img.shape == (batch, 1, 28, 28), img.shape
    assert jnp.allclose(img, ref, atol=5e-3, rtol=5e-3), "mismatch vs JAX reference"

    print("KERNEL_OK")
</pallas_src>

<mosaic_0001>
module attributes {stable_mosaic.version = 11 : i64} {
  func.func @generator_kernel(%arg0: i32, %arg1: memref<8x64xf32, #tpu.memory_space<vmem>>, %arg2: memref<64x256xbf16, #tpu.memory_space<vmem>>, %arg3: memref<1x256xf32, #tpu.memory_space<vmem>>, %arg4: memref<256x512xbf16, #tpu.memory_space<vmem>>, %arg5: memref<1x512xf32, #tpu.memory_space<vmem>>, %arg6: memref<512x1024xbf16, #tpu.memory_space<vmem>>, %arg7: memref<1x1024xf32, #tpu.memory_space<vmem>>, %arg8: memref<1024x784xbf16, #tpu.memory_space<vmem>>, %arg9: memref<1x784xf32, #tpu.memory_space<vmem>>, %arg10: memref<8x784xf32, #tpu.memory_space<vmem>>) attributes {dimension_semantics = [#tpu.dimension_semantics<parallel>], iteration_bounds = array<i64: 1>, scalar_prefetch = 0 : i64, scratch_operands = 0 : i64, tpu.core_type = #tpu.core_type<tc>, window_params = [{transform_indices = @transform_0, window_bounds = array<i64: 8, 64>}, {pipeline_mode = #tpu.pipeline_mode<synchronous>, transform_indices = @transform_1, window_bounds = array<i64: 64, 256>}, {pipeline_mode = #tpu.pipeline_mode<synchronous>, transform_indices = @transform_2, window_bounds = array<i64: 1, 256>}, {pipeline_mode = #tpu.pipeline_mode<synchronous>, transform_indices = @transform_3, window_bounds = array<i64: 256, 512>}, {pipeline_mode = #tpu.pipeline_mode<synchronous>, transform_indices = @transform_4, window_bounds = array<i64: 1, 512>}, {pipeline_mode = #tpu.pipeline_mode<synchronous>, transform_indices = @transform_5, window_bounds = array<i64: 512, 1024>}, {pipeline_mode = #tpu.pipeline_mode<synchronous>, transform_indices = @transform_6, window_bounds = array<i64: 1, 1024>}, {pipeline_mode = #tpu.pipeline_mode<synchronous>, transform_indices = @transform_7, window_bounds = array<i64: 1024, 784>}, {pipeline_mode = #tpu.pipeline_mode<synchronous>, transform_indices = @transform_8, window_bounds = array<i64: 1, 784>}, {transform_indices = @transform_9, window_bounds = array<i64: 8, 784>}]} {
    %c0 = arith.constant 0 : index
    %c0_0 = arith.constant 0 : index
    %0 = vector.load %arg1[%c0, %c0_0] : memref<8x64xf32, #tpu.memory_space<vmem>>, vector<8x64xf32>
    %1 = arith.truncf %0 : vector<8x64xf32> to vector<8x64xbf16>
    %c0_1 = arith.constant 0 : index
    %c0_2 = arith.constant 0 : index
    %2 = vector.load %arg2[%c0_1, %c0_2] : memref<64x256xbf16, #tpu.memory_space<vmem>>, vector<64x256xbf16>
    %cst = arith.constant dense<0.000000e+00> : vector<8x256xf32>
    %3 = tpu.matmul %1, %2, %cst {dimension_numbers = #tpu.dot_dimension_numbers<[1], [0], [0], [1], [0, 0, 1, 1], [], []>} : vector<8x64xbf16>, vector<64x256xbf16>, vector<8x256xf32> -> vector<8x256xf32>
    %c0_3 = arith.constant 0 : index
    %c0_4 = arith.constant 0 : index
    %4 = vector.load %arg3[%c0_3, %c0_4] : memref<1x256xf32, #tpu.memory_space<vmem>>, vector<1x256xf32>
    %5 = vector.broadcast %4 : vector<1x256xf32> to vector<8x256xf32>
    %6 = arith.addf %3, %5 : vector<8x256xf32>
    %cst_5 = arith.constant 0.000000e+00 : f32
    %7 = vector.broadcast %cst_5 : f32 to vector<8x256xf32>
    %8 = arith.cmpf ogt, %6, %7 : vector<8x256xf32>
    %cst_6 = arith.constant 2.000000e-01 : f32
    %9 = vector.broadcast %cst_6 : f32 to vector<8x256xf32>
    %10 = arith.mulf %9, %6 : vector<8x256xf32>
    %11 = arith.select %8, %6, %10 : vector<8x256xi1>, vector<8x256xf32>
    %12 = arith.truncf %11 : vector<8x256xf32> to vector<8x256xbf16>
    %c0_7 = arith.constant 0 : index
    %c0_8 = arith.constant 0 : index
    %13 = vector.load %arg4[%c0_7, %c0_8] : memref<256x512xbf16, #tpu.memory_space<vmem>>, vector<256x512xbf16>
    %cst_9 = arith.constant dense<0.000000e+00> : vector<8x512xf32>
    %14 = tpu.matmul %12, %13, %cst_9 {dimension_numbers = #tpu.dot_dimension_numbers<[1], [0], [0], [1], [0, 0, 1, 1], [], []>} : vector<8x256xbf16>, vector<256x512xbf16>, vector<8x512xf32> -> vector<8x512xf32>
    %c0_10 = arith.constant 0 : index
    %c0_11 = arith.constant 0 : index
    %15 = vector.load %arg5[%c0_10, %c0_11] : memref<1x512xf32, #tpu.memory_space<vmem>>, vector<1x512xf32>
    %16 = vector.broadcast %15 : vector<1x512xf32> to vector<8x512xf32>
    %17 = arith.addf %14, %16 : vector<8x512xf32>
    %cst_12 = arith.constant 0.000000e+00 : f32
    %18 = vector.broadcast %cst_12 : f32 to vector<8x512xf32>
    %19 = arith.cmpf ogt, %17, %18 : vector<8x512xf32>
    %cst_13 = arith.constant 2.000000e-01 : f32
    %20 = vector.broadcast %cst_13 : f32 to vector<8x512xf32>
    %21 = arith.mulf %20, %17 : vector<8x512xf32>
    %22 = arith.select %19, %17, %21 : vector<8x512xi1>, vector<8x512xf32>
    %23 = arith.truncf %22 : vector<8x512xf32> to vector<8x512xbf16>
    %c0_14 = arith.constant 0 : index
    %c0_15 = arith.constant 0 : index
    %24 = vector.load %arg6[%c0_14, %c0_15] : memref<512x1024xbf16, #tpu.memory_space<vmem>>, vector<512x1024xbf16>
    %cst_16 = arith.constant dense<0.000000e+00> : vector<8x1024xf32>
    %25 = tpu.matmul %23, %24, %cst_16 {dimension_numbers = #tpu.dot_dimension_numbers<[1], [0], [0], [1], [0, 0, 1, 1], [], []>} : vector<8x512xbf16>, vector<512x1024xbf16>, vector<8x1024xf32> -> vector<8x1024xf32>
    %c0_17 = arith.constant 0 : index
    %c0_18 = arith.constant 0 : index
    %26 = vector.load %arg7[%c0_17, %c0_18] : memref<1x1024xf32, #tpu.memory_space<vmem>>, vector<1x1024xf32>
    %27 = vector.broadcast %26 : vector<1x1024xf32> to vector<8x1024xf32>
    %28 = arith.addf %25, %27 : vector<8x1024xf32>
    %cst_19 = arith.constant 0.000000e+00 : f32
    %29 = vector.broadcast %cst_19 : f32 to vector<8x1024xf32>
    %30 = arith.cmpf ogt, %28, %29 : vector<8x1024xf32>
    %cst_20 = arith.constant 2.000000e-01 : f32
    %31 = vector.broadcast %cst_20 : f32 to vector<8x1024xf32>
    %32 = arith.mulf %31, %28 : vector<8x1024xf32>
    %33 = arith.select %30, %28, %32 : vector<8x1024xi1>, vector<8x1024xf32>
    %34 = arith.truncf %33 : vector<8x1024xf32> to vector<8x1024xbf16>
    %c0_21 = arith.constant 0 : index
    %c0_22 = arith.constant 0 : index
    %35 = vector.load %arg8[%c0_21, %c0_22] : memref<1024x784xbf16, #tpu.memory_space<vmem>>, vector<1024x784xbf16>
    %cst_23 = arith.constant dense<0.000000e+00> : vector<8x784xf32>
    %36 = tpu.matmul %34, %35, %cst_23 {dimension_numbers = #tpu.dot_dimension_numbers<[1], [0], [0], [1], [0, 0, 1, 1], [], []>} : vector<8x1024xbf16>, vector<1024x784xbf16>, vector<8x784xf32> -> vector<8x784xf32>
    %c0_24 = arith.constant 0 : index
    %c0_25 = arith.constant 0 : index
    %37 = vector.load %arg9[%c0_24, %c0_25] : memref<1x784xf32, #tpu.memory_space<vmem>>, vector<1x784xf32>
    %38 = vector.broadcast %37 : vector<1x784xf32> to vector<8x784xf32>
    %39 = arith.addf %36, %38 : vector<8x784xf32>
    %40 = math.tanh %39 : vector<8x784xf32>
    %c0_26 = arith.constant 0 : index
    %c0_27 = arith.constant 0 : index
    %41 = vector.load %arg10[%c0_26, %c0_27] : memref<8x784xf32, #tpu.memory_space<vmem>>, vector<8x784xf32>
    tpu.vector_store %arg10[%c0_26, %c0_27], %40 {strides = array<i32>} : memref<8x784xf32, #tpu.memory_space<vmem>>, vector<8x784xf32>,
    return
  }
  func.func @transform_0(%arg0: i32) -> (i32, i32) {
    %c0_i32 = arith.constant 0 : i32
    %c0_i32_0 = arith.constant 0 : i32
    return %arg0, %c0_i32 : i32, i32
  }
  func.func @transform_1(%arg0: i32) -> (i32, i32) {
    %c0_i32 = arith.constant 0 : i32
    %c0_i32_0 = arith.constant 0 : i32
    %c0_i32_1 = arith.constant 0 : i32
    return %c0_i32, %c0_i32_0 : i32, i32
  }
  func.func @transform_2(%arg0: i32) -> (i32, i32) {
    %c0_i32 = arith.constant 0 : i32
    %c0_i32_0 = arith.constant 0 : i32
    %c0_i32_1 = arith.constant 0 : i32
    return %c0_i32, %c0_i32_0 : i32, i32
  }
  func.func @transform_3(%arg0: i32) -> (i32, i32) {
    %c0_i32 = arith.constant 0 : i32
    %c0_i32_0 = arith.constant 0 : i32
    %c0_i32_1 = arith.constant 0 : i32
    return %c0_i32, %c0_i32_0 : i32, i32
  }
  func.func @transform_4(%arg0: i32) -> (i32, i32) {
    %c0_i32 = arith.constant 0 : i32
    %c0_i32_0 = arith.constant 0 : i32
    %c0_i32_1 = arith.constant 0 : i32
    return %c0_i32, %c0_i32_0 : i32, i32
  }
  func.func @transform_5(%arg0: i32) -> (i32, i32) {
    %c0_i32 = arith.constant 0 : i32
    %c0_i32_0 = arith.constant 0 : i32
    %c0_i32_1 = arith.constant 0 : i32
    return %c0_i32, %c0_i32_0 : i32, i32
  }
  func.func @transform_6(%arg0: i32) -> (i32, i32) {
    %c0_i32 = arith.constant 0 : i32
    %c0_i32_0 = arith.constant 0 : i32
    %c0_i32_1 = arith.constant 0 : i32
    return %c0_i32, %c0_i32_0 : i32, i32
  }
  func.func @transform_7(%arg0: i32) -> (i32, i32) {
    %c0_i32 = arith.constant 0 : i32
    %c0_i32_0 = arith.constant 0 : i32
    %c0_i32_1 = arith.constant 0 : i32
    return %c0_i32, %c0_i32_0 : i32, i32
  }
  func.func @transform_8(%arg0: i32) -> (i32, i32) {
    %c0_i32 = arith.constant 0 : i32
    %c0_i32_0 = arith.constant 0 : i32
    %c0_i32_1 = arith.constant 0 : i32
    return %c0_i32, %c0_i32_0 : i32, i32
  }
  func.func @transform_9(%arg0: i32) -> (i32, i32) {
    %c0_i32 = arith.constant 0 : i32
    %c0_i32_0 = arith.constant 0 : i32
    return %arg0, %c0_i32 : i32, i32
  }
}

</mosaic_0001>

<llo_original>
// kernel: tpu_custom_call.1
$region0: #{tpu_custom_call.1}
  #allocation0 [shape = 'u32[]', space=smem, size = 0x4, offset = 0x4, fixed_abs, tag = 'smem constant byte address 0x4 - core index']
  #allocation1 [shape = 'u32[144,128]{1,0:T(1,128)}', space=vmem, size = 0x12000, scoped, tag = 'internal scratch']
  %s0 = inlined_call_operand.vmem [shape: f32[8,64], index: 0, kind: input, shape index: {}]
  %s1 = inlined_call_operand.vmem [shape: bf16[64,256], index: 1, kind: input, shape index: {}]
  %s2 = inlined_call_operand.vmem [shape: f32[1,256], index: 2, kind: input, shape index: {}]
  %s3 = inlined_call_operand.vmem [shape: bf16[256,512], index: 3, kind: input, shape index: {}]
  %s4 = inlined_call_operand.vmem [shape: f32[1,512], index: 4, kind: input, shape index: {}]
  %s5 = inlined_call_operand.vmem [shape: bf16[512,1024], index: 5, kind: input, shape index: {}]
  %s6 = inlined_call_operand.vmem [shape: f32[1,1024], index: 6, kind: input, shape index: {}]
  %s7 = inlined_call_operand.vmem [shape: bf16[1024,784], index: 7, kind: input, shape index: {}]
  %s8 = inlined_call_operand.vmem [shape: f32[1,784], index: 8, kind: input, shape index: {}]
  %s9 = inlined_call_operand.hbm [shape: f32[8,784], index: 9, kind: output, shape index: {}]
  %s10 = sld [smem:[#allocation0]]
  $region46: #{tpu_custom_call.1} parent=0
    _
  %s12 = ssub.s32 1, %s10
  %s13 = scalar_select 0, %s12, %s10
  $region1: #{tpu_custom_call.1} parent=0
    #allocation2 [shape = 'u8[28672]{0}', space=vmem, size = 0x7000, scoped, tag = 'output window, operand 0, single buffered']
    #allocation3 [shape = 's32[1]{0}', space=sflag, size = 0x4, scoped, tag = 'scoped memory for tpu_custom_call.1']
    %14 = vsyncpa [#allocation3], 0
    // Predicated region
    $region2: #{tpu_custom_call.1} parent=1 // pred_check
      _
    $region3: #{tpu_custom_call.1} parent=1 // pred_check_branch
      %16 = sbr.rel (0) target = $region5
    $region4: #{tpu_custom_call.1} parent=1 // pred_region
      _
    $region5: #{tpu_custom_call.1} parent=1 // pred_fallthru
      _
    // Predicated region
    $region6: #{tpu_custom_call.1} parent=1 // pred_check
      _
    $region7: #{tpu_custom_call.1} parent=1 // pred_check_branch
      %18 = sbr.rel (0) target = $region9
    $region8: #{tpu_custom_call.1} parent=1 // pred_region
      _
    $region9: #{tpu_custom_call.1} parent=1 // pred_fallthru
      _
    // Predicated region
    $region10: #{tpu_custom_call.1} parent=1 // pred_check
      _
    $region11: #{tpu_custom_call.1} parent=1 // pred_check_branch
      %20 = sbr.rel (0) target = $region13
    $region12: #{tpu_custom_call.1} parent=1 // pred_region
      _
    $region13: #{tpu_custom_call.1} parent=1 // pred_fallthru
      _
    // Predicated region
    $region14: #{tpu_custom_call.1} parent=1 // pred_check
      _
    $region15: #{tpu_custom_call.1} parent=1 // pred_check_branch
      %22 = sbr.rel (0) target = $region17
    $region16: #{tpu_custom_call.1} parent=1 // pred_region
      _
    $region17: #{tpu_custom_call.1} parent=1 // pred_fallthru
      _
    // Predicated region
    $region18: #{tpu_custom_call.1} parent=1 // pred_check
      _
    $region19: #{tpu_custom_call.1} parent=1 // pred_check_branch
      %24 = sbr.rel (0) target = $region21
    $region20: #{tpu_custom_call.1} parent=1 // pred_region
      _
    $region21: #{tpu_custom_call.1} parent=1 // pred_fallthru
      _
    // Predicated region
    $region22: #{tpu_custom_call.1} parent=1 // pred_check
      _
    $region23: #{tpu_custom_call.1} parent=1 // pred_check_branch
      %26 = sbr.rel (0) target = $region25
    $region24: #{tpu_custom_call.1} parent=1 // pred_region
      _
    $region25: #{tpu_custom_call.1} parent=1 // pred_fallthru
      _
    // Predicated region
    $region26: #{tpu_custom_call.1} parent=1 // pred_check
      _
    $region27: #{tpu_custom_call.1} parent=1 // pred_check_branch
      %28 = sbr.rel (0) target = $region29
    $region28: #{tpu_custom_call.1} parent=1 // pred_region
      _
    $region29: #{tpu_custom_call.1} parent=1 // pred_fallthru
      _
    // Predicated region
    $region30: #{tpu_custom_call.1} parent=1 // pred_check
      _
    $region31: #{tpu_custom_call.1} parent=1 // pred_check_branch
      %30 = sbr.rel (0) target = $region33
    $region32: #{tpu_custom_call.1} parent=1 // pred_region
      _
    $region33: #{tpu_custom_call.1} parent=1 // pred_fallthru
      _
    // Predicated region
    $region34: #{tpu_custom_call.1} parent=1 // pred_check
      _
    $region35: #{tpu_custom_call.1} parent=1 // pred_check_branch
      %32 = sbr.rel (0) target = $region37
    $region36: #{tpu_custom_call.1} parent=1 // pred_region
      _
    $region37: #{tpu_custom_call.1} parent=1 // pred_fallthru
      _
    %v34 = vld [vmem:[%s0] sm:$0xff]
    %v35 = vpack.c.bf16 %v34, %v34
    %v36 = vld [vmem:[%s1] sm:$0xff]
    %v37 = vld [vmem:[%s1 + $0x8] sm:$0xff]
    %v38 = vld [vmem:[%s1 + $0x10] sm:$0xff]
    %v39 = vld [vmem:[%s1 + $0x18] sm:$0xff]
    %v40 = vld [vmem:[%s1 + $0x20] sm:$0xff]
    %v41 = vld [vmem:[%s1 + $0x28] sm:$0xff]
    %v42 = vld [vmem:[%s1 + $0x30] sm:$0xff]
    %v43 = vld [vmem:[%s1 + $0x38] sm:$0xff]
    %v44 = vld [vmem:[%s2] sm:$0x3]
    %v46 = vlaneseq
    %v47 = vshrl.u32 %v46, 7
    %v48 = vsub.s32 0, %v47
    %v49 = vrot.slane %v44, %v48
    %v50 = vlaneseq
    %v51 = vshrl.u32 %v50, 7
    %v52 = vsub.s32 1, %v51
    %v53 = vrot.slane %v44, %v52
    %v64 = vunpack.c.l.b16 %v36
    %v65 = vunpack.c.h.b16 %v36
    %v66 = vunpack.c.l.b16 %v37
    %v67 = vunpack.c.h.b16 %v37
    %v68 = vunpack.c.l.b16 %v38
    %v69 = vunpack.c.h.b16 %v38
    %v70 = vunpack.c.l.b16 %v39
    %v71 = vunpack.c.h.b16 %v39
    %v72 = vunpack.c.l.b16 %v40
    %v73 = vunpack.c.h.b16 %v40
    %v74 = vunpack.c.l.b16 %v41
    %v75 = vunpack.c.h.b16 %v41
    %v76 = vunpack.c.l.b16 %v42
    %v77 = vunpack.c.h.b16 %v42
    %v78 = vunpack.c.l.b16 %v43
    %v79 = vunpack.c.h.b16 %v43
    %v80 = vpack.c.b16 %v66, %v64
    %v81 = vpack.c.b16 %v67, %v65
    %v82 = vpack.c.b16 %v70, %v68
    %v83 = vpack.c.b16 %v71, %v69
    %v84 = vpack.c.b16 %v74, %v72
    %v85 = vpack.c.b16 %v75, %v73
    %v86 = vpack.c.b16 %v78, %v76
    %v87 = vpack.c.b16 %v79, %v77
    %vm96 = vcmask 523264
    %v98 = vsel %vm96, %v35, 0
    %100 = vmatprep.subr.bf16.mxu0 %v81
    %101 = vmatpush1.bf16.msra.mxu0 %v80
    %102 = vmatprep.subr.bf16.mxu0 %v83
    %103 = vmatpush1.bf16.msra.mxu0 %v82
    %104 = vmatprep.subr.bf16.mxu0 %v85
    %105 = vmatpush1.bf16.msra.mxu0 %v84
    %106 = vmatprep.subr.bf16.mxu0 %v87
    %107 = vmatpush1.bf16.msra.mxu0 %v86
    %108 = vmatprep.subr.bf16.mxu0 0
    %109 = vmatpush1.bf16.msra.mxu0 0
    %110 = vmatprep.subr.bf16.mxu0 0
    %111 = vmatpush1.bf16.msra.mxu0 0
    %112 = vmatprep.subr.bf16.mxu0 0
    %113 = vmatpush1.bf16.msra.mxu0 0
    %114 = vmatprep.subr.bf16.mxu0 0
    %115 = vmatpush1.bf16.msra.mxu0 0
    %116 = vmatprep.subr.bf16.mxu0 0
    %117 = vmatpush1.bf16.msra.mxu0 0
    %118 = vmatprep.subr.bf16.mxu0 0
    %119 = vmatpush1.bf16.msra.mxu0 0
    %120 = vmatprep.subr.bf16.mxu0 0
    %121 = vmatpush1.bf16.msra.mxu0 0
    %122 = vmatprep.subr.bf16.mxu0 0
    %123 = vmatpush1.bf16.msra.mxu0 0
    %124 = vmatprep.subr.bf16.mxu0 0
    %125 = vmatpush1.bf16.msra.mxu0 0
    %126 = vmatprep.subr.bf16.mxu0 0
    %127 = vmatpush1.bf16.msra.mxu0 0
    %128 = vmatprep.subr.bf16.mxu0 0
    %129 = vmatpush1.bf16.msra.mxu0 0
    %130 = vmatprep.subr.bf16.mxu0 0
    %131 = vmatpush1.bf16.msra.mxu0 0
    %132 = vmatprep.mubr.bf16.mxu0 0
    %133 = vmatmul.mubr.bf16.gmra.mrb[0].mxu0 %v98
    %v134 = vpop.f32.mrb[0].mxu0
    %v135 = vadd.f32 %v49, %v134
    %v136 = vpop.f32.mrb[0].mxu0
    %v137 = vadd.f32 %v53, %v136
    %v138 = vpop.f32.mrb[0].mxu0
    %v139 = vpop.f32.mrb[0].mxu0
    %140 = vdwg.mxu0
    %vm141 = vcmp.gt.f32.partialorder %v135, 0.0
    %vm142 = vcmp.gt.f32.partialorder %v137, 0.0
    %v143 = vmul.f32 %v135, 0.2
    %v144 = vmul.f32 %v137, 0.2
    %v145 = vsel %vm141, %v135, %v143
    %v146 = vsel %vm142, %v137, %v144
    %v147 = vpack.c.bf16 %v145, %v145
    %v148 = vpack.c.bf16 %v146, %v146
    %v149 = vld [vmem:[%s3] sm:$0xff]
    %v150 = vld [vmem:[%s3 + $0x8] sm:$0xff]
    %v151 = vld [vmem:[%s3 + $0x10] sm:$0xff]
    %v152 = vld [vmem:[%s3 + $0x18] sm:$0xff]
    %v153 = vld [vmem:[%s3 + $0x20] sm:$0xff]
    %v154 = vld [vmem:[%s3 + $0x28] sm:$0xff]
    %v155 = vld [vmem:[%s3 + $0x30] sm:$0xff]
    %v156 = vld [vmem:[%s3 + $0x38] sm:$0xff]
    %v157 = vld [vmem:[%s3 + $0x40] sm:$0xff]
    %v158 = vld [vmem:[%s3 + $0x48] sm:$0xff]
    %v159 = vld [vmem:[%s3 + $0x50] sm:$0xff]
    %v160 = vld [vmem:[%s3 + $0x58] sm:$0xff]
    %v161 = vld [vmem:[%s3 + $0x60] sm:$0xff]
    %v162 = vld [vmem:[%s3 + $0x68] sm:$0xff]
    %v163 = vld [vmem:[%s3 + $0x70] sm:$0xff]
    %v164 = vld [vmem:[%s3 + $0x78] sm:$0xff]
    %v165 = vld [vmem:[%s3 + $0x80] sm:$0xff]
    %v166 = vld [vmem:[%s3 + $0x88] sm:$0xff]
    %v167 = vld [vmem:[%s3 + $0x90] sm:$0xff]
    %v168 = vld [vmem:[%s3 + $0x98] sm:$0xff]
    %v169 = vld [vmem:[%s3 + $0xa0] sm:$0xff]
    %v170 = vld [vmem:[%s3 + $0xa8] sm:$0xff]
    %v171 = vld [vmem:[%s3 + $0xb0] sm:$0xff]
    %v172 = vld [vmem:[%s3 + $0xb8] sm:$0xff]
    %v173 = vld [vmem:[%s3 + $0xc0] sm:$0xff]
    %v174 = vld [vmem:[%s3 + $0xc8] sm:$0xff]
    %v175 = vld [vmem:[%s3 + $0xd0] sm:$0xff]
    %v176 = vld [vmem:[%s3 + $0xd8] sm:$0xff]
    %v177 = vld [vmem:[%s3 + $0xe0] sm:$0xff]
    %v178 = vld [vmem:[%s3 + $0xe8] sm:$0xff]
    %v179 = vld [vmem:[%s3 + $0xf0] sm:$0xff]
    %v180 = vld [vmem:[%s3 + $0xf8] sm:$0xff]
    %v181 = vld [vmem:[%s3 + $0x100] sm:$0xff]
    %v182 = vld [vmem:[%s3 + $0x108] sm:$0xff]
    %v183 = vld [vmem:[%s3 + $0x110] sm:$0xff]
    %v184 = vld [vmem:[%s3 + $0x118] sm:$0xff]
    %v185 = vld [vmem:[%s3 + $0x120] sm:$0xff]
    %v186 = vld [vmem:[%s3 + $0x128] sm:$0xff]
    %v187 = vld [vmem:[%s3 + $0x130] sm:$0xff]
    %v188 = vld [vmem:[%s3 + $0x138] sm:$0xff]
    %v189 = vld [vmem:[%s3 + $0x140] sm:$0xff]
    %v190 = vld [vmem:[%s3 + $0x148] sm:$0xff]
    %v191 = vld [vmem:[%s3 + $0x150] sm:$0xff]
    %v192 = vld [vmem:[%s3 + $0x158] sm:$0xff]
    %v193 = vld [vmem:[%s3 + $0x160] sm:$0xff]
    %v194 = vld [vmem:[%s3 + $0x168] sm:$0xff]
    %v195 = vld [vmem:[%s3 + $0x170] sm:$0xff]
    %v196 = vld [vmem:[%s3 + $0x178] sm:$0xff]
    %v197 = vld [vmem:[%s3 + $0x180] sm:$0xff]
    %v198 = vld [vmem:[%s3 + $0x188] sm:$0xff]
    %v199 = vld [vmem:[%s3 + $0x190] sm:$0xff]
    %v200 = vld [vmem:[%s3 + $0x198] sm:$0xff]
    %v201 = vld [vmem:[%s3 + $0x1a0] sm:$0xff]
    %v202 = vld [vmem:[%s3 + $0x1a8] sm:$0xff]
    %v203 = vld [vmem:[%s3 + $0x1b0] sm:$0xff]
    %v204 = vld [vmem:[%s3 + $0x1b8] sm:$0xff]
    %v205 = vld [vmem:[%s3 + $0x1c0] sm:$0xff]
    %v206 = vld [vmem:[%s3 + $0x1c8] sm:$0xff]
    %v207 = vld [vmem:[%s3 + $0x1d0] sm:$0xff]
    %v208 = vld [vmem:[%s3 + $0x1d8] sm:$0xff]
    %v209 = vld [vmem:[%s3 + $0x1e0] sm:$0xff]
    %v210 = vld [vmem:[%s3 + $0x1e8] sm:$0xff]
    %v211 = vld [vmem:[%s3 + $0x1f0] sm:$0xff]
    %v212 = vld [vmem:[%s3 + $0x1f8] sm:$0xff]
    %v213 = vld [vmem:[%s4] sm:$0xf]
    %v215 = vlaneseq
    %v216 = vshrl.u32 %v215, 7
    %v217 = vsub.s32 0, %v216
    %v218 = vrot.slane %v213, %v217
    %v219 = vlaneseq
    %v220 = vshrl.u32 %v219, 7
    %v221 = vsub.s32 1, %v220
    %v222 = vrot.slane %v213, %v221
    %v223 = vlaneseq
    %v224 = vshrl.u32 %v223, 7
    %v225 = vsub.s32 2, %v224
    %v226 = vrot.slane %v213, %v225
    %v227 = vlaneseq
    %v228 = vshrl.u32 %v227, 7
    %v229 = vsub.s32 3, %v228
    %v230 = vrot.slane %v213, %v229
    %v299 = vunpack.c.l.b16 %v149
    %v300 = vunpack.c.h.b16 %v149
    %v301 = vunpack.c.l.b16 %v150
    %v302 = vunpack.c.h.b16 %v150
    %v303 = vunpack.c.l.b16 %v151
    %v304 = vunpack.c.h.b16 %v151
    %v305 = vunpack.c.l.b16 %v152
    %v306 = vunpack.c.h.b16 %v152
    %v307 = vunpack.c.l.b16 %v153
    %v308 = vunpack.c.h.b16 %v153
    %v309 = vunpack.c.l.b16 %v154
    %v310 = vunpack.c.h.b16 %v154
    %v311 = vunpack.c.l.b16 %v155
    %v312 = vunpack.c.h.b16 %v155
    %v313 = vunpack.c.l.b16 %v156
    %v314 = vunpack.c.h.b16 %v156
    %v315 = vunpack.c.l.b16 %v157
    %v316 = vunpack.c.h.b16 %v157
    %v317 = vunpack.c.l.b16 %v158
    %v318 = vunpack.c.h.b16 %v158
    %v319 = vunpack.c.l.b16 %v159
    %v320 = vunpack.c.h.b16 %v159
    %v321 = vunpack.c.l.b16 %v160
    %v322 = vunpack.c.h.b16 %v160
    %v323 = vunpack.c.l.b16 %v161
    %v324 = vunpack.c.h.b16 %v161
    %v325 = vunpack.c.l.b16 %v162
    %v326 = vunpack.c.h.b16 %v162
    %v327 = vunpack.c.l.b16 %v163
    %v328 = vunpack.c.h.b16 %v163
    %v329 = vunpack.c.l.b16 %v164
    %v330 = vunpack.c.h.b16 %v164
    %v331 = vunpack.c.l.b16 %v165
    %v332 = vunpack.c.h.b16 %v165
    %v333 = vunpack.c.l.b16 %v166
    %v334 = vunpack.c.h.b16 %v166
    %v335 = vunpack.c.l.b16 %v167
    %v336 = vunpack.c.h.b16 %v167
    %v337 = vunpack.c.l.b16 %v168
    %v338 = vunpack.c.h.b16 %v168
    %v339 = vunpack.c.l.b16 %v169
    %v340 = vunpack.c.h.b16 %v169
    %v341 = vunpack.c.l.b16 %v170
    %v342 = vunpack.c.h.b16 %v170
    %v343 = vunpack.c.l.b16 %v171
    %v344 = vunpack.c.h.b16 %v171
    %v345 = vunpack.c.l.b16 %v172
    %v346 = vunpack.c.h.b16 %v172
    %v347 = vunpack.c.l.b16 %v173
    %v348 = vunpack.c.h.b16 %v173
    %v349 = vunpack.c.l.b16 %v174
    %v350 = vunpack.c.h.b16 %v174
    %v351 = vunpack.c.l.b16 %v175
    %v352 = vunpack.c.h.b16 %v175
    %v353 = vunpack.c.l.b16 %v176
    %v354 = vunpack.c.h.b16 %v176
    %v355 = vunpack.c.l.b16 %v177
    %v356 = vunpack.c.h.b16 %v177
    %v357 = vunpack.c.l.b16 %v178
    %v358 = vunpack.c.h.b16 %v178
    %v359 = vunpack.c.l.b16 %v179
    %v360 = vunpack.c.h.b16 %v179
    %v361 = vunpack.c.l.b16 %v180
    %v362 = vunpack.c.h.b16 %v180
    %v363 = vunpack.c.l.b16 %v181
    %v364 = vunpack.c.h.b16 %v181
    %v365 = vunpack.c.l.b16 %v182
    %v366 = vunpack.c.h.b16 %v182
    %v367 = vunpack.c.l.b16 %v183
    %v368 = vunpack.c.h.b16 %v183
    %v369 = vunpack.c.l.b16 %v184
    %v370 = vunpack.c.h.b16 %v184
    %v371 = vunpack.c.l.b16 %v185
    %v372 = vunpack.c.h.b16 %v185
    %v373 = vunpack.c.l.b16 %v186
    %v374 = vunpack.c.h.b16 %v186
    %v375 = vunpack.c.l.b16 %v187
    %v376 = vunpack.c.h.b16 %v187
    %v377 = vunpack.c.l.b16 %v188
    %v378 = vunpack.c.h.b16 %v188
    %v379 = vunpack.c.l.b16 %v189
    %v380 = vunpack.c.h.b16 %v189
    %v381 = vunpack.c.l.b16 %v190
    %v382 = vunpack.c.h.b16 %v190
    %v383 = vunpack.c.l.b16 %v191
    %v384 = vunpack.c.h.b16 %v191
    %v385 = vunpack.c.l.b16 %v192
    %v386 = vunpack.c.h.b16 %v192
    %v387 = vunpack.c.l.b16 %v193
    %v388 = vunpack.c.h.b16 %v193
    %v389 = vunpack.c.l.b16 %v194
    %v390 = vunpack.c.h.b16 %v194
    %v391 = vunpack.c.l.b16 %v195
    %v392 = vunpack.c.h.b16 %v195
    %v393 = vunpack.c.l.b16 %v196
    %v394 = vunpack.c.h.b16 %v196
    %v395 = vunpack.c.l.b16 %v197
    %v396 = vunpack.c.h.b16 %v197
    %v397 = vunpack.c.l.b16 %v198
    %v398 = vunpack.c.h.b16 %v198
    %v399 = vunpack.c.l.b16 %v199
    %v400 = vunpack.c.h.b16 %v199
    %v401 = vunpack.c.l.b16 %v200
    %v402 = vunpack.c.h.b16 %v200
    %v403 = vunpack.c.l.b16 %v201
    %v404 = vunpack.c.h.b16 %v201
    %v405 = vunpack.c.l.b16 %v202
    %v406 = vunpack.c.h.b16 %v202
    %v407 = vunpack.c.l.b16 %v203
    %v408 = vunpack.c.h.b16 %v203
    %v409 = vunpack.c.l.b16 %v204
    %v410 = vunpack.c.h.b16 %v204
    %v411 = vunpack.c.l.b16 %v205
    %v412 = vunpack.c.h.b16 %v205
    %v413 = vunpack.c.l.b16 %v206
    %v414 = vunpack.c.h.b16 %v206
    %v415 = vunpack.c.l.b16 %v207
    %v416 = vunpack.c.h.b16 %v207
    %v417 = vunpack.c.l.b16 %v208
    %v418 = vunpack.c.h.b16 %v208
    %v419 = vunpack.c.l.b16 %v209
    %v420 = vunpack.c.h.b16 %v209
    %v421 = vunpack.c.l.b16 %v210
    %v422 = vunpack.c.h.b16 %v210
    %v423 = vunpack.c.l.b16 %v211
    %v424 = vunpack.c.h.b16 %v211
    %v425 = vunpack.c.l.b16 %v212
    %v426 = vunpack.c.h.b16 %v212
    %v427 = vpack.c.b16 %v303, %v299
    %v428 = vpack.c.b16 %v304, %v300
    %v429 = vpack.c.b16 %v305, %v301
    %v430 = vpack.c.b16 %v306, %v302
    %v431 = vpack.c.b16 %v311, %v307
    %v432 = vpack.c.b16 %v312, %v308
    %v433 = vpack.c.b16 %v313, %v309
    %v434 = vpack.c.b16 %v314, %v310
    %v435 = vpack.c.b16 %v319, %v315
    %v436 = vpack.c.b16 %v320, %v316
    %v437 = vpack.c.b16 %v321, %v317
    %v438 = vpack.c.b16 %v322, %v318
    %v439 = vpack.c.b16 %v327, %v323
    %v440 = vpack.c.b16 %v328, %v324
    %v441 = vpack.c.b16 %v329, %v325
    %v442 = vpack.c.b16 %v330, %v326
    %v443 = vpack.c.b16 %v335, %v331
    %v444 = vpack.c.b16 %v336, %v332
    %v445 = vpack.c.b16 %v337, %v333
    %v446 = vpack.c.b16 %v338, %v334
    %v447 = vpack.c.b16 %v343, %v339
    %v448 = vpack.c.b16 %v344, %v340
    %v449 = vpack.c.b16 %v345, %v341
    %v450 = vpack.c.b16 %v346, %v342
    %v451 = vpack.c.b16 %v351, %v347
    %v452 = vpack.c.b16 %v352, %v348
    %v453 = vpack.c.b16 %v353, %v349
    %v454 = vpack.c.b16 %v354, %v350
    %v455 = vpack.c.b16 %v359, %v355
    %v456 = vpack.c.b16 %v360, %v356
    %v457 = vpack.c.b16 %v361, %v357
    %v458 = vpack.c.b16 %v362, %v358
    %v459 = vpack.c.b16 %v367, %v363
    %v460 = vpack.c.b16 %v368, %v364
    %v461 = vpack.c.b16 %v369, %v365
    %v462 = vpack.c.b16 %v370, %v366
    %v463 = vpack.c.b16 %v375, %v371
    %v464 = vpack.c.b16 %v376, %v372
    %v465 = vpack.c.b16 %v377, %v373
    %v466 = vpack.c.b16 %v378, %v374
    %v467 = vpack.c.b16 %v383, %v379
    %v468 = vpack.c.b16 %v384, %v380
    %v469 = vpack.c.b16 %v385, %v381
    %v470 = vpack.c.b16 %v386, %v382
    %v471 = vpack.c.b16 %v391, %v387
    %v472 = vpack.c.b16 %v392, %v388
    %v473 = vpack.c.b16 %v393, %v389
    %v474 = vpack.c.b16 %v394, %v390
    %v475 = vpack.c.b16 %v399, %v395
    %v476 = vpack.c.b16 %v400, %v396
    %v477 = vpack.c.b16 %v401, %v397
    %v478 = vpack.c.b16 %v402, %v398
    %v479 = vpack.c.b16 %v407, %v403
    %v480 = vpack.c.b16 %v408, %v404
    %v481 = vpack.c.b16 %v409, %v405
    %v482 = vpack.c.b16 %v410, %v406
    %v483 = vpack.c.b16 %v415, %v411
    %v484 = vpack.c.b16 %v416, %v412
    %v485 = vpack.c.b16 %v417, %v413
    %v486 = vpack.c.b16 %v418, %v414
    %v487 = vpack.c.b16 %v423, %v419
    %v488 = vpack.c.b16 %v424, %v420
    %v489 = vpack.c.b16 %v425, %v421
    %v490 = vpack.c.b16 %v426, %v422
    %555 = vmatprep.subr.bf16.mxu0 %v428
    %556 = vmatpush1.bf16.msra.mxu0 %v427
    %557 = vmatprep.subr.bf16.mxu0 %v432
    %558 = vmatpush1.bf16.msra.mxu0 %v431
    %559 = vmatprep.subr.bf16.mxu0 %v436
    %560 = vmatpush1.bf16.msra.mxu0 %v435
    %561 = vmatprep.subr.bf16.mxu0 %v440
    %562 = vmatpush1.bf16.msra.mxu0 %v439
    %563 = vmatprep.subr.bf16.mxu0 %v444
    %564 = vmatpush1.bf16.msra.mxu0 %v443
    %565 = vmatprep.subr.bf16.mxu0 %v448
    %566 = vmatpush1.bf16.msra.mxu0 %v447
    %567 = vmatprep.subr.bf16.mxu0 %v452
    %568 = vmatpush1.bf16.msra.mxu0 %v451
    %569 = vmatprep.subr.bf16.mxu0 %v456
    %570 = vmatpush1.bf16.msra.mxu0 %v455
    %571 = vmatprep.subr.bf16.mxu0 %v460
    %572 = vmatpush1.bf16.msra.mxu0 %v459
    %573 = vmatprep.subr.bf16.mxu0 %v464
    %574 = vmatpush1.bf16.msra.mxu0 %v463
    %575 = vmatprep.subr.bf16.mxu0 %v468
    %576 = vmatpush1.bf16.msra.mxu0 %v467
    %577 = vmatprep.subr.bf16.mxu0 %v472
    %578 = vmatpush1.bf16.msra.mxu0 %v471
    %579 = vmatprep.subr.bf16.mxu0 %v476
    %580 = vmatpush1.bf16.msra.mxu0 %v475
    %581 = vmatprep.subr.bf16.mxu0 %v480
    %582 = vmatpush1.bf16.msra.mxu0 %v479
    %583 = vmatprep.subr.bf16.mxu0 %v484
    %584 = vmatpush1.bf16.msra.mxu0 %v483
    %585 = vmatprep.subr.bf16.mxu0 %v488
    %586 = vmatpush1.bf16.msra.mxu0 %v487
    %587 = vmatprep.mubr.bf16.mxu0 %v148
    %588 = vmatmul.mubr.bf16.gmra.mrb[0].mxu0 %v147
    %v589 = vpop.f32.mrb[0].mxu0
    %v590 = vadd.f32 %v218, %v589
    %v591 = vpop.f32.mrb[0].mxu0
    %v592 = vadd.f32 %v222, %v591
    %v593 = vpop.f32.mrb[0].mxu0
    %v594 = vpop.f32.mrb[0].mxu0
    %595 = vdwg.mxu0
    %596 = vmatprep.subr.bf16.mxu0 %v430
    %597 = vmatpush1.bf16.msra.mxu0 %v429
    %598 = vmatprep.subr.bf16.mxu0 %v434
    %599 = vmatpush1.bf16.msra.mxu0 %v433
    %600 = vmatprep.subr.bf16.mxu0 %v438
    %601 = vmatpush1.bf16.msra.mxu0 %v437
    %602 = vmatprep.subr.bf16.mxu0 %v442
    %603 = vmatpush1.bf16.msra.mxu0 %v441
    %604 = vmatprep.subr.bf16.mxu0 %v446
    %605 = vmatpush1.bf16.msra.mxu0 %v445
    %606 = vmatprep.subr.bf16.mxu0 %v450
    %607 = vmatpush1.bf16.msra.mxu0 %v449
    %608 = vmatprep.subr.bf16.mxu0 %v454
    %609 = vmatpush1.bf16.msra.mxu0 %v453
    %610 = vmatprep.subr.bf16.mxu0 %v458
    %611 = vmatpush1.bf16.msra.mxu0 %v457
    %612 = vmatprep.subr.bf16.mxu0 %v462
    %613 = vmatpush1.bf16.msra.mxu0 %v461
    %614 = vmatprep.subr.bf16.mxu0 %v466
    %615 = vmatpush1.bf16.msra.mxu0 %v465
    %616 = vmatprep.subr.bf16.mxu0 %v470
    %617 = vmatpush1.bf16.msra.mxu0 %v469
    %618 = vmatprep.subr.bf16.mxu0 %v474
    %619 = vmatpush1.bf16.msra.mxu0 %v473
    %620 = vmatprep.subr.bf16.mxu0 %v478
    %621 = vmatpush1.bf16.msra.mxu0 %v477
    %622 = vmatprep.subr.bf16.mxu0 %v482
    %623 = vmatpush1.bf16.msra.mxu0 %v481
    %624 = vmatprep.subr.bf16.mxu0 %v486
    %625 = vmatpush1.bf16.msra.mxu0 %v485
    %626 = vmatprep.subr.bf16.mxu0 %v490
    %627 = vmatpush1.bf16.msra.mxu0 %v489
    %628 = vmatprep.mubr.bf16.mxu0 %v148
    %629 = vmatmul.mubr.bf16.gmra.mrb[0].mxu0 %v147
    %v630 = vpop.f32.mrb[0].mxu0
    %v631 = vadd.f32 %v226, %v630
    %v632 = vpop.f32.mrb[0].mxu0
    %v633 = vadd.f32 %v230, %v632
    %v634 = vpop.f32.mrb[0].mxu0
    %v635 = vpop.f32.mrb[0].mxu0
    %636 = vdwg.mxu0
    %vm637 = vcmp.gt.f32.partialorder %v590, 0.0
    %vm638 = vcmp.gt.f32.partialorder %v592, 0.0
    %vm639 = vcmp.gt.f32.partialorder %v631, 0.0
    %vm640 = vcmp.gt.f32.partialorder %v633, 0.0
    %v641 = vmul.f32 %v590, 0.2
    %v642 = vmul.f32 %v592, 0.2
    %v643 = vmul.f32 %v631, 0.2
    %v644 = vmul.f32 %v633, 0.2
    %v645 = vsel %vm637, %v590, %v641
    %v646 = vsel %vm638, %v592, %v642
    %v647 = vsel %vm639, %v631, %v643
    %v648 = vsel %vm640, %v633, %v644
    %v649 = vpack.c.bf16 %v645, %v645
    %v650 = vpack.c.bf16 %v646, %v646
    %v651 = vpack.c.bf16 %v647, %v647
    %v652 = vpack.c.bf16 %v648, %v648
    %v653 = vld [vmem:[%s5] sm:$0xff]
    %v654 = vld [vmem:[%s5 + $0x8] sm:$0xff]
    %v655 = vld [vmem:[%s5 + $0x10] sm:$0xff]
    %v656 = vld [vmem:[%s5 + $0x18] sm:$0xff]
    %v657 = vld [vmem:[%s5 + $0x20] sm:$0xff]
    %v658 = vld [vmem:[%s5 + $0x28] sm:$0xff]
    %v659 = vld [vmem:[%s5 + $0x30] sm:$0xff]
    %v660 = vld [vmem:[%s5 + $0x38] sm:$0xff]
    %v661 = vld [vmem:[%s5 + $0x40] sm:$0xff]
    %v662 = vld [vmem:[%s5 + $0x48] sm:$0xff]
    %v663 = vld [vmem:[%s5 + $0x50] sm:$0xff]
    %v664 = vld [vmem:[%s5 + $0x58] sm:$0xff]
    %v665 = vld [vmem:[%s5 + $0x60] sm:$0xff]
    %v666 = vld [vmem:[%s5 + $0x68] sm:$0xff]
    %v667 = vld [vmem:[%s5 + $0x70] sm:$0xff]
    %v668 = vld [vmem:[%s5 + $0x78] sm:$0xff]
    %v669 = vld [vmem:[%s5 + $0x80] sm:$0xff]
    %v670 = vld [vmem:[%s5 + $0x88] sm:$0xff]
    %v671 = vld [vmem:[%s5 + $0x90] sm:$0xff]
    %v672 = vld [vmem:[%s5 + $0x98] sm:$0xff]
    %v673 = vld [vmem:[%s5 + $0xa0] sm:$0xff]
    %v674 = vld [vmem:[%s5 + $0xa8] sm:$0xff]
    %v675 = vld [vmem:[%s5 + $0xb0] sm:$0xff]
    %v676 = vld [vmem:[%s5 + $0xb8] sm:$0xff]
    %v677 = vld [vmem:[%s5 + $0xc0] sm:$0xff]
    %v678 = vld [vmem:[%s5 + $0xc8] sm:$0xff]
    %v679 = vld [vmem:[%s5 + $0xd0] sm:$0xff]
    %v680 = vld [vmem:[%s5 + $0xd8] sm:$0xff]
    %v681 = vld [vmem:[%s5 + $0xe0] sm:$0xff]
    %v682 = vld [vmem:[%s5 + $0xe8] sm:$0xff]
    %v683 = vld [vmem:[%s5 + $0xf0] sm:$0xff]
    %v684 = vld [vmem:[%s5 + $0xf8] sm:$0xff]
    %v685 = vld [vmem:[%s5 + $0x100] sm:$0xff]
    %v686 = vld [vmem:[%s5 + $0x108] sm:$0xff]
    %v687 = vld [vmem:[%s5 + $0x110] sm:$0xff]
    %v688 = vld [vmem:[%s5 + $0x118] sm:$0xff]
    %v689 = vld [vmem:[%s5 + $0x120] sm:$0xff]
    %v690 = vld [vmem:[%s5 + $0x128] sm:$0xff]
    %v691 = vld [vmem:[%s5 + $0x130] sm:$0xff]
    %v692 = vld [vmem:[%s5 + $0x138] sm:$0xff]
    %v693 = vld [vmem:[%s5 + $0x140] sm:$0xff]
    %v694 = vld [vmem:[%s5 + $0x148] sm:$0xff]
    %v695 = vld [vmem:[%s5 + $0x150] sm:$0xff]
    %v696 = vld [vmem:[%s5 + $0x158] sm:$0xff]
    %v697 = vld [vmem:[%s5 + $0x160] sm:$0xff]
    %v698 = vld [vmem:[%s5 + $0x168] sm:$0xff]
    %v699 = vld [vmem:[%s5 + $0x170] sm:$0xff]
    %v700 = vld [vmem:[%s5 + $0x178] sm:$0xff]
    %v701 = vld [vmem:[%s5 + $0x180] sm:$0xff]
    %v702 = vld [vmem:[%s5 + $0x188] sm:$0xff]
    %v703 = vld [vmem:[%s5 + $0x190] sm:$0xff]
    %v704 = vld [vmem:[%s5 + $0x198] sm:$0xff]
    %v705 = vld [vmem:[%s5 + $0x1a0] sm:$0xff]
    %v706 = vld [vmem:[%s5 + $0x1a8] sm:$0xff]
    %v707 = vld [vmem:[%s5 + $0x1b0] sm:$0xff]
    %v708 = vld [vmem:[%s5 + $0x1b8] sm:$0xff]
    %v709 = vld [vmem:[%s5 + $0x1c0] sm:$0xff]
    %v710 = vld [vmem:[%s5 + $0x1c8] sm:$0xff]
    %v711 = vld [vmem:[%s5 + $0x1d0] sm:$0xff]
    %v712 = vld [vmem:[%s5 + $0x1d8] sm:$0xff]
    %v713 = vld [vmem:[%s5 + $0x1e0] sm:$0xff]
    %v714 = vld [vmem:[%s5 + $0x1e8] sm:$0xff]
    %v715 = vld [vmem:[%s5 + $0x1f0] sm:$0xff]
    %v716 = vld [vmem:[%s5 + $0x1f8] sm:$0xff]
    %v717 = vld [vmem:[%s5 + $0x200] sm:$0xff]
    %v718 = vld [vmem:[%s5 + $0x208] sm:$0xff]
    %v719 = vld [vmem:[%s5 + $0x210] sm:$0xff]
    %v720 = vld [vmem:[%s5 + $0x218] sm:$0xff]
    %v721 = vld [vmem:[%s5 + $0x220] sm:$0xff]
    %v722 = vld [vmem:[%s5 + $0x228] sm:$0xff]
    %v723 = vld [vmem:[%s5 + $0x230] sm:$0xff]
    %v724 = vld [vmem:[%s5 + $0x238] sm:$0xff]
    %v725 = vld [vmem:[%s5 + $0x240] sm:$0xff]
    %v726 = vld [vmem:[%s5 + $0x248] sm:$0xff]
    %v727 = vld [vmem:[%s5 + $0x250] sm:$0xff]
    %v728 = vld [vmem:[%s5 + $0x258] sm:$0xff]
    %v729 = vld [vmem:[%s5 + $0x260] sm:$0xff]
    %v730 = vld [vmem:[%s5 + $0x268] sm:$0xff]
    %v731 = vld [vmem:[%s5 + $0x270] sm:$0xff]
    %v732 = vld [vmem:[%s5 + $0x278] sm:$0xff]
    %v733 = vld [vmem:[%s5 + $0x280] sm:$0xff]
    %v734 = vld [vmem:[%s5 + $0x288] sm:$0xff]
    %v735 = vld [vmem:[%s5 + $0x290] sm:$0xff]
    %v736 = vld [vmem:[%s5 + $0x298] sm:$0xff]
    %v737 = vld [vmem:[%s5 + $0x2a0] sm:$0xff]
    %v738 = vld [vmem:[%s5 + $0x2a8] sm:$0xff]
    %v739 = vld [vmem:[%s5 + $0x2b0] sm:$0xff]
    %v740 = vld [vmem:[%s5 + $0x2b8] sm:$0xff]
    %v741 = vld [vmem:[%s5 + $0x2c0] sm:$0xff]
    %v742 = vld [vmem:[%s5 + $0x2c8] sm:$0xff]
    %v743 = vld [vmem:[%s5 + $0x2d0] sm:$0xff]
    %v744 = vld [vmem:[%s5 + $0x2d8] sm:$0xff]
    %v745 = vld [vmem:[%s5 + $0x2e0] sm:$0xff]
    %v746 = vld [vmem:[%s5 + $0x2e8] sm:$0xff]
    %v747 = vld [vmem:[%s5 + $0x2f0] sm:$0xff]
    %v748 = vld [vmem:[%s5 + $0x2f8] sm:$0xff]
    %v749 = vld [vmem:[%s5 + $0x300] sm:$0xff]
    %v750 = vld [vmem:[%s5 + $0x308] sm:$0xff]
    %v751 = vld [vmem:[%s5 + $0x310] sm:$0xff]
    %v752 = vld [vmem:[%s5 + $0x318] sm:$0xff]
    %v753 = vld [vmem:[%s5 + $0x320] sm:$0xff]
    %v754 = vld [vmem:[%s5 + $0x328] sm:$0xff]
    %v755 = vld [vmem:[%s5 + $0x330] sm:$0xff]
    %v756 = vld [vmem:[%s5 + $0x338] sm:$0xff]
    %v757 = vld [vmem:[%s5 + $0x340] sm:$0xff]
    %v758 = vld [vmem:[%s5 + $0x348] sm:$0xff]
    %v759 = vld [vmem:[%s5 + $0x350] sm:$0xff]
    %v760 = vld [vmem:[%s5 + $0x358] sm:$0xff]
    %v761 = vld [vmem:[%s5 + $0x360] sm:$0xff]
    %v762 = vld [vmem:[%s5 + $0x368] sm:$0xff]
    %v763 = vld [vmem:[%s5 + $0x370] sm:$0xff]
    %v764 = vld [vmem:[%s5 + $0x378] sm:$0xff]
    %v765 = vld [vmem:[%s5 + $0x380] sm:$0xff]
    %v766 = vld [vmem:[%s5 + $0x388] sm:$0xff]
    %v767 = vld [vmem:[%s5 + $0x390] sm:$0xff]
    %v768 = vld [vmem:[%s5 + $0x398] sm:$0xff]
    %v769 = vld [vmem:[%s5 + $0x3a0] sm:$0xff]
    %v770 = vld [vmem:[%s5 + $0x3a8] sm:$0xff]
    %v771 = vld [vmem:[%s5 + $0x3b0] sm:$0xff]
    %v772 = vld [vmem:[%s5 + $0x3b8] sm:$0xff]
    %v773 = vld [vmem:[%s5 + $0x3c0] sm:$0xff]
    %v774 = vld [vmem:[%s5 + $0x3c8] sm:$0xff]
    %v775 = vld [vmem:[%s5 + $0x3d0] sm:$0xff]
    %v776 = vld [vmem:[%s5 + $0x3d8] sm:$0xff]
    %v777 = vld [vmem:[%s5 + $0x3e0] sm:$0xff]
    %v778 = vld [vmem:[%s5 + $0x3e8] sm:$0xff]
    %v779 = vld [vmem:[%s5 + $0x3f0] sm:$0xff]
    %v780 = vld [vmem:[%s5 + $0x3f8] sm:$0xff]
    %v781 = vld [vmem:[%s5 + $0x400] sm:$0xff]
    %v782 = vld [vmem:[%s5 + $0x408] sm:$0xff]
    %v783 = vld [vmem:[%s5 + $0x410] sm:$0xff]
    %v784 = vld [vmem:[%s5 + $0x418] sm:$0xff]
    %v785 = vld [vmem:[%s5 + $0x420] sm:$0xff]
    %v786 = vld [vmem:[%s5 + $0x428] sm:$0xff]
    %v787 = vld [vmem:[%s5 + $0x430] sm:$0xff]
    %v788 = vld [vmem:[%s5 + $0x438] sm:$0xff]
    %v789 = vld [vmem:[%s5 + $0x440] sm:$0xff]
    %v790 = vld [vmem:[%s5 + $0x448] sm:$0xff]
    %v791 = vld [vmem:[%s5 + $0x450] sm:$0xff]
    %v792 = vld [vmem:[%s5 + $0x458] sm:$0xff]
    %v793 = vld [vmem:[%s5 + $0x460] sm:$0xff]
    %v794 = vld [vmem:[%s5 + $0x468] sm:$0xff]
    %v795 = vld [vmem:[%s5 + $0x470] sm:$0xff]
    %v796 = vld [vmem:[%s5 + $0x478] sm:$0xff]
    %v797 = vld [vmem:[%s5 + $0x480] sm:$0xff]
    %v798 = vld [vmem:[%s5 + $0x488] sm:$0xff]
    %v799 = vld [vmem:[%s5 + $0x490] sm:$0xff]
    %v800 = vld [vmem:[%s5 + $0x498] sm:$0xff]
    %v801 = vld [vmem:[%s5 + $0x4a0] sm:$0xff]
    %v802 = vld [vmem:[%s5 + $0x4a8] sm:$0xff]
    %v803 = vld [vmem:[%s5 + $0x4b0] sm:$0xff]
    %v804 = vld [vmem:[%s5 + $0x4b8] sm:$0xff]
    %v805 = vld [vmem:[%s5 + $0x4c0] sm:$0xff]
    %v806 = vld [vmem:[%s5 + $0x4c8] sm:$0xff]
    %v807 = vld [vmem:[%s5 + $0x4d0] sm:$0xff]
    %v808 = vld [vmem:[%s5 + $0x4d8] sm:$0xff]
    %v809 = vld [vmem:[%s5 + $0x4e0] sm:$0xff]
    %v810 = vld [vmem:[%s5 + $0x4e8] sm:$0xff]
    %v811 = vld [vmem:[%s5 + $0x4f0] sm:$0xff]
    %v812 = vld [vmem:[%s5 + $0x4f8] sm:$0xff]
    %v813 = vld [vmem:[%s5 + $0x500] sm:$0xff]
    %v814 = vld [vmem:[%s5 + $0x508] sm:$0xff]
    %v815 = vld [vmem:[%s5 + $0x510] sm:$0xff]
    %v816 = vld [vmem:[%s5 + $0x518] sm:$0xff]
    %v817 = vld [vmem:[%s5 + $0x520] sm:$0xff]
    %v818 = vld [vmem:[%s5 + $0x528] sm:$0xff]
    %v819 = vld [vmem:[%s5 + $0x530] sm:$0xff]
    %v820 = vld [vmem:[%s5 + $0x538] sm:$0xff]
    %v821 = vld [vmem:[%s5 + $0x540] sm:$0xff]
    %v822 = vld [vmem:[%s5 + $0x548] sm:$0xff]
    %v823 = vld [vmem:[%s5 + $0x550] sm:$0xff]
    %v824 = vld [vmem:[%s5 + $0x558] sm:$0xff]
    %v825 = vld [vmem:[%s5 + $0x560] sm:$0xff]
    %v826 = vld [vmem:[%s5 + $0x568] sm:$0xff]
    %v827 = vld [vmem:[%s5 + $0x570] sm:$0xff]
    %v828 = vld [vmem:[%s5 + $0x578] sm:$0xff]
    %v829 = vld [vmem:[%s5 + $0x580] sm:$0xff]
    %v830 = vld [vmem:[%s5 + $0x588] sm:$0xff]
    %v831 = vld [vmem:[%s5 + $0x590] sm:$0xff]
    %v832 = vld [vmem:[%s5 + $0x598] sm:$0xff]
    %v833 = vld [vmem:[%s5 + $0x5a0] sm:$0xff]
    %v834 = vld [vmem:[%s5 + $0x5a8] sm:$0xff]
    %v835 = vld [vmem:[%s5 + $0x5b0] sm:$0xff]
    %v836 = vld [vmem:[%s5 + $0x5b8] sm:$0xff]
    %v837 = vld [vmem:[%s5 + $0x5c0] sm:$0xff]
    %v838 = vld [vmem:[%s5 + $0x5c8] sm:$0xff]
    %v839 = vld [vmem:[%s5 + $0x5d0] sm:$0xff]
    %v840 = vld [vmem:[%s5 + $0x5d8] sm:$0xff]
    %v841 = vld [vmem:[%s5 + $0x5e0] sm:$0xff]
    %v842 = vld [vmem:[%s5 + $0x5e8] sm:$0xff]
    %v843 = vld [vmem:[%s5 + $0x5f0] sm:$0xff]
    %v844 = vld [vmem:[%s5 + $0x5f8] sm:$0xff]
    %v845 = vld [vmem:[%s5 + $0x600] sm:$0xff]
    %v846 = vld [vmem:[%s5 + $0x608] sm:$0xff]
    %v847 = vld [vmem:[%s5 + $0x610] sm:$0xff]
    %v848 = vld [vmem:[%s5 + $0x618] sm:$0xff]
    %v849 = vld [vmem:[%s5 + $0x620] sm:$0xff]
    %v850 = vld [vmem:[%s5 + $0x628] sm:$0xff]
    %v851 = vld [vmem:[%s5 + $0x630] sm:$0xff]
    %v852 = vld [vmem:[%s5 + $0x638] sm:$0xff]
    %v853 = vld [vmem:[%s5 + $0x640] sm:$0xff]
    %v854 = vld [vmem:[%s5 + $0x648] sm:$0xff]
    %v855 = vld [vmem:[%s5 + $0x650] sm:$0xff]
    %v856 = vld [vmem:[%s5 + $0x658] sm:$0xff]
    %v857 = vld [vmem:[%s5 + $0x660] sm:$0xff]
    %v858 = vld [vmem:[%s5 + $0x668] sm:$0xff]
    %v859 = vld [vmem:[%s5 + $0x670] sm:$0xff]
    %v860 = vld [vmem:[%s5 + $0x678] sm:$0xff]
    %v861 = vld [vmem:[%s5 + $0x680] sm:$0xff]
    %v862 = vld [vmem:[%s5 + $0x688] sm:$0xff]
    %v863 = vld [vmem:[%s5 + $0x690] sm:$0xff]
    %v864 = vld [vmem:[%s5 + $0x698] sm:$0xff]
    %v865 = vld [vmem:[%s5 + $0x6a0] sm:$0xff]
    %v866 = vld [vmem:[%s5 + $0x6a8] sm:$0xff]
    %v867 = vld [vmem:[%s5 + $0x6b0] sm:$0xff]
    %v868 = vld [vmem:[%s5 + $0x6b8] sm:$0xff]
    %v869 = vld [vmem:[%s5 + $0x6c0] sm:$0xff]
    %v870 = vld [vmem:[%s5 + $0x6c8] sm:$0xff]
    %v871 = vld [vmem:[%s5 + $0x6d0] sm:$0xff]
    %v872 = vld [vmem:[%s5 + $0x6d8] sm:$0xff]
    %v873 = vld [vmem:[%s5 + $0x6e0] sm:$0xff]
    %v874 = vld [vmem:[%s5 + $0x6e8] sm:$0xff]
    %v875 = vld [vmem:[%s5 + $0x6f0] sm:$0xff]
    %v876 = vld [vmem:[%s5 + $0x6f8] sm:$0xff]
    %v877 = vld [vmem:[%s5 + $0x700] sm:$0xff]
    %v878 = vld [vmem:[%s5 + $0x708] sm:$0xff]
    %v879 = vld [vmem:[%s5 + $0x710] sm:$0xff]
    %v880 = vld [vmem:[%s5 + $0x718] sm:$0xff]
    %v881 = vld [vmem:[%s5 + $0x720] sm:$0xff]
    %v882 = vld [vmem:[%s5 + $0x728] sm:$0xff]
    %v883 = vld [vmem:[%s5 + $0x730] sm:$0xff]
    %v884 = vld [vmem:[%s5 + $0x738] sm:$0xff]
    %v885 = vld [vmem:[%s5 + $0x740] sm:$0xff]
    %v886 = vld [vmem:[%s5 + $0x748] sm:$0xff]
    %v887 = vld [vmem:[%s5 + $0x750] sm:$0xff]
    %v888 = vld [vmem:[%s5 + $0x758] sm:$0xff]
    %v889 = vld [vmem:[%s5 + $0x760] sm:$0xff]
    %v890 = vld [vmem:[%s5 + $0x768] sm:$0xff]
    %v891 = vld [vmem:[%s5 + $0x770] sm:$0xff]
    %v892 = vld [vmem:[%s5 + $0x778] sm:$0xff]
    %v893 = vld [vmem:[%s5 + $0x780] sm:$0xff]
    %v894 = vld [vmem:[%s5 + $0x788] sm:$0xff]
    %v895 = vld [vmem:[%s5 + $0x790] sm:$0xff]
    %v896 = vld [vmem:[%s5 + $0x798] sm:$0xff]
    %v897 = vld [vmem:[%s5 + $0x7a0] sm:$0xff]
    %v898 = vld [vmem:[%s5 + $0x7a8] sm:$0xff]
    %v899 = vld [vmem:[%s5 + $0x7b0] sm:$0xff]
    %v900 = vld [vmem:[%s5 + $0x7b8] sm:$0xff]
    %v901 = vld [vmem:[%s5 + $0x7c0] sm:$0xff]
    %v902 = vld [vmem:[%s5 + $0x7c8] sm:$0xff]
    %v903 = vld [vmem:[%s5 + $0x7d0] sm:$0xff]
    %v904 = vld [vmem:[%s5 + $0x7d8] sm:$0xff]
    %v905 = vld [vmem:[%s5 + $0x7e0] sm:$0xff]
    %v906 = vld [vmem:[%s5 + $0x7e8] sm:$0xff]
    %v907 = vld [vmem:[%s5 + $0x7f0] sm:$0xff]
    %v908 = vld [vmem:[%s5 + $0x7f8] sm:$0xff]
    %v909 = vld [vmem:[%s6] sm:$0xff]
    %v911 = vlaneseq
    %v912 = vshrl.u32 %v911, 7
    %v913 = vsub.s32 0, %v912
    %v914 = vrot.slane %v909, %v913
    %v915 = vlaneseq
    %v916 = vshrl.u32 %v915, 7
    %v917 = vsub.s32 1, %v916
    %v918 = vrot.slane %v909, %v917
    %v919 = vlaneseq
    %v920 = vshrl.u32 %v919, 7
    %v921 = vsub.s32 2, %v920
    %v922 = vrot.slane %v909, %v921
    %v923 = vlaneseq
    %v924 = vshrl.u32 %v923, 7
    %v925 = vsub.s32 3, %v924
    %v926 = vrot.slane %v909, %v925
    %v927 = vlaneseq
    %v928 = vshrl.u32 %v927, 7
    %v929 = vsub.s32 4, %v928
    %v930 = vrot.slane %v909, %v929
    %v931 = vlaneseq
    %v932 = vshrl.u32 %v931, 7
    %v933 = vsub.s32 5, %v932
    %v934 = vrot.slane %v909, %v933
    %v935 = vlaneseq
    %v936 = vshrl.u32 %v935, 7
    %v937 = vsub.s32 6, %v936
    %v938 = vrot.slane %v909, %v937
    %v939 = vlaneseq
    %v940 = vshrl.u32 %v939, 7
    %v941 = vsub.s32 7, %v940
    %v942 = vrot.slane %v909, %v941
    %v1207 = vunpack.c.l.b16 %v653
    %v1208 = vunpack.c.h.b16 %v653
    %v1209 = vunpack.c.l.b16 %v654
    %v1210 = vunpack.c.h.b16 %v654
    %v1211 = vunpack.c.l.b16 %v655
    %v1212 = vunpack.c.h.b16 %v655
    %v1213 = vunpack.c.l.b16 %v656
    %v1214 = vunpack.c.h.b16 %v656
    %v1215 = vunpack.c.l.b16 %v657
    %v1216 = vunpack.c.h.b16 %v657
    %v1217 = vunpack.c.l.b16 %v658
    %v1218 = vunpack.c.h.b16 %v658
    %v1219 = vunpack.c.l.b16 %v659
    %v1220 = vunpack.c.h.b16 %v659
    %v1221 = vunpack.c.l.b16 %v660
    %v1222 = vunpack.c.h.b16 %v660
    %v1223 = vunpack.c.l.b16 %v661
    %v1224 = vunpack.c.h.b16 %v661
    %v1225 = vunpack.c.l.b16 %v662
    %v1226 = vunpack.c.h.b16 %v662
    %v1227 = vunpack.c.l.b16 %v663
    %v1228 = vunpack.c.h.b16 %v663
    %v1229 = vunpack.c.l.b16 %v664
    %v1230 = vunpack.c.h.b16 %v664
    %v1231 = vunpack.c.l.b16 %v665
    %v1232 = vunpack.c.h.b16 %v665
    %v1233 = vunpack.c.l.b16 %v666
    %v1234 = vunpack.c.h.b16 %v666
    %v1235 = vunpack.c.l.b16 %v667
    %v1236 = vunpack.c.h.b16 %v667
    %v1237 = vunpack.c.l.b16 %v668
    %v1238 = vunpack.c.h.b16 %v668
    %v1239 = vunpack.c.l.b16 %v669
    %v1240 = vunpack.c.h.b16 %v669
    %v1241 = vunpack.c.l.b16 %v670
    %v1242 = vunpack.c.h.b16 %v670
    %v1243 = vunpack.c.l.b16 %v671
    %v1244 = vunpack.c.h.b16 %v671
    %v1245 = vunpack.c.l.b16 %v672
    %v1246 = vunpack.c.h.b16 %v672
    %v1247 = vunpack.c.l.b16 %v673
    %v1248 = vunpack.c.h.b16 %v673
    %v1249 = vunpack.c.l.b16 %v674
    %v1250 = vunpack.c.h.b16 %v674
    %v1251 = vunpack.c.l.b16 %v675
    %v1252 = vunpack.c.h.b16 %v675
    %v1253 = vunpack.c.l.b16 %v676
    %v1254 = vunpack.c.h.b16 %v676
    %v1255 = vunpack.c.l.b16 %v677
    %v1256 = vunpack.c.h.b16 %v677
    %v1257 = vunpack.c.l.b16 %v678
    %v1258 = vunpack.c.h.b16 %v678
    %v1259 = vunpack.c.l.b16 %v679
    %v1260 = vunpack.c.h.b16 %v679
    %v1261 = vunpack.c.l.b16 %v680
    %v1262 = vunpack.c.h.b16 %v680
    %v1263 = vunpack.c.l.b16 %v681
    %v1264 = vunpack.c.h.b16 %v681
    %v1265 = vunpack.c.l.b16 %v682
    %v1266 = vunpack.c.h.b16 %v682
    %v1267 = vunpack.c.l.b16 %v683
    %v1268 = vunpack.c.h.b16 %v683
    %v1269 = vunpack.c.l.b16 %v684
    %v1270 = vunpack.c.h.b16 %v684
    %v1271 = vunpack.c.l.b16 %v685
    %v1272 = vunpack.c.h.b16 %v685
    %v1273 = vunpack.c.l.b16 %v686
    %v1274 = vunpack.c.h.b16 %v686
    %v1275 = vunpack.c.l.b16 %v687
    %v1276 = vunpack.c.h.b16 %v687
    %v1277 = vunpack.c.l.b16 %v688
    %v1278 = vunpack.c.h.b16 %v688
    %v1279 = vunpack.c.l.b16 %v689
    %v1280 = vunpack.c.h.b16 %v689
    %v1281 = vunpack.c.l.b16 %v690
    %v1282 = vunpack.c.h.b16 %v690
    %v1283 = vunpack.c.l.b16 %v691
    %v1284 = vunpack.c.h.b16 %v691
    %v1285 = vunpack.c.l.b16 %v692
    %v1286 = vunpack.c.h.b16 %v692
    %v1287 = vunpack.c.l.b16 %v693
    %v1288 = vunpack.c.h.b16 %v693
    %v1289 = vunpack.c.l.b16 %v694
    %v1290 = vunpack.c.h.b16 %v694
    %v1291 = vunpack.c.l.b16 %v695
    %v1292 = vunpack.c.h.b16 %v695
    %v1293 = vunpack.c.l.b16 %v696
    %v1294 = vunpack.c.h.b16 %v696
    %v1295 = vunpack.c.l.b16 %v697
    %v1296 = vunpack.c.h.b16 %v697
    %v1297 = vunpack.c.l.b16 %v698
    %v1298 = vunpack.c.h.b16 %v698
    %v1299 = vunpack.c.l.b16 %v699
    %v1300 = vunpack.c.h.b16 %v699
    %v1301 = vunpack.c.l.b16 %v700
    %v1302 = vunpack.c.h.b16 %v700
    %v1303 = vunpack.c.l.b16 %v701
    %v1304 = vunpack.c.h.b16 %v701
    %v1305 = vunpack.c.l.b16 %v702
    %v1306 = vunpack.c.h.b16 %v702
    %v1307 = vunpack.c.l.b16 %v703
    %v1308 = vunpack.c.h.b16 %v703
    %v1309 = vunpack.c.l.b16 %v704
    %v1310 = vunpack.c.h.b16 %v704
    %v1311 = vunpack.c.l.b16 %v705
    %v1312 = vunpack.c.h.b16 %v705
    %v1313 = vunpack.c.l.b16 %v706
    %v1314 = vunpack.c.h.b16 %v706
    %v1315 = vunpack.c.l.b16 %v707
    %v1316 = vunpack.c.h.b16 %v707
    %v1317 = vunpack.c.l.b16 %v708
    %v1318 = vunpack.c.h.b16 %v708
    %v1319 = vunpack.c.l.b16 %v709
    %v1320 = vunpack.c.h.b16 %v709
    %v1321 = vunpack.c.l.b16 %v710
    %v1322 = vunpack.c.h.b16 %v710
    %v1323 = vunpack.c.l.b16 %v711
    %v1324 = vunpack.c.h.b16 %v711
    %v1325 = vunpack.c.l.b16 %v712
    %v1326 = vunpack.c.h.b16 %v712
    %v1327 = vunpack.c.l.b16 %v713
    %v1328 = vunpack.c.h.b16 %v713
    %v1329 = vunpack.c.l.b16 %v714
    %v1330 = vunpack.c.h.b16 %v714
    %v1331 = vunpack.c.l.b16 %v715
    %v1332 = vunpack.c.h.b16 %v715
    %v1333 = vunpack.c.l.b16 %v716
    %v1334 = vunpack.c.h.b16 %v716
    %v1335 = vunpack.c.l.b16 %v717
    %v1336 = vunpack.c.h.b16 %v717
    %v1337 = vunpack.c.l.b16 %v718
    %v1338 = vunpack.c.h.b16 %v718
    %v1339 = vunpack.c.l.b16 %v719
    %v1340 = vunpack.c.h.b16 %v719
    %v1341 = vunpack.c.l.b16 %v720
    %v1342 = vunpack.c.h.b16 %v720
    %v1343 = vunpack.c.l.b16 %v721
    %v1344 = vunpack.c.h.b16 %v721
    %v1345 = vunpack.c.l.b16 %v722
    %v1346 = vunpack.c.h.b16 %v722
    %v1347 = vunpack.c.l.b16 %v723
    %v1348 = vunpack.c.h.b16 %v723
    %v1349 = vunpack.c.l.b16 %v724
    %v1350 = vunpack.c.h.b16 %v724
    %v1351 = vunpack.c.l.b16 %v725
    %v1352 = vunpack.c.h.b16 %v725
    %v1353 = vunpack.c.l.b16 %v726
    %v1354 = vunpack.c.h.b16 %v726
    %v1355 = vunpack.c.l.b16 %v727
    %v1356 = vunpack.c.h.b16 %v727
    %v1357 = vunpack.c.l.b16 %v728
    %v1358 = vunpack.c.h.b16 %v728
    %v1359 = vunpack.c.l.b16 %v729
    %v1360 = vunpack.c.h.b16 %v729
    %v1361 = vunpack.c.l.b16 %v730
    %v1362 = vunpack.c.h.b16 %v730
    %v1363 = vunpack.c.l.b16 %v731
    %v1364 = vunpack.c.h.b16 %v731
    %v1365 = vunpack.c.l.b16 %v732
    %v1366 = vunpack.c.h.b16 %v732
    %v1367 = vunpack.c.l.b16 %v733
    %v1368 = vunpack.c.h.b16 %v733
    %v1369 = vunpack.c.l.b16 %v734
    %v1370 = vunpack.c.h.b16 %v734
    %v1371 = vunpack.c.l.b16 %v735
    %v1372 = vunpack.c.h.b16 %v735
    %v1373 = vunpack.c.l.b16 %v736
    %v1374 = vunpack.c.h.b16 %v736
    %v1375 = vunpack.c.l.b16 %v737
    %v1376 = vunpack.c.h.b16 %v737
    %v1377 = vunpack.c.l.b16 %v738
    %v1378 = vunpack.c.h.b16 %v738
    %v1379 = vunpack.c.l.b16 %v739
    %v1380 = vunpack.c.h.b16 %v739
    %v1381 = vunpack.c.l.b16 %v740
    %v1382 = vunpack.c.h.b16 %v740
    %v1383 = vunpack.c.l.b16 %v741
    %v1384 = vunpack.c.h.b16 %v741
    %v1385 = vunpack.c.l.b16 %v742
    %v1386 = vunpack.c.h.b16 %v742
    %v1387 = vunpack.c.l.b16 %v743
    %v1388 = vunpack.c.h.b16 %v743
    %v1389 = vunpack.c.l.b16 %v744
    %v1390 = vunpack.c.h.b16 %v744
    %v1391 = vunpack.c.l.b16 %v745
    %v1392 = vunpack.c.h.b16 %v745
    %v1393 = vunpack.c.l.b16 %v746
    %v1394 = vunpack.c.h.b16 %v746
    %v1395 = vunpack.c.l.b16 %v747
    %v1396 = vunpack.c.h.b16 %v747
    %v1397 = vunpack.c.l.b16 %v748
    %v1398 = vunpack.c.h.b16 %v748
    %v1399 = vunpack.c.l.b16 %v749
    %v1400 = vunpack.c.h.b16 %v749
    %v1401 = vunpack.c.l.b16 %v750
    %v1402 = vunpack.c.h.b16 %v750
    %v1403 = vunpack.c.l.b16 %v751
    %v1404 = vunpack.c.h.b16 %v751
    %v1405 = vunpack.c.l.b16 %v752
    %v1406 = vunpack.c.h.b16 %v752
    %v1407 = vunpack.c.l.b16 %v753
    %v1408 = vunpack.c.h.b16 %v753
    %v1409 = vunpack.c.l.b16 %v754
    %v1410 = vunpack.c.h.b16 %v754
    %v1411 = vunpack.c.l.b16 %v755
    %v1412 = vunpack.c.h.b16 %v755
    %v1413 = vunpack.c.l.b16 %v756
    %v1414 = vunpack.c.h.b16 %v756
    %v1415 = vunpack.c.l.b16 %v757
    %v1416 = vunpack.c.h.b16 %v757
    %v1417 = vunpack.c.l.b16 %v758
    %v1418 = vunpack.c.h.b16 %v758
    %v1419 = vunpack.c.l.b16 %v759
    %v1420 = vunpack.c.h.b16 %v759
    %v1421 = vunpack.c.l.b16 %v760
    %v1422 = vunpack.c.h.b16 %v760
    %v1423 = vunpack.c.l.b16 %v761
    %v1424 = vunpack.c.h.b16 %v761
    %v1425 = vunpack.c.l.b16 %v762
    %v1426 = vunpack.c.h.b16 %v762
    %v1427 = vunpack.c.l.b16 %v763
    %v1428 = vunpack.c.h.b16 %v763
    %v1429 = vunpack.c.l.b16 %v764
    %v1430 = vunpack.c.h.b16 %v764
    %v1431 = vunpack.c.l.b16 %v765
    %v1432 = vunpack.c.h.b16 %v765
    %v1433 = vunpack.c.l.b16 %v766
    %v1434 = vunpack.c.h.b16 %v766
    %v1435 = vunpack.c.l.b16 %v767
    %v1436 = vunpack.c.h.b16 %v767
    %v1437 = vunpack.c.l.b16 %v768
    %v1438 = vunpack.c.h.b16 %v768
    %v1439 = vunpack.c.l.b16 %v769
    %v1440 = vunpack.c.h.b16 %v769
    %v1441 = vunpack.c.l.b16 %v770
    %v1442 = vunpack.c.h.b16 %v770
    %v1443 = vunpack.c.l.b16 %v771
    %v1444 = vunpack.c.h.b16 %v771
    %v1445 = vunpack.c.l.b16 %v772
    %v1446 = vunpack.c.h.b16 %v772
    %v1447 = vunpack.c.l.b16 %v773
    %v1448 = vunpack.c.h.b16 %v773
    %v1449 = vunpack.c.l.b16 %v774
    %v1450 = vunpack.c.h.b16 %v774
    %v1451 = vunpack.c.l.b16 %v775
    %v1452 = vunpack.c.h.b16 %v775
    %v1453 = vunpack.c.l.b16 %v776
    %v1454 = vunpack.c.h.b16 %v776
    %v1455 = vunpack.c.l.b16 %v777
    %v1456 = vunpack.c.h.b16 %v777
    %v1457 = vunpack.c.l.b16 %v778
    %v1458 = vunpack.c.h.b16 %v778
    %v1459 = vunpack.c.l.b16 %v779
    %v1460 = vunpack.c.h.b16 %v779
    %v1461 = vunpack.c.l.b16 %v780
    %v1462 = vunpack.c.h.b16 %v780
    %v1463 = vunpack.c.l.b16 %v781
    %v1464 = vunpack.c.h.b16 %v781
    %v1465 = vunpack.c.l.b16 %v782
    %v1466 = vunpack.c.h.b16 %v782
    %v1467 = vunpack.c.l.b16 %v783
    %v1468 = vunpack.c.h.b16 %v783
    %v1469 = vunpack.c.l.b16 %v784
    %v1470 = vunpack.c.h.b16 %v784
    %v1471 = vunpack.c.l.b16 %v785
    %v1472 = vunpack.c.h.b16 %v785
    %v1473 = vunpack.c.l.b16 %v786
    %v1474 = vunpack.c.h.b16 %v786
    %v1475 = vunpack.c.l.b16 %v787
    %v1476 = vunpack.c.h.b16 %v787
    %v1477 = vunpack.c.l.b16 %v788
    %v1478 = vunpack.c.h.b16 %v788
    %v1479 = vunpack.c.l.b16 %v789
    %v1480 = vunpack.c.h.b16 %v789
    %v1481 = vunpack.c.l.b16 %v790
    %v1482 = vunpack.c.h.b16 %v790
    %v1483 = vunpack.c.l.b16 %v791
    %v1484 = vunpack.c.h.b16 %v791
    %v1485 = vunpack.c.l.b16 %v792
    %v1486 = vunpack.c.h.b16 %v792
    %v1487 = vunpack.c.l.b16 %v793
    %v1488 = vunpack.c.h.b16 %v793
    %v1489 = vunpack.c.l.b16 %v794
    %v1490 = vunpack.c.h.b16 %v794
    %v1491 = vunpack.c.l.b16 %v795
    %v1492 = vunpack.c.h.b16 %v795
    %v1493 = vunpack.c.l.b16 %v796
    %v1494 = vunpack.c.h.b16 %v796
    %v1495 = vunpack.c.l.b16 %v797
    %v1496 = vunpack.c.h.b16 %v797
    %v1497 = vunpack.c.l.b16 %v798
    %v1498 = vunpack.c.h.b16 %v798
    %v1499 = vunpack.c.l.b16 %v799
    %v1500 = vunpack.c.h.b16 %v799
    %v1501 = vunpack.c.l.b16 %v800
    %v1502 = vunpack.c.h.b16 %v800
    %v1503 = vunpack.c.l.b16 %v801
    %v1504 = vunpack.c.h.b16 %v801
    %v1505 = vunpack.c.l.b16 %v802
    %v1506 = vunpack.c.h.b16 %v802
    %v1507 = vunpack.c.l.b16 %v803
    %v1508 = vunpack.c.h.b16 %v803
    %v1509 = vunpack.c.l.b16 %v804
    %v1510 = vunpack.c.h.b16 %v804
    %v1511 = vunpack.c.l.b16 %v805
    %v1512 = vunpack.c.h.b16 %v805
    %v1513 = vunpack.c.l.b16 %v806
    %v1514 = vunpack.c.h.b16 %v806
    %v1515 = vunpack.c.l.b16 %v807
    %v1516 = vunpack.c.h.b16 %v807
    %v1517 = vunpack.c.l.b16 %v808
    %v1518 = vunpack.c.h.b16 %v808
    %v1519 = vunpack.c.l.b16 %v809
    %v1520 = vunpack.c.h.b16 %v809
    %v1521 = vunpack.c.l.b16 %v810
    %v1522 = vunpack.c.h.b16 %v810
    %v1523 = vunpack.c.l.b16 %v811
    %v1524 = vunpack.c.h.b16 %v811
    %v1525 = vunpack.c.l.b16 %v812
    %v1526 = vunpack.c.h.b16 %v812
    %v1527 = vunpack.c.l.b16 %v813
    %v1528 = vunpack.c.h.b16 %v813
    %v1529 = vunpack.c.l.b16 %v814
    %v1530 = vunpack.c.h.b16 %v814
    %v1531 = vunpack.c.l.b16 %v815
    %v1532 = vunpack.c.h.b16 %v815
    %v1533 = vunpack.c.l.b16 %v816
    %v1534 = vunpack.c.h.b16 %v816
    %v1535 = vunpack.c.l.b16 %v817
    %v1536 = vunpack.c.h.b16 %v817
    %v1537 = vunpack.c.l.b16 %v818
    %v1538 = vunpack.c.h.b16 %v818
    %v1539 = vunpack.c.l.b16 %v819
    %v1540 = vunpack.c.h.b16 %v819
    %v1541 = vunpack.c.l.b16 %v820
    %v1542 = vunpack.c.h.b16 %v820
    %v1543 = vunpack.c.l.b16 %v821
    %v1544 = vunpack.c.h.b16 %v821
    %v1545 = vunpack.c.l.b16 %v822
    %v1546 = vunpack.c.h.b16 %v822
    %v1547 = vunpack.c.l.b16 %v823
    %v1548 = vunpack.c.h.b16 %v823
    %v1549 = vunpack.c.l.b16 %v824
    %v1550 = vunpack.c.h.b16 %v824
    %v1551 = vunpack.c.l.b16 %v825
    %v1552 = vunpack.c.h.b16 %v825
    %v1553 = vunpack.c.l.b16 %v826
    %v1554 = vunpack.c.h.b16 %v826
    %v1555 = vunpack.c.l.b16 %v827
    %v1556 = vunpack.c.h.b16 %v827
    %v1557 = vunpack.c.l.b16 %v828
    %v1558 = vunpack.c.h.b16 %v828
    %v1559 = vunpack.c.l.b16 %v829
    %v1560 = vunpack.c.h.b16 %v829
    %v1561 = vunpack.c.l.b16 %v830
    %v1562 = vunpack.c.h.b16 %v830
    %v1563 = vunpack.c.l.b16 %v831
    %v1564 = vunpack.c.h.b16 %v831
    %v1565 = vunpack.c.l.b16 %v832
    %v1566 = vunpack.c.h.b16 %v832
    %v1567 = vunpack.c.l.b16 %v833
    %v1568 = vunpack.c.h.b16 %v833
    %v1569 = vunpack.c.l.b16 %v834
    %v1570 = vunpack.c.h.b16 %v834
    %v1571 = vunpack.c.l.b16 %v835
    %v1572 = vunpack.c.h.b16 %v835
    %v1573 = vunpack.c.l.b16 %v836
    %v1574 = vunpack.c.h.b16 %v836
    %v1575 = vunpack.c.l.b16 %v837
    %v1576 = vunpack.c.h.b16 %v837
    %v1577 = vunpack.c.l.b16 %v838
    %v1578 = vunpack.c.h.b16 %v838
    %v1579 = vunpack.c.l.b16 %v839
    %v1580 = vunpack.c.h.b16 %v839
    %v1581 = vunpack.c.l.b16 %v840
    %v1582 = vunpack.c.h.b16 %v840
    %v1583 = vunpack.c.l.b16 %v841
    %v1584 = vunpack.c.h.b16 %v841
    %v1585 = vunpack.c.l.b16 %v842
    %v1586 = vunpack.c.h.b16 %v842
    %v1587 = vunpack.c.l.b16 %v843
    %v1588 = vunpack.c.h.b16 %v843
    %v1589 = vunpack.c.l.b16 %v844
    %v1590 = vunpack.c.h.b16 %v844
    %v1591 = vunpack.c.l.b16 %v845
    %v1592 = vunpack.c.h.b16 %v845
    %v1593 = vunpack.c.l.b16 %v846
    %v1594 = vunpack.c.h.b16 %v846
    %v1595 = vunpack.c.l.b16 %v847
    %v1596 = vunpack.c.h.b16 %v847
    %v1597 = vunpack.c.l.b16 %v848
    %v1598 = vunpack.c.h.b16 %v848
    %v1599 = vunpack.c.l.b16 %v849
    %v1600 = vunpack.c.h.b16 %v849
    %v1601 = vunpack.c.l.b16 %v850
    %v1602 = vunpack.c.h.b16 %v850
    %v1603 = vunpack.c.l.b16 %v851
    %v1604 = vunpack.c.h.b16 %v851
    %v1605 = vunpack.c.l.b16 %v852
    %v1606 = vunpack.c.h.b16 %v852
    %v1607 = vunpack.c.l.b16 %v853
    %v1608 = vunpack.c.h.b16 %v853
    %v1609 = vunpack.c.l.b16 %v854
    %v1610 = vunpack.c.h.b16 %v854
    %v1611 = vunpack.c.l.b16 %v855
    %v1612 = vunpack.c.h.b16 %v855
    %v1613 = vunpack.c.l.b16 %v856
    %v1614 = vunpack.c.h.b16 %v856
    %v1615 = vunpack.c.l.b16 %v857
    %v1616 = vunpack.c.h.b16 %v857
    %v1617 = vunpack.c.l.b16 %v858
    %v1618 = vunpack.c.h.b16 %v858
    %v1619 = vunpack.c.l.b16 %v859
    %v1620 = vunpack.c.h.b16 %v859
    %v1621 = vunpack.c.l.b16 %v860
    %v1622 = vunpack.c.h.b16 %v860
    %v1623 = vunpack.c.l.b16 %v861
    %v1624 = vunpack.c.h.b16 %v861
    %v1625 = vunpack.c.l.b16 %v862
    %v1626 = vunpack.c.h.b16 %v862
    %v1627 = vunpack.c.l.b16 %v863
    %v1628 = vunpack.c.h.b16 %v863
    %v1629 = vunpack.c.l.b16 %v864
    %v1630 = vunpack.c.h.b16 %v864
    %v1631 = vunpack.c.l.b16 %v865
    %v1632 = vunpack.c.h.b16 %v865
    %v1633 = vunpack.c.l.b16 %v866
    %v1634 = vunpack.c.h.b16 %v866
    %v1635 = vunpack.c.l.b16 %v867
    %v1636 = vunpack.c.h.b16 %v867
    %v1637 = vunpack.c.l.b16 %v868
    %v1638 = vunpack.c.h.b16 %v868
    %v1639 = vunpack.c.l.b16 %v869
    %v1640 = vunpack.c.h.b16 %v869
    %v1641 = vunpack.c.l.b16 %v870
    %v1642 = vunpack.c.h.b16 %v870
    %v1643 = vunpack.c.l.b16 %v871
    %v1644 = vunpack.c.h.b16 %v871
    %v1645 = vunpack.c.l.b16 %v872
    %v1646 = vunpack.c.h.b16 %v872
    %v1647 = vunpack.c.l.b16 %v873
    %v1648 = vunpack.c.h.b16 %v873
    %v1649 = vunpack.c.l.b16 %v874
    %v1650 = vunpack.c.h.b16 %v874
    %v1651 = vunpack.c.l.b16 %v875
    %v1652 = vunpack.c.h.b16 %v875
    %v1653 = vunpack.c.l.b16 %v876
    %v1654 = vunpack.c.h.b16 %v876
    %v1655 = vunpack.c.l.b16 %v877
    %v1656 = vunpack.c.h.b16 %v877
    %v1657 = vunpack.c.l.b16 %v878
    %v1658 = vunpack.c.h.b16 %v878
    %v1659 = vunpack.c.l.b16 %v879
    %v1660 = vunpack.c.h.b16 %v879
    %v1661 = vunpack.c.l.b16 %v880
    %v1662 = vunpack.c.h.b16 %v880
    %v1663 = vunpack.c.l.b16 %v881
    %v1664 = vunpack.c.h.b16 %v881
    %v1665 = vunpack.c.l.b16 %v882
    %v1666 = vunpack.c.h.b16 %v882
    %v1667 = vunpack.c.l.b16 %v883
    %v1668 = vunpack.c.h.b16 %v883
    %v1669 = vunpack.c.l.b16 %v884
    %v1670 = vunpack.c.h.b16 %v884
    %v1671 = vunpack.c.l.b16 %v885
    %v1672 = vunpack.c.h.b16 %v885
    %v1673 = vunpack.c.l.b16 %v886
    %v1674 = vunpack.c.h.b16 %v886
    %v1675 = vunpack.c.l.b16 %v887
    %v1676 = vunpack.c.h.b16 %v887
    %v1677 = vunpack.c.l.b16 %v888
    %v1678 = vunpack.c.h.b16 %v888
    %v1679 = vunpack.c.l.b16 %v889
    %v1680 = vunpack.c.h.b16 %v889
    %v1681 = vunpack.c.l.b16 %v890
    %v1682 = vunpack.c.h.b16 %v890
    %v1683 = vunpack.c.l.b16 %v891
    %v1684 = vunpack.c.h.b16 %v891
    %v1685 = vunpack.c.l.b16 %v892
    %v1686 = vunpack.c.h.b16 %v892
    %v1687 = vunpack.c.l.b16 %v893
    %v1688 = vunpack.c.h.b16 %v893
    %v1689 = vunpack.c.l.b16 %v894
    %v1690 = vunpack.c.h.b16 %v894
    %v1691 = vunpack.c.l.b16 %v895
    %v1692 = vunpack.c.h.b16 %v895
    %v1693 = vunpack.c.l.b16 %v896
    %v1694 = vunpack.c.h.b16 %v896
    %v1695 = vunpack.c.l.b16 %v897
    %v1696 = vunpack.c.h.b16 %v897
    %v1697 = vunpack.c.l.b16 %v898
    %v1698 = vunpack.c.h.b16 %v898
    %v1699 = vunpack.c.l.b16 %v899
    %v1700 = vunpack.c.h.b16 %v899
    %v1701 = vunpack.c.l.b16 %v900
    %v1702 = vunpack.c.h.b16 %v900
    %v1703 = vunpack.c.l.b16 %v901
    %v1704 = vunpack.c.h.b16 %v901
    %v1705 = vunpack.c.l.b16 %v902
    %v1706 = vunpack.c.h.b16 %v902
    %v1707 = vunpack.c.l.b16 %v903
    %v1708 = vunpack.c.h.b16 %v903
    %v1709 = vunpack.c.l.b16 %v904
    %v1710 = vunpack.c.h.b16 %v904
    %v1711 = vunpack.c.l.b16 %v905
    %v1712 = vunpack.c.h.b16 %v905
    %v1713 = vunpack.c.l.b16 %v906
    %v1714 = vunpack.c.h.b16 %v906
    %v1715 = vunpack.c.l.b16 %v907
    %v1716 = vunpack.c.h.b16 %v907
    %v1717 = vunpack.c.l.b16 %v908
    %v1718 = vunpack.c.h.b16 %v908
    %v1719 = vpack.c.b16 %v1215, %v1207
    %v1720 = vpack.c.b16 %v1216, %v1208
    %v1721 = vpack.c.b16 %v1217, %v1209
    %v1722 = vpack.c.b16 %v1218, %v1210
    %v1723 = vpack.c.b16 %v1219, %v1211
    %v1724 = vpack.c.b16 %v1220, %v1212
    %v1725 = vpack.c.b16 %v1221, %v1213
    %v1726 = vpack.c.b16 %v1222, %v1214
    %v1727 = vpack.c.b16 %v1231, %v1223
    %v1728 = vpack.c.b16 %v1232, %v1224
    %v1729 = vpack.c.b16 %v1233, %v1225
    %v1730 = vpack.c.b16 %v1234, %v1226
    %v1731 = vpack.c.b16 %v1235, %v1227
    %v1732 = vpack.c.b16 %v1236, %v1228
    %v1733 = vpack.c.b16 %v1237, %v1229
    %v1734 = vpack.c.b16 %v1238, %v1230
    %v1735 = vpack.c.b16 %v1247, %v1239
    %v1736 = vpack.c.b16 %v1248, %v1240
    %v1737 = vpack.c.b16 %v1249, %v1241
    %v1738 = vpack.c.b16 %v1250, %v1242
    %v1739 = vpack.c.b16 %v1251, %v1243
    %v1740 = vpack.c.b16 %v1252, %v1244
    %v1741 = vpack.c.b16 %v1253, %v1245
    %v1742 = vpack.c.b16 %v1254, %v1246
    %v1743 = vpack.c.b16 %v1263, %v1255
    %v1744 = vpack.c.b16 %v1264, %v1256
    %v1745 = vpack.c.b16 %v1265, %v1257
    %v1746 = vpack.c.b16 %v1266, %v1258
    %v1747 = vpack.c.b16 %v1267, %v1259
    %v1748 = vpack.c.b16 %v1268, %v1260
    %v1749 = vpack.c.b16 %v1269, %v1261
    %v1750 = vpack.c.b16 %v1270, %v1262
    %v1751 = vpack.c.b16 %v1279, %v1271
    %v1752 = vpack.c.b16 %v1280, %v1272
    %v1753 = vpack.c.b16 %v1281, %v1273
    %v1754 = vpack.c.b16 %v1282, %v1274
    %v1755 = vpack.c.b16 %v1283, %v1275
    %v1756 = vpack.c.b16 %v1284, %v1276
    %v1757 = vpack.c.b16 %v1285, %v1277
    %v1758 = vpack.c.b16 %v1286, %v1278
    %v1759 = vpack.c.b16 %v1295, %v1287
    %v1760 = vpack.c.b16 %v1296, %v1288
    %v1761 = vpack.c.b16 %v1297, %v1289
    %v1762 = vpack.c.b16 %v1298, %v1290
    %v1763 = vpack.c.b16 %v1299, %v1291
    %v1764 = vpack.c.b16 %v1300, %v1292
    %v1765 = vpack.c.b16 %v1301, %v1293
    %v1766 = vpack.c.b16 %v1302, %v1294
    %v1767 = vpack.c.b16 %v1311, %v1303
    %v1768 = vpack.c.b16 %v1312, %v1304
    %v1769 = vpack.c.b16 %v1313, %v1305
    %v1770 = vpack.c.b16 %v1314, %v1306
    %v1771 = vpack.c.b16 %v1315, %v1307
    %v1772 = vpack.c.b16 %v1316, %v1308
    %v1773 = vpack.c.b16 %v1317, %v1309
    %v1774 = vpack.c.b16 %v1318, %v1310
    %v1775 = vpack.c.b16 %v1327, %v1319
    %v1776 = vpack.c.b16 %v1328, %v1320
    %v1777 = vpack.c.b16 %v1329, %v1321
    %v1778 = vpack.c.b16 %v1330, %v1322
    %v1779 = vpack.c.b16 %v1331, %v1323
    %v1780 = vpack.c.b16 %v1332, %v1324
    %v1781 = vpack.c.b16 %v1333, %v1325
    %v1782 = vpack.c.b16 %v1334, %v1326
    %v1783 = vpack.c.b16 %v1343, %v1335
    %v1784 = vpack.c.b16 %v1344, %v1336
    %v1785 = vpack.c.b16 %v1345, %v1337
    %v1786 = vpack.c.b16 %v1346, %v1338
    %v1787 = vpack.c.b16 %v1347, %v1339
    %v1788 = vpack.c.b16 %v1348, %v1340
    %v1789 = vpack.c.b16 %v1349, %v1341
    %v1790 = vpack.c.b16 %v1350, %v1342
    %v1791 = vpack.c.b16 %v1359, %v1351
    %v1792 = vpack.c.b16 %v1360, %v1352
    %v1793 = vpack.c.b16 %v1361, %v1353
    %v1794 = vpack.c.b16 %v1362, %v1354
    %v1795 = vpack.c.b16 %v1363, %v1355
    %v1796 = vpack.c.b16 %v1364, %v1356
    %v1797 = vpack.c.b16 %v1365, %v1357
    %v1798 = vpack.c.b16 %v1366, %v1358
    %v1799 = vpack.c.b16 %v1375, %v1367
    %v1800 = vpack.c.b16 %v1376, %v1368
    %v1801 = vpack.c.b16 %v1377, %v1369
    %v1802 = vpack.c.b16 %v1378, %v1370
    %v1803 = vpack.c.b16 %v1379, %v1371
    %v1804 = vpack.c.b16 %v1380, %v1372
    %v1805 = vpack.c.b16 %v1381, %v1373
    %v1806 = vpack.c.b16 %v1382, %v1374
    %v1807 = vpack.c.b16 %v1391, %v1383
    %v1808 = vpack.c.b16 %v1392, %v1384
    %v1809 = vpack.c.b16 %v1393, %v1385
    %v1810 = vpack.c.b16 %v1394, %v1386
    %v1811 = vpack.c.b16 %v1395, %v1387
    %v1812 = vpack.c.b16 %v1396, %v1388
    %v1813 = vpack.c.b16 %v1397, %v1389
    %v1814 = vpack.c.b16 %v1398, %v1390
    %v1815 = vpack.c.b16 %v1407, %v1399
    %v1816 = vpack.c.b16 %v1408, %v1400
    %v1817 = vpack.c.b16 %v1409, %v1401
    %v1818 = vpack.c.b16 %v1410, %v1402
    %v1819 = vpack.c.b16 %v1411, %v1403
    %v1820 = vpack.c.b16 %v1412, %v1404
    %v1821 = vpack.c.b16 %v1413, %v1405
    %v1822 = vpack.c.b16 %v1414, %v1406
    %v1823 = vpack.c.b16 %v1423, %v1415
    %v1824 = vpack.c.b16 %v1424, %v1416
    %v1825 = vpack.c.b16 %v1425, %v1417
    %v1826 = vpack.c.b16 %v1426, %v1418
    %v1827 = vpack.c.b16 %v1427, %v1419
    %v1828 = vpack.c.b16 %v1428, %v1420
    %v1829 = vpack.c.b16 %v1429, %v1421
    %v1830 = vpack.c.b16 %v1430, %v1422
    %v1831 = vpack.c.b16 %v1439, %v1431
    %v1832 = vpack.c.b16 %v1440, %v1432
    %v1833 = vpack.c.b16 %v1441, %v1433
    %v1834 = vpack.c.b16 %v1442, %v1434
    %v1835 = vpack.c.b16 %v1443, %v1435
    %v1836 = vpack.c.b16 %v1444, %v1436
    %v1837 = vpack.c.b16 %v1445, %v1437
    %v1838 = vpack.c.b16 %v1446, %v1438
    %v1839 = vpack.c.b16 %v1455, %v1447
    %v1840 = vpack.c.b16 %v1456, %v1448
    %v1841 = vpack.c.b16 %v1457, %v1449
    %v1842 = vpack.c.b16 %v1458, %v1450
    %v1843 = vpack.c.b16 %v1459, %v1451
    %v1844 = vpack.c.b16 %v1460, %v1452
    %v1845 = vpack.c.b16 %v1461, %v1453
    %v1846 = vpack.c.b16 %v1462, %v1454
    %v1847 = vpack.c.b16 %v1471, %v1463
    %v1848 = vpack.c.b16 %v1472, %v1464
    %v1849 = vpack.c.b16 %v1473, %v1465
    %v1850 = vpack.c.b16 %v1474, %v1466
    %v1851 = vpack.c.b16 %v1475, %v1467
    %v1852 = vpack.c.b16 %v1476, %v1468
    %v1853 = vpack.c.b16 %v1477, %v1469
    %v1854 = vpack.c.b16 %v1478, %v1470
    %v1855 = vpack.c.b16 %v1487, %v1479
    %v1856 = vpack.c.b16 %v1488, %v1480
    %v1857 = vpack.c.b16 %v1489, %v1481
    %v1858 = vpack.c.b16 %v1490, %v1482
    %v1859 = vpack.c.b16 %v1491, %v1483
    %v1860 = vpack.c.b16 %v1492, %v1484
    %v1861 = vpack.c.b16 %v1493, %v1485
    %v1862 = vpack.c.b16 %v1494, %v1486
    %v1863 = vpack.c.b16 %v1503, %v1495
    %v1864 = vpack.c.b16 %v1504, %v1496
    %v1865 = vpack.c.b16 %v1505, %v1497
    %v1866 = vpack.c.b16 %v1506, %v1498
    %v1867 = vpack.c.b16 %v1507, %v1499
    %v1868 = vpack.c.b16 %v1508, %v1500
    %v1869 = vpack.c.b16 %v1509, %v1501
    %v1870 = vpack.c.b16 %v1510, %v1502
    %v1871 = vpack.c.b16 %v1519, %v1511
    %v1872 = vpack.c.b16 %v1520, %v1512
    %v1873 = vpack.c.b16 %v1521, %v1513
    %v1874 = vpack.c.b16 %v1522, %v1514
    %v1875 = vpack.c.b16 %v1523, %v1515
    %v1876 = vpack.c.b16 %v1524, %v1516
    %v1877 = vpack.c.b16 %v1525, %v1517
    %v1878 = vpack.c.b16 %v1526, %v1518
    %v1879 = vpack.c.b16 %v1535, %v1527
    %v1880 = vpack.c.b16 %v1536, %v1528
    %v1881 = vpack.c.b16 %v1537, %v1529
    %v1882 = vpack.c.b16 %v1538, %v1530
    %v1883 = vpack.c.b16 %v1539, %v1531
    %v1884 = vpack.c.b16 %v1540, %v1532
    %v1885 = vpack.c.b16 %v1541, %v1533
    %v1886 = vpack.c.b16 %v1542, %v1534
    %v1887 = vpack.c.b16 %v1551, %v1543
    %v1888 = vpack.c.b16 %v1552, %v1544
    %v1889 = vpack.c.b16 %v1553, %v1545
    %v1890 = vpack.c.b16 %v1554, %v1546
    %v1891 = vpack.c.b16 %v1555, %v1547
    %v1892 = vpack.c.b16 %v1556, %v1548
    %v1893 = vpack.c.b16 %v1557, %v1549
    %v1894 = vpack.c.b16 %v1558, %v1550
    %v1895 = vpack.c.b16 %v1567, %v1559
    %v1896 = vpack.c.b16 %v1568, %v1560
    %v1897 = vpack.c.b16 %v1569, %v1561
    %v1898 = vpack.c.b16 %v1570, %v1562
    %v1899 = vpack.c.b16 %v1571, %v1563
    %v1900 = vpack.c.b16 %v1572, %v1564
    %v1901 = vpack.c.b16 %v1573, %v1565
    %v1902 = vpack.c.b16 %v1574, %v1566
    %v1903 = vpack.c.b16 %v1583, %v1575
    %v1904 = vpack.c.b16 %v1584, %v1576
    %v1905 = vpack.c.b16 %v1585, %v1577
    %v1906 = vpack.c.b16 %v1586, %v1578
    %v1907 = vpack.c.b16 %v1587, %v1579
    %v1908 = vpack.c.b16 %v1588, %v1580
    %v1909 = vpack.c.b16 %v1589, %v1581
    %v1910 = vpack.c.b16 %v1590, %v1582
    %v1911 = vpack.c.b16 %v1599, %v1591
    %v1912 = vpack.c.b16 %v1600, %v1592
    %v1913 = vpack.c.b16 %v1601, %v1593
    %v1914 = vpack.c.b16 %v1602, %v1594
    %v1915 = vpack.c.b16 %v1603, %v1595
    %v1916 = vpack.c.b16 %v1604, %v1596
    %v1917 = vpack.c.b16 %v1605, %v1597
    %v1918 = vpack.c.b16 %v1606, %v1598
    %v1919 = vpack.c.b16 %v1615, %v1607
    %v1920 = vpack.c.b16 %v1616, %v1608
    %v1921 = vpack.c.b16 %v1617, %v1609
    %v1922 = vpack.c.b16 %v1618, %v1610
    %v1923 = vpack.c.b16 %v1619, %v1611
    %v1924 = vpack.c.b16 %v1620, %v1612
    %v1925 = vpack.c.b16 %v1621, %v1613
    %v1926 = vpack.c.b16 %v1622, %v1614
    %v1927 = vpack.c.b16 %v1631, %v1623
    %v1928 = vpack.c.b16 %v1632, %v1624
    %v1929 = vpack.c.b16 %v1633, %v1625
    %v1930 = vpack.c.b16 %v1634, %v1626
    %v1931 = vpack.c.b16 %v1635, %v1627
    %v1932 = vpack.c.b16 %v1636, %v1628
    %v1933 = vpack.c.b16 %v1637, %v1629
    %v1934 = vpack.c.b16 %v1638, %v1630
    %v1935 = vpack.c.b16 %v1647, %v1639
    %v1936 = vpack.c.b16 %v1648, %v1640
    %v1937 = vpack.c.b16 %v1649, %v1641
    %v1938 = vpack.c.b16 %v1650, %v1642
    %v1939 = vpack.c.b16 %v1651, %v1643
    %v1940 = vpack.c.b16 %v1652, %v1644
    %v1941 = vpack.c.b16 %v1653, %v1645
    %v1942 = vpack.c.b16 %v1654, %v1646
    %v1943 = vpack.c.b16 %v1663, %v1655
    %v1944 = vpack.c.b16 %v1664, %v1656
    %v1945 = vpack.c.b16 %v1665, %v1657
    %v1946 = vpack.c.b16 %v1666, %v1658
    %v1947 = vpack.c.b16 %v1667, %v1659
    %v1948 = vpack.c.b16 %v1668, %v1660
    %v1949 = vpack.c.b16 %v1669, %v1661
    %v1950 = vpack.c.b16 %v1670, %v1662
    %v1951 = vpack.c.b16 %v1679, %v1671
    %v1952 = vpack.c.b16 %v1680, %v1672
    %v1953 = vpack.c.b16 %v1681, %v1673
    %v1954 = vpack.c.b16 %v1682, %v1674
    %v1955 = vpack.c.b16 %v1683, %v1675
    %v1956 = vpack.c.b16 %v1684, %v1676
    %v1957 = vpack.c.b16 %v1685, %v1677
    %v1958 = vpack.c.b16 %v1686, %v1678
    %v1959 = vpack.c.b16 %v1695, %v1687
    %v1960 = vpack.c.b16 %v1696, %v1688
    %v1961 = vpack.c.b16 %v1697, %v1689
    %v1962 = vpack.c.b16 %v1698, %v1690
    %v1963 = vpack.c.b16 %v1699, %v1691
    %v1964 = vpack.c.b16 %v1700, %v1692
    %v1965 = vpack.c.b16 %v1701, %v1693
    %v1966 = vpack.c.b16 %v1702, %v1694
    %v1967 = vpack.c.b16 %v1711, %v1703
    %v1968 = vpack.c.b16 %v1712, %v1704
    %v1969 = vpack.c.b16 %v1713, %v1705
    %v1970 = vpack.c.b16 %v1714, %v1706
    %v1971 = vpack.c.b16 %v1715, %v1707
    %v1972 = vpack.c.b16 %v1716, %v1708
    %v1973 = vpack.c.b16 %v1717, %v1709
    %v1974 = vpack.c.b16 %v1718, %v1710
    %2231 = vmatprep.subr.bf16.mxu0 %v1720
    %2232 = vmatpush1.bf16.msra.mxu0 %v1719
    %2233 = vmatprep.subr.bf16.mxu0 %v1728
    %2234 = vmatpush1.bf16.msra.mxu0 %v1727
    %2235 = vmatprep.subr.bf16.mxu0 %v1736
    %2236 = vmatpush1.bf16.msra.mxu0 %v1735
    %2237 = vmatprep.subr.bf16.mxu0 %v1744
    %2238 = vmatpush1.bf16.msra.mxu0 %v1743
    %2239 = vmatprep.subr.bf16.mxu0 %v1752
    %2240 = vmatpush1.bf16.msra.mxu0 %v1751
    %2241 = vmatprep.subr.bf16.mxu0 %v1760
    %2242 = vmatpush1.bf16.msra.mxu0 %v1759
    %2243 = vmatprep.subr.bf16.mxu0 %v1768
    %2244 = vmatpush1.bf16.msra.mxu0 %v1767
    %2245 = vmatprep.subr.bf16.mxu0 %v1776
    %2246 = vmatpush1.bf16.msra.mxu0 %v1775
    %2247 = vmatprep.subr.bf16.mxu0 %v1784
    %2248 = vmatpush1.bf16.msra.mxu0 %v1783
    %2249 = vmatprep.subr.bf16.mxu0 %v1792
    %2250 = vmatpush1.bf16.msra.mxu0 %v1791
    %2251 = vmatprep.subr.bf16.mxu0 %v1800
    %2252 = vmatpush1.bf16.msra.mxu0 %v1799
    %2253 = vmatprep.subr.bf16.mxu0 %v1808
    %2254 = vmatpush1.bf16.msra.mxu0 %v1807
    %2255 = vmatprep.subr.bf16.mxu0 %v1816
    %2256 = vmatpush1.bf16.msra.mxu0 %v1815
    %2257 = vmatprep.subr.bf16.mxu0 %v1824
    %2258 = vmatpush1.bf16.msra.mxu0 %v1823
    %2259 = vmatprep.subr.bf16.mxu0 %v1832
    %2260 = vmatpush1.bf16.msra.mxu0 %v1831
    %2261 = vmatprep.subr.bf16.mxu0 %v1840
    %2262 = vmatpush1.bf16.msra.mxu0 %v1839
    %2263 = vmatprep.mubr.bf16.mxu0 %v650
    %2264 = vmatmul.mubr.bf16.gmra.mrb[0].mxu0 %v649
    %v2265 = vpop.f32.mrb[0].mxu0
    %v2266 = vadd.f32 %v914, %v2265
    %v2267 = vpop.f32.mrb[0].mxu0
    %v2268 = vadd.f32 %v918, %v2267
    %v2269 = vpop.f32.mrb[0].mxu0
    %v2270 = vpop.f32.mrb[0].mxu0
    %2271 = vdwg.mxu0
    %2272 = vmatprep.subr.bf16.mxu0 %v1848
    %2273 = vmatpush1.bf16.msra.mxu0 %v1847
    %2274 = vmatprep.subr.bf16.mxu0 %v1856
    %2275 = vmatpush1.bf16.msra.mxu0 %v1855
    %2276 = vmatprep.subr.bf16.mxu0 %v1864
    %2277 = vmatpush1.bf16.msra.mxu0 %v1863
    %2278 = vmatprep.subr.bf16.mxu0 %v1872
    %2279 = vmatpush1.bf16.msra.mxu0 %v1871
    %2280 = vmatprep.subr.bf16.mxu0 %v1880
    %2281 = vmatpush1.bf16.msra.mxu0 %v1879
    %2282 = vmatprep.subr.bf16.mxu0 %v1888
    %2283 = vmatpush1.bf16.msra.mxu0 %v1887
    %2284 = vmatprep.subr.bf16.mxu0 %v1896
    %2285 = vmatpush1.bf16.msra.mxu0 %v1895
    %2286 = vmatprep.subr.bf16.mxu0 %v1904
    %2287 = vmatpush1.bf16.msra.mxu0 %v1903
    %2288 = vmatprep.subr.bf16.mxu0 %v1912
    %2289 = vmatpush1.bf16.msra.mxu0 %v1911
    %2290 = vmatprep.subr.bf16.mxu0 %v1920
    %2291 = vmatpush1.bf16.msra.mxu0 %v1919
    %2292 = vmatprep.subr.bf16.mxu0 %v1928
    %2293 = vmatpush1.bf16.msra.mxu0 %v1927
    %2294 = vmatprep.subr.bf16.mxu0 %v1936
    %2295 = vmatpush1.bf16.msra.mxu0 %v1935
    %2296 = vmatprep.subr.bf16.mxu0 %v1944
    %2297 = vmatpush1.bf16.msra.mxu0 %v1943
    %2298 = vmatprep.subr.bf16.mxu0 %v1952
    %2299 = vmatpush1.bf16.msra.mxu0 %v1951
    %2300 = vmatprep.subr.bf16.mxu0 %v1960
    %2301 = vmatpush1.bf16.msra.mxu0 %v1959
    %2302 = vmatprep.subr.bf16.mxu0 %v1968
    %2303 = vmatpush1.bf16.msra.mxu0 %v1967
    %2304 = vmatprep.mubr.bf16.mxu0 %v652
    %2305 = vmatmul.mubr.bf16.gmra.mrb[0].mxu0 %v651
    %v2306 = vpop.f32.mrb[0].mxu0
    %v2307 = vadd.f32 %v2266, %v2306
    %v2308 = vpop.f32.mrb[0].mxu0
    %v2309 = vadd.f32 %v2268, %v2308
    %v2310 = vpop.f32.mrb[0].mxu0
    %v2311 = vpop.f32.mrb[0].mxu0
    %2312 = vdwg.mxu0
    %2313 = vmatprep.subr.bf16.mxu0 %v1722
    %2314 = vmatpush1.bf16.msra.mxu0 %v1721
    %2315 = vmatprep.subr.bf16.mxu0 %v1730
    %2316 = vmatpush1.bf16.msra.mxu0 %v1729
    %2317 = vmatprep.subr.bf16.mxu0 %v1738
    %2318 = vmatpush1.bf16.msra.mxu0 %v1737
    %2319 = vmatprep.subr.bf16.mxu0 %v1746
    %2320 = vmatpush1.bf16.msra.mxu0 %v1745
    %2321 = vmatprep.subr.bf16.mxu0 %v1754
    %2322 = vmatpush1.bf16.msra.mxu0 %v1753
    %2323 = vmatprep.subr.bf16.mxu0 %v1762
    %2324 = vmatpush1.bf16.msra.mxu0 %v1761
    %2325 = vmatprep.subr.bf16.mxu0 %v1770
    %2326 = vmatpush1.bf16.msra.mxu0 %v1769
    %2327 = vmatprep.subr.bf16.mxu0 %v1778
    %2328 = vmatpush1.bf16.msra.mxu0 %v1777
    %2329 = vmatprep.subr.bf16.mxu0 %v1786
    %2330 = vmatpush1.bf16.msra.mxu0 %v1785
    %2331 = vmatprep.subr.bf16.mxu0 %v1794
    %2332 = vmatpush1.bf16.msra.mxu0 %v1793
    %2333 = vmatprep.subr.bf16.mxu0 %v1802
    %2334 = vmatpush1.bf16.msra.mxu0 %v1801
    %2335 = vmatprep.subr.bf16.mxu0 %v1810
    %2336 = vmatpush1.bf16.msra.mxu0 %v1809
    %2337 = vmatprep.subr.bf16.mxu0 %v1818
    %2338 = vmatpush1.bf16.msra.mxu0 %v1817
    %2339 = vmatprep.subr.bf16.mxu0 %v1826
    %2340 = vmatpush1.bf16.msra.mxu0 %v1825
    %2341 = vmatprep.subr.bf16.mxu0 %v1834
    %2342 = vmatpush1.bf16.msra.mxu0 %v1833
    %2343 = vmatprep.subr.bf16.mxu0 %v1842
    %2344 = vmatpush1.bf16.msra.mxu0 %v1841
    %2345 = vmatprep.mubr.bf16.mxu0 %v650
    %2346 = vmatmul.mubr.bf16.gmra.mrb[0].mxu0 %v649
    %v2347 = vpop.f32.mrb[0].mxu0
    %v2348 = vadd.f32 %v922, %v2347
    %v2349 = vpop.f32.mrb[0].mxu0
    %v2350 = vadd.f32 %v926, %v2349
    %v2351 = vpop.f32.mrb[0].mxu0
    %v2352 = vpop.f32.mrb[0].mxu0
    %2353 = vdwg.mxu0
    %2354 = vmatprep.subr.bf16.mxu0 %v1850
    %2355 = vmatpush1.bf16.msra.mxu0 %v1849
    %2356 = vmatprep.subr.bf16.mxu0 %v1858
    %2357 = vmatpush1.bf16.msra.mxu0 %v1857
    %2358 = vmatprep.subr.bf16.mxu0 %v1866
    %2359 = vmatpush1.bf16.msra.mxu0 %v1865
    %2360 = vmatprep.subr.bf16.mxu0 %v1874
    %2361 = vmatpush1.bf16.msra.mxu0 %v1873
    %2362 = vmatprep.subr.bf16.mxu0 %v1882
    %2363 = vmatpush1.bf16.msra.mxu0 %v1881
    %2364 = vmatprep.subr.bf16.mxu0 %v1890
    %2365 = vmatpush1.bf16.msra.mxu0 %v1889
    %2366 = vmatprep.subr.bf16.mxu0 %v1898
    %2367 = vmatpush1.bf16.msra.mxu0 %v1897
    %2368 = vmatprep.subr.bf16.mxu0 %v1906
    %2369 = vmatpush1.bf16.msra.mxu0 %v1905
    %2370 = vmatprep.subr.bf16.mxu0 %v1914
    %2371 = vmatpush1.bf16.msra.mxu0 %v1913
    %2372 = vmatprep.subr.bf16.mxu0 %v1922
    %2373 = vmatpush1.bf16.msra.mxu0 %v1921
    %2374 = vmatprep.subr.bf16.mxu0 %v1930
    %2375 = vmatpush1.bf16.msra.mxu0 %v1929
    %2376 = vmatprep.subr.bf16.mxu0 %v1938
    %2377 = vmatpush1.bf16.msra.mxu0 %v1937
    %2378 = vmatprep.subr.bf16.mxu0 %v1946
    %2379 = vmatpush1.bf16.msra.mxu0 %v1945
    %2380 = vmatprep.subr.bf16.mxu0 %v1954
    %2381 = vmatpush1.bf16.msra.mxu0 %v1953
    %2382 = vmatprep.subr.bf16.mxu0 %v1962
    %2383 = vmatpush1.bf16.msra.mxu0 %v1961
    %2384 = vmatprep.subr.bf16.mxu0 %v1970
    %2385 = vmatpush1.bf16.msra.mxu0 %v1969
    %2386 = vmatprep.mubr.bf16.mxu0 %v652
    %2387 = vmatmul.mubr.bf16.gmra.mrb[0].mxu0 %v651
    %v2388 = vpop.f32.mrb[0].mxu0
    %v2389 = vadd.f32 %v2348, %v2388
    %v2390 = vpop.f32.mrb[0].mxu0
    %v2391 = vadd.f32 %v2350, %v2390
    %v2392 = vpop.f32.mrb[0].mxu0
    %v2393 = vpop.f32.mrb[0].mxu0
    %2394 = vdwg.mxu0
    %2395 = vmatprep.subr.bf16.mxu0 %v1724
    %2396 = vmatpush1.bf16.msra.mxu0 %v1723
    %2397 = vmatprep.subr.bf16.mxu0 %v1732
    %2398 = vmatpush1.bf16.msra.mxu0 %v1731
    %2399 = vmatprep.subr.bf16.mxu0 %v1740
    %2400 = vmatpush1.bf16.msra.mxu0 %v1739
    %2401 = vmatprep.subr.bf16.mxu0 %v1748
    %2402 = vmatpush1.bf16.msra.mxu0 %v1747
    %2403 = vmatprep.subr.bf16.mxu0 %v1756
    %2404 = vmatpush1.bf16.msra.mxu0 %v1755
    %2405 = vmatprep.subr.bf16.mxu0 %v1764
    %2406 = vmatpush1.bf16.msra.mxu0 %v1763
    %2407 = vmatprep.subr.bf16.mxu0 %v1772
    %2408 = vmatpush1.bf16.msra.mxu0 %v1771
    %2409 = vmatprep.subr.bf16.mxu0 %v1780
    %2410 = vmatpush1.bf16.msra.mxu0 %v1779
    %2411 = vmatprep.subr.bf16.mxu0 %v1788
    %2412 = vmatpush1.bf16.msra.mxu0 %v1787
    %2413 = vmatprep.subr.bf16.mxu0 %v1796
    %2414 = vmatpush1.bf16.msra.mxu0 %v1795
    %2415 = vmatprep.subr.bf16.mxu0 %v1804
    %2416 = vmatpush1.bf16.msra.mxu0 %v1803
    %2417 = vmatprep.subr.bf16.mxu0 %v1812
    %2418 = vmatpush1.bf16.msra.mxu0 %v1811
    %2419 = vmatprep.subr.bf16.mxu0 %v1820
    %2420 = vmatpush1.bf16.msra.mxu0 %v1819
    %2421 = vmatprep.subr.bf16.mxu0 %v1828
    %2422 = vmatpush1.bf16.msra.mxu0 %v1827
    %2423 = vmatprep.subr.bf16.mxu0 %v1836
    %2424 = vmatpush1.bf16.msra.mxu0 %v1835
    %2425 = vmatprep.subr.bf16.mxu0 %v1844
    %2426 = vmatpush1.bf16.msra.mxu0 %v1843
    %2427 = vmatprep.mubr.bf16.mxu0 %v650
    %2428 = vmatmul.mubr.bf16.gmra.mrb[0].mxu0 %v649
    %v2429 = vpop.f32.mrb[0].mxu0
    %v2430 = vadd.f32 %v930, %v2429
    %v2431 = vpop.f32.mrb[0].mxu0
    %v2432 = vadd.f32 %v934, %v2431
    %v2433 = vpop.f32.mrb[0].mxu0
    %v2434 = vpop.f32.mrb[0].mxu0
    %2435 = vdwg.mxu0
    %2436 = vmatprep.subr.bf16.mxu0 %v1852
    %2437 = vmatpush1.bf16.msra.mxu0 %v1851
    %2438 = vmatprep.subr.bf16.mxu0 %v1860
    %2439 = vmatpush1.bf16.msra.mxu0 %v1859
    %2440 = vmatprep.subr.bf16.mxu0 %v1868
    %2441 = vmatpush1.bf16.msra.mxu0 %v1867
    %2442 = vmatprep.subr.bf16.mxu0 %v1876
    %2443 = vmatpush1.bf16.msra.mxu0 %v1875
    %2444 = vmatprep.subr.bf16.mxu0 %v1884
    %2445 = vmatpush1.bf16.msra.mxu0 %v1883
    %2446 = vmatprep.subr.bf16.mxu0 %v1892
    %2447 = vmatpush1.bf16.msra.mxu0 %v1891
    %2448 = vmatprep.subr.bf16.mxu0 %v1900
    %2449 = vmatpush1.bf16.msra.mxu0 %v1899
    %2450 = vmatprep.subr.bf16.mxu0 %v1908
    %2451 = vmatpush1.bf16.msra.mxu0 %v1907
    %2452 = vmatprep.subr.bf16.mxu0 %v1916
    %2453 = vmatpush1.bf16.msra.mxu0 %v1915
    %2454 = vmatprep.subr.bf16.mxu0 %v1924
    %2455 = vmatpush1.bf16.msra.mxu0 %v1923
    %2456 = vmatprep.subr.bf16.mxu0 %v1932
    %2457 = vmatpush1.bf16.msra.mxu0 %v1931
    %2458 = vmatprep.subr.bf16.mxu0 %v1940
    %2459 = vmatpush1.bf16.msra.mxu0 %v1939
    %2460 = vmatprep.subr.bf16.mxu0 %v1948
    %2461 = vmatpush1.bf16.msra.mxu0 %v1947
    %2462 = vmatprep.subr.bf16.mxu0 %v1956
    %2463 = vmatpush1.bf16.msra.mxu0 %v1955
    %2464 = vmatprep.subr.bf16.mxu0 %v1964
    %2465 = vmatpush1.bf16.msra.mxu0 %v1963
    %2466 = vmatprep.subr.bf16.mxu0 %v1972
    %2467 = vmatpush1.bf16.msra.mxu0 %v1971
    %2468 = vmatprep.mubr.bf16.mxu0 %v652
    %2469 = vmatmul.mubr.bf16.gmra.mrb[0].mxu0 %v651
    %v2470 = vpop.f32.mrb[0].mxu0
    %v2471 = vadd.f32 %v2430, %v2470
    %v2472 = vpop.f32.mrb[0].mxu0
    %v2473 = vadd.f32 %v2432, %v2472
    %v2474 = vpop.f32.mrb[0].mxu0
    %v2475 = vpop.f32.mrb[0].mxu0
    %2476 = vdwg.mxu0
    %2477 = vmatprep.subr.bf16.mxu0 %v1726
    %2478 = vmatpush1.bf16.msra.mxu0 %v1725
    %2479 = vmatprep.subr.bf16.mxu0 %v1734
    %2480 = vmatpush1.bf16.msra.mxu0 %v1733
    %2481 = vmatprep.subr.bf16.mxu0 %v1742
    %2482 = vmatpush1.bf16.msra.mxu0 %v1741
    %2483 = vmatprep.subr.bf16.mxu0 %v1750
    %2484 = vmatpush1.bf16.msra.mxu0 %v1749
    %2485 = vmatprep.subr.bf16.mxu0 %v1758
    %2486 = vmatpush1.bf16.msra.mxu0 %v1757
    %2487 = vmatprep.subr.bf16.mxu0 %v1766
    %2488 = vmatpush1.bf16.msra.mxu0 %v1765
    %2489 = vmatprep.subr.bf16.mxu0 %v1774
    %2490 = vmatpush1.bf16.msra.mxu0 %v1773
    %2491 = vmatprep.subr.bf16.mxu0 %v1782
    %2492 = vmatpush1.bf16.msra.mxu0 %v1781
    %2493 = vmatprep.subr.bf16.mxu0 %v1790
    %2494 = vmatpush1.bf16.msra.mxu0 %v1789
    %2495 = vmatprep.subr.bf16.mxu0 %v1798
    %2496 = vmatpush1.bf16.msra.mxu0 %v1797
    %2497 = vmatprep.subr.bf16.mxu0 %v1806
    %2498 = vmatpush1.bf16.msra.mxu0 %v1805
    %2499 = vmatprep.subr.bf16.mxu0 %v1814
    %2500 = vmatpush1.bf16.msra.mxu0 %v1813
    %2501 = vmatprep.subr.bf16.mxu0 %v1822
    %2502 = vmatpush1.bf16.msra.mxu0 %v1821
    %2503 = vmatprep.subr.bf16.mxu0 %v1830
    %2504 = vmatpush1.bf16.msra.mxu0 %v1829
    %2505 = vmatprep.subr.bf16.mxu0 %v1838
    %2506 = vmatpush1.bf16.msra.mxu0 %v1837
    %2507 = vmatprep.subr.bf16.mxu0 %v1846
    %2508 = vmatpush1.bf16.msra.mxu0 %v1845
    %2509 = vmatprep.mubr.bf16.mxu0 %v650
    %2510 = vmatmul.mubr.bf16.gmra.mrb[0].mxu0 %v649
    %v2511 = vpop.f32.mrb[0].mxu0
    %v2512 = vadd.f32 %v938, %v2511
    %v2513 = vpop.f32.mrb[0].mxu0
    %v2514 = vadd.f32 %v942, %v2513
    %v2515 = vpop.f32.mrb[0].mxu0
    %v2516 = vpop.f32.mrb[0].mxu0
    %2517 = vdwg.mxu0
    %2518 = vmatprep.subr.bf16.mxu0 %v1854
    %2519 = vmatpush1.bf16.msra.mxu0 %v1853
    %2520 = vmatprep.subr.bf16.mxu0 %v1862
    %2521 = vmatpush1.bf16.msra.mxu0 %v1861
    %2522 = vmatprep.subr.bf16.mxu0 %v1870
    %2523 = vmatpush1.bf16.msra.mxu0 %v1869
    %2524 = vmatprep.subr.bf16.mxu0 %v1878
    %2525 = vmatpush1.bf16.msra.mxu0 %v1877
    %2526 = vmatprep.subr.bf16.mxu0 %v1886
    %2527 = vmatpush1.bf16.msra.mxu0 %v1885
    %2528 = vmatprep.subr.bf16.mxu0 %v1894
    %2529 = vmatpush1.bf16.msra.mxu0 %v1893
    %2530 = vmatprep.subr.bf16.mxu0 %v1902
    %2531 = vmatpush1.bf16.msra.mxu0 %v1901
    %2532 = vmatprep.subr.bf16.mxu0 %v1910
    %2533 = vmatpush1.bf16.msra.mxu0 %v1909
    %2534 = vmatprep.subr.bf16.mxu0 %v1918
    %2535 = vmatpush1.bf16.msra.mxu0 %v1917
    %2536 = vmatprep.subr.bf16.mxu0 %v1926
    %2537 = vmatpush1.bf16.msra.mxu0 %v1925
    %2538 = vmatprep.subr.bf16.mxu0 %v1934
    %2539 = vmatpush1.bf16.msra.mxu0 %v1933
    %2540 = vmatprep.subr.bf16.mxu0 %v1942
    %2541 = vmatpush1.bf16.msra.mxu0 %v1941
    %2542 = vmatprep.subr.bf16.mxu0 %v1950
    %2543 = vmatpush1.bf16.msra.mxu0 %v1949
    %2544 = vmatprep.subr.bf16.mxu0 %v1958
    %2545 = vmatpush1.bf16.msra.mxu0 %v1957
    %2546 = vmatprep.subr.bf16.mxu0 %v1966
    %2547 = vmatpush1.bf16.msra.mxu0 %v1965
    %2548 = vmatprep.subr.bf16.mxu0 %v1974
    %2549 = vmatpush1.bf16.msra.mxu0 %v1973
    %2550 = vmatprep.mubr.bf16.mxu0 %v652
    %2551 = vmatmul.mubr.bf16.gmra.mrb[0].mxu0 %v651
    %v2552 = vpop.f32.mrb[0].mxu0
    %v2553 = vadd.f32 %v2512, %v2552
    %v2554 = vpop.f32.mrb[0].mxu0
    %v2555 = vadd.f32 %v2514, %v2554
    %v2556 = vpop.f32.mrb[0].mxu0
    %v2557 = vpop.f32.mrb[0].mxu0
    %2558 = vdwg.mxu0
    %vm2559 = vcmp.gt.f32.partialorder %v2307, 0.0
    %vm2560 = vcmp.gt.f32.partialorder %v2309, 0.0
    %vm2561 = vcmp.gt.f32.partialorder %v2389, 0.0
    %vm2562 = vcmp.gt.f32.partialorder %v2391, 0.0
    %vm2563 = vcmp.gt.f32.partialorder %v2471, 0.0
    %vm2564 = vcmp.gt.f32.partialorder %v2473, 0.0
    %vm2565 = vcmp.gt.f32.partialorder %v2553, 0.0
    %vm2566 = vcmp.gt.f32.partialorder %v2555, 0.0
    %v2567 = vmul.f32 %v2307, 0.2
    %v2568 = vmul.f32 %v2309, 0.2
    %v2569 = vmul.f32 %v2389, 0.2
    %v2570 = vmul.f32 %v2391, 0.2
    %v2571 = vmul.f32 %v2471, 0.2
    %v2572 = vmul.f32 %v2473, 0.2
    %v2573 = vmul.f32 %v2553, 0.2
    %v2574 = vmul.f32 %v2555, 0.2
    %v2575 = vsel %vm2559, %v2307, %v2567
    %v2576 = vsel %vm2560, %v2309, %v2568
    %v2577 = vsel %vm2561, %v2389, %v2569
    %v2578 = vsel %vm2562, %v2391, %v2570
    %v2579 = vsel %vm2563, %v2471, %v2571
    %v2580 = vsel %vm2564, %v2473, %v2572
    %v2581 = vsel %vm2565, %v2553, %v2573
    %v2582 = vsel %vm2566, %v2555, %v2574
    %v2583 = vpack.c.bf16 %v2575, %v2575
    %v2584 = vpack.c.bf16 %v2576, %v2576
    %v2585 = vpack.c.bf16 %v2577, %v2577
    %v2586 = vpack.c.bf16 %v2578, %v2578
    %v2587 = vpack.c.bf16 %v2579, %v2579
    %v2588 = vpack.c.bf16 %v2580, %v2580
    %v2589 = vpack.c.bf16 %v2581, %v2581
    %v2590 = vpack.c.bf16 %v2582, %v2582
    %v2591 = vld [vmem:[%s7] sm:$0xff]
    %v2592 = vld [vmem:[%s7 + $0x8] sm:$0xff]
    %v2593 = vld [vmem:[%s7 + $0x10] sm:$0xff]
    %v2594 = vld [vmem:[%s7 + $0x18] sm:$0xf]
    %v2595 = vld [vmem:[%s7 + $0x1c] sm:$0xff]
    %v2596 = vld [vmem:[%s7 + $0x24] sm:$0xff]
    %v2597 = vld [vmem:[%s7 + $0x2c] sm:$0xff]
    %v2598 = vld [vmem:[%s7 + $0x34] sm:$0xf]
    %v2599 = vld [vmem:[%s7 + $0x38] sm:$0xff]
    %v2600 = vld [vmem:[%s7 + $0x40] sm:$0xff]
    %v2601 = vld [vmem:[%s7 + $0x48] sm:$0xff]
    %v2602 = vld [vmem:[%s7 + $0x50] sm:$0xf]
    %v2603 = vld [vmem:[%s7 + $0x54] sm:$0xff]
    %v2604 = vld [vmem:[%s7 + $0x5c] sm:$0xff]
    %v2605 = vld [vmem:[%s7 + $0x64] sm:$0xff]
    %v2606 = vld [vmem:[%s7 + $0x6c] sm:$0xf]
    %v2607 = vld [vmem:[%s7 + $0x70] sm:$0xff]
    %v2608 = vld [vmem:[%s7 + $0x78] sm:$0xff]
    %v2609 = vld [vmem:[%s7 + $0x80] sm:$0xff]
    %v2610 = vld [vmem:[%s7 + $0x88] sm:$0xf]
    %v2611 = vld [vmem:[%s7 + $0x8c] sm:$0xff]
    %v2612 = vld [vmem:[%s7 + $0x94] sm:$0xff]
    %v2613 = vld [vmem:[%s7 + $0x9c] sm:$0xff]
    %v2614 = vld [vmem:[%s7 + $0xa4] sm:$0xf]
    %v2615 = vld [vmem:[%s7 + $0xa8] sm:$0xff]
    %v2616 = vld [vmem:[%s7 + $0xb0] sm:$0xff]
    %v2617 = vld [vmem:[%s7 + $0xb8] sm:$0xff]
    %v2618 = vld [vmem:[%s7 + $0xc0] sm:$0xf]
    %v2619 = vld [vmem:[%s7 + $0xc4] sm:$0xff]
    %v2620 = vld [vmem:[%s7 + $0xcc] sm:$0xff]
    %v2621 = vld [vmem:[%s7 + $0xd4] sm:$0xff]
    %v2622 = vld [vmem:[%s7 + $0xdc] sm:$0xf]
    %v2623 = vld [vmem:[%s7 + $0xe0] sm:$0xff]
    %v2624 = vld [vmem:[%s7 + $0xe8] sm:$0xff]
    %v2625 = vld [vmem:[%s7 + $0xf0] sm:$0xff]
    %v2626 = vld [vmem:[%s7 + $0xf8] sm:$0xf]
    %v2627 = vld [vmem:[%s7 + $0xfc] sm:$0xff]
    %v2628 = vld [vmem:[%s7 + $0x104] sm:$0xff]
    %v2629 = vld [vmem:[%s7 + $0x10c] sm:$0xff]
    %v2630 = vld [vmem:[%s7 + $0x114] sm:$0xf]
    %v2631 = vld [vmem:[%s7 + $0x118] sm:$0xff]
    %v2632 = vld [vmem:[%s7 + $0x120] sm:$0xff]
    %v2633 = vld [vmem:[%s7 + $0x128] sm:$0xff]
    %v2634 = vld [vmem:[%s7 + $0x130] sm:$0xf]
    %v2635 = vld [vmem:[%s7 + $0x134] sm:$0xff]
    %v2636 = vld [vmem:[%s7 + $0x13c] sm:$0xff]
    %v2637 = vld [vmem:[%s7 + $0x144] sm:$0xff]
    %v2638 = vld [vmem:[%s7 + $0x14c] sm:$0xf]
    %v2639 = vld [vmem:[%s7 + $0x150] sm:$0xff]
    %v2640 = vld [vmem:[%s7 + $0x158] sm:$0xff]
    %v2641 = vld [vmem:[%s7 + $0x160] sm:$0xff]
    %v2642 = vld [vmem:[%s7 + $0x168] sm:$0xf]
    %v2643 = vld [vmem:[%s7 + $0x16c] sm:$0xff]
    %v2644 = vld [vmem:[%s7 + $0x174] sm:$0xff]
    %v2645 = vld [vmem:[%s7 + $0x17c] sm:$0xff]
    %v2646 = vld [vmem:[%s7 + $0x184] sm:$0xf]
    %v2647 = vld [vmem:[%s7 + $0x188] sm:$0xff]
    %v2648 = vld [vmem:[%s7 + $0x190] sm:$0xff]
    %v2649 = vld [vmem:[%s7 + $0x198] sm:$0xff]
    %v2650 = vld [vmem:[%s7 + $0x1a0] sm:$0xf]
    %v2651 = vld [vmem:[%s7 + $0x1a4] sm:$0xff]
    %v2652 = vld [vmem:[%s7 + $0x1ac] sm:$0xff]
    %v2653 = vld [vmem:[%s7 + $0x1b4] sm:$0xff]
    %v2654 = vld [vmem:[%s7 + $0x1bc] sm:$0xf]
    %v2655 = vld [vmem:[%s7 + $0x1c0] sm:$0xff]
    %v2656 = vld [vmem:[%s7 + $0x1c8] sm:$0xff]
    %v2657 = vld [vmem:[%s7 + $0x1d0] sm:$0xff]
    %v2658 = vld [vmem:[%s7 + $0x1d8] sm:$0xf]
    %v2659 = vld [vmem:[%s7 + $0x1dc] sm:$0xff]
    %v2660 = vld [vmem:[%s7 + $0x1e4] sm:$0xff]
    %v2661 = vld [vmem:[%s7 + $0x1ec] sm:$0xff]
    %v2662 = vld [vmem:[%s7 + $0x1f4] sm:$0xf]
    %v2663 = vld [vmem:[%s7 + $0x1f8] sm:$0xff]
    %v2664 = vld [vmem:[%s7 + $0x200] sm:$0xff]
    %v2665 = vld [vmem:[%s7 + $0x208] sm:$0xff]
    %v2666 = vld [vmem:[%s7 + $0x210] sm:$0xf]
    %v2667 = vld [vmem:[%s7 + $0x214] sm:$0xff]
    %v2668 = vld [vmem:[%s7 + $0x21c] sm:$0xff]
    %v2669 = vld [vmem:[%s7 + $0x224] sm:$0xff]
    %v2670 = vld [vmem:[%s7 + $0x22c] sm:$0xf]
    %v2671 = vld [vmem:[%s7 + $0x230] sm:$0xff]
    %v2672 = vld [vmem:[%s7 + $0x238] sm:$0xff]
    %v2673 = vld [vmem:[%s7 + $0x240] sm:$0xff]
    %v2674 = vld [vmem:[%s7 + $0x248] sm:$0xf]
    %v2675 = vld [vmem:[%s7 + $0x24c] sm:$0xff]
    %v2676 = vld [vmem:[%s7 + $0x254] sm:$0xff]
    %v2677 = vld [vmem:[%s7 + $0x25c] sm:$0xff]
    %v2678 = vld [vmem:[%s7 + $0x264] sm:$0xf]
    %v2679 = vld [vmem:[%s7 + $0x268] sm:$0xff]
    %v2680 = vld [vmem:[%s7 + $0x270] sm:$0xff]
    %v2681 = vld [vmem:[%s7 + $0x278] sm:$0xff]
    %v2682 = vld [vmem:[%s7 + $0x280] sm:$0xf]
    %v2683 = vld [vmem:[%s7 + $0x284] sm:$0xff]
    %v2684 = vld [vmem:[%s7 + $0x28c] sm:$0xff]
    %v2685 = vld [vmem:[%s7 + $0x294] sm:$0xff]
    %v2686 = vld [vmem:[%s7 + $0x29c] sm:$0xf]
    %v2687 = vld [vmem:[%s7 + $0x2a0] sm:$0xff]
    %v2688 = vld [vmem:[%s7 + $0x2a8] sm:$0xff]
    %v2689 = vld [vmem:[%s7 + $0x2b0] sm:$0xff]
    %v2690 = vld [vmem:[%s7 + $0x2b8] sm:$0xf]
    %v2691 = vld [vmem:[%s7 + $0x2bc] sm:$0xff]
    %v2692 = vld [vmem:[%s7 + $0x2c4] sm:$0xff]
    %v2693 = vld [vmem:[%s7 + $0x2cc] sm:$0xff]
    %v2694 = vld [vmem:[%s7 + $0x2d4] sm:$0xf]
    %v2695 = vld [vmem:[%s7 + $0x2d8] sm:$0xff]
    %v2696 = vld [vmem:[%s7 + $0x2e0] sm:$0xff]
    %v2697 = vld [vmem:[%s7 + $0x2e8] sm:$0xff]
    %v2698 = vld [vmem:[%s7 + $0x2f0] sm:$0xf]
    %v2699 = vld [vmem:[%s7 + $0x2f4] sm:$0xff]
    %v2700 = vld [vmem:[%s7 + $0x2fc] sm:$0xff]
    %v2701 = vld [vmem:[%s7 + $0x304] sm:$0xff]
    %v2702 = vld [vmem:[%s7 + $0x30c] sm:$0xf]
    %v2703 = vld [vmem:[%s7 + $0x310] sm:$0xff]
    %v2704 = vld [vmem:[%s7 + $0x318] sm:$0xff]
    %v2705 = vld [vmem:[%s7 + $0x320] sm:$0xff]
    %v2706 = vld [vmem:[%s7 + $0x328] sm:$0xf]
    %v2707 = vld [vmem:[%s7 + $0x32c] sm:$0xff]
    %v2708 = vld [vmem:[%s7 + $0x334] sm:$0xff]
    %v2709 = vld [vmem:[%s7 + $0x33c] sm:$0xff]
    %v2710 = vld [vmem:[%s7 + $0x344] sm:$0xf]
    %v2711 = vld [vmem:[%s7 + $0x348] sm:$0xff]
    %v2712 = vld [vmem:[%s7 + $0x350] sm:$0xff]
    %v2713 = vld [vmem:[%s7 + $0x358] sm:$0xff]
    %v2714 = vld [vmem:[%s7 + $0x360] sm:$0xf]
    %v2715 = vld [vmem:[%s7 + $0x364] sm:$0xff]
    %v2716 = vld [vmem:[%s7 + $0x36c] sm:$0xff]
    %v2717 = vld [vmem:[%s7 + $0x374] sm:$0xff]
    %v2718 = vld [vmem:[%s7 + $0x37c] sm:$0xf]
    %v2719 = vld [vmem:[%s7 + $0x380] sm:$0xff]
    %v2720 = vld [vmem:[%s7 + $0x388] sm:$0xff]
    %v2721 = vld [vmem:[%s7 + $0x390] sm:$0xff]
    %v2722 = vld [vmem:[%s7 + $0x398] sm:$0xf]
    %v2723 = vld [vmem:[%s7 + $0x39c] sm:$0xff]
    %v2724 = vld [vmem:[%s7 + $0x3a4] sm:$0xff]
    %v2725 = vld [vmem:[%s7 + $0x3ac] sm:$0xff]
    %v2726 = vld [vmem:[%s7 + $0x3b4] sm:$0xf]
    %v2727 = vld [vmem:[%s7 + $0x3b8] sm:$0xff]
    %v2728 = vld [vmem:[%s7 + $0x3c0] sm:$0xff]
    %v2729 = vld [vmem:[%s7 + $0x3c8] sm:$0xff]
    %v2730 = vld [vmem:[%s7 + $0x3d0] sm:$0xf]
    %v2731 = vld [vmem:[%s7 + $0x3d4] sm:$0xff]
    %v2732 = vld [vmem:[%s7 + $0x3dc] sm:$0xff]
    %v2733 = vld [vmem:[%s7 + $0x3e4] sm:$0xff]
    %v2734 = vld [vmem:[%s7 + $0x3ec] sm:$0xf]
    %v2735 = vld [vmem:[%s7 + $0x3f0] sm:$0xff]
    %v2736 = vld [vmem:[%s7 + $0x3f8] sm:$0xff]
    %v2737 = vld [vmem:[%s7 + $0x400] sm:$0xff]
    %v2738 = vld [vmem:[%s7 + $0x408] sm:$0xf]
    %v2739 = vld [vmem:[%s7 + $0x40c] sm:$0xff]
    %v2740 = vld [vmem:[%s7 + $0x414] sm:$0xff]
    %v2741 = vld [vmem:[%s7 + $0x41c] sm:$0xff]
    %v2742 = vld [vmem:[%s7 + $0x424] sm:$0xf]
    %v2743 = vld [vmem:[%s7 + $0x428] sm:$0xff]
    %v2744 = vld [vmem:[%s7 + $0x430] sm:$0xff]
    %v2745 = vld [vmem:[%s7 + $0x438] sm:$0xff]
    %v2746 = vld [vmem:[%s7 + $0x440] sm:$0xf]
    %v2747 = vld [vmem:[%s7 + $0x444] sm:$0xff]
    %v2748 = vld [vmem:[%s7 + $0x44c] sm:$0xff]
    %v2749 = vld [vmem:[%s7 + $0x454] sm:$0xff]
    %v2750 = vld [vmem:[%s7 + $0x45c] sm:$0xf]
    %v2751 = vld [vmem:[%s7 + $0x460] sm:$0xff]
    %v2752 = vld [vmem:[%s7 + $0x468] sm:$0xff]
    %v2753 = vld [vmem:[%s7 + $0x470] sm:$0xff]
    %v2754 = vld [vmem:[%s7 + $0x478] sm:$0xf]
    %v2755 = vld [vmem:[%s7 + $0x47c] sm:$0xff]
    %v2756 = vld [vmem:[%s7 + $0x484] sm:$0xff]
    %v2757 = vld [vmem:[%s7 + $0x48c] sm:$0xff]
    %v2758 = vld [vmem:[%s7 + $0x494] sm:$0xf]
    %v2759 = vld [vmem:[%s7 + $0x498] sm:$0xff]
    %v2760 = vld [vmem:[%s7 + $0x4a0] sm:$0xff]
    %v2761 = vld [vmem:[%s7 + $0x4a8] sm:$0xff]
    %v2762 = vld [vmem:[%s7 + $0x4b0] sm:$0xf]
    %v2763 = vld [vmem:[%s7 + $0x4b4] sm:$0xff]
    %v2764 = vld [vmem:[%s7 + $0x4bc] sm:$0xff]
    %v2765 = vld [vmem:[%s7 + $0x4c4] sm:$0xff]
    %v2766 = vld [vmem:[%s7 + $0x4cc] sm:$0xf]
    %v2767 = vld [vmem:[%s7 + $0x4d0] sm:$0xff]
    %v2768 = vld [vmem:[%s7 + $0x4d8] sm:$0xff]
    %v2769 = vld [vmem:[%s7 + $0x4e0] sm:$0xff]
    %v2770 = vld [vmem:[%s7 + $0x4e8] sm:$0xf]
    %v2771 = vld [vmem:[%s7 + $0x4ec] sm:$0xff]
    %v2772 = vld [vmem:[%s7 + $0x4f4] sm:$0xff]
    %v2773 = vld [vmem:[%s7 + $0x4fc] sm:$0xff]
    %v2774 = vld [vmem:[%s7 + $0x504] sm:$0xf]
    %v2775 = vld [vmem:[%s7 + $0x508] sm:$0xff]
    %v2776 = vld [vmem:[%s7 + $0x510] sm:$0xff]
    %v2777 = vld [vmem:[%s7 + $0x518] sm:$0xff]
    %v2778 = vld [vmem:[%s7 + $0x520] sm:$0xf]
    %v2779 = vld [vmem:[%s7 + $0x524] sm:$0xff]
    %v2780 = vld [vmem:[%s7 + $0x52c] sm:$0xff]
    %v2781 = vld [vmem:[%s7 + $0x534] sm:$0xff]
    %v2782 = vld [vmem:[%s7 + $0x53c] sm:$0xf]
    %v2783 = vld [vmem:[%s7 + $0x540] sm:$0xff]
    %v2784 = vld [vmem:[%s7 + $0x548] sm:$0xff]
    %v2785 = vld [vmem:[%s7 + $0x550] sm:$0xff]
    %v2786 = vld [vmem:[%s7 + $0x558] sm:$0xf]
    %v2787 = vld [vmem:[%s7 + $0x55c] sm:$0xff]
    %v2788 = vld [vmem:[%s7 + $0x564] sm:$0xff]
    %v2789 = vld [vmem:[%s7 + $0x56c] sm:$0xff]
    %v2790 = vld [vmem:[%s7 + $0x574] sm:$0xf]
    %v2791 = vld [vmem:[%s7 + $0x578] sm:$0xff]
    %v2792 = vld [vmem:[%s7 + $0x580] sm:$0xff]
    %v2793 = vld [vmem:[%s7 + $0x588] sm:$0xff]
    %v2794 = vld [vmem:[%s7 + $0x590] sm:$0xf]
    %v2795 = vld [vmem:[%s7 + $0x594] sm:$0xff]
    %v2796 = vld [vmem:[%s7 + $0x59c] sm:$0xff]
    %v2797 = vld [vmem:[%s7 + $0x5a4] sm:$0xff]
    %v2798 = vld [vmem:[%s7 + $0x5ac] sm:$0xf]
    %v2799 = vld [vmem:[%s7 + $0x5b0] sm:$0xff]
    %v2800 = vld [vmem:[%s7 + $0x5b8] sm:$0xff]
    %v2801 = vld [vmem:[%s7 + $0x5c0] sm:$0xff]
    %v2802 = vld [vmem:[%s7 + $0x5c8] sm:$0xf]
    %v2803 = vld [vmem:[%s7 + $0x5cc] sm:$0xff]
    %v2804 = vld [vmem:[%s7 + $0x5d4] sm:$0xff]
    %v2805 = vld [vmem:[%s7 + $0x5dc] sm:$0xff]
    %v2806 = vld [vmem:[%s7 + $0x5e4] sm:$0xf]
    %v2807 = vld [vmem:[%s7 + $0x5e8] sm:$0xff]
    %v2808 = vld [vmem:[%s7 + $0x5f0] sm:$0xff]
    %v2809 = vld [vmem:[%s7 + $0x5f8] sm:$0xff]
    %v2810 = vld [vmem:[%s7 + $0x600] sm:$0xf]
    %v2811 = vld [vmem:[%s7 + $0x604] sm:$0xff]
    %v2812 = vld [vmem:[%s7 + $0x60c] sm:$0xff]
    %v2813 = vld [vmem:[%s7 + $0x614] sm:$0xff]
    %v2814 = vld [vmem:[%s7 + $0x61c] sm:$0xf]
    %v2815 = vld [vmem:[%s7 + $0x620] sm:$0xff]
    %v2816 = vld [vmem:[%s7 + $0x628] sm:$0xff]
    %v2817 = vld [vmem:[%s7 + $0x630] sm:$0xff]
    %v2818 = vld [vmem:[%s7 + $0x638] sm:$0xf]
    %v2819 = vld [vmem:[%s7 + $0x63c] sm:$0xff]
    %v2820 = vld [vmem:[%s7 + $0x644] sm:$0xff]
    %v2821 = vld [vmem:[%s7 + $0x64c] sm:$0xff]
    %v2822 = vld [vmem:[%s7 + $0x654] sm:$0xf]
    %v2823 = vld [vmem:[%s7 + $0x658] sm:$0xff]
    %v2824 = vld [vmem:[%s7 + $0x660] sm:$0xff]
    %v2825 = vld [vmem:[%s7 + $0x668] sm:$0xff]
    %v2826 = vld [vmem:[%s7 + $0x670] sm:$0xf]
    %v2827 = vld [vmem:[%s7 + $0x674] sm:$0xff]
    %v2828 = vld [vmem:[%s7 + $0x67c] sm:$0xff]
    %v2829 = vld [vmem:[%s7 + $0x684] sm:$0xff]
    %v2830 = vld [vmem:[%s7 + $0x68c] sm:$0xf]
    %v2831 = vld [vmem:[%s7 + $0x690] sm:$0xff]
    %v2832 = vld [vmem:[%s7 + $0x698] sm:$0xff]
    %v2833 = vld [vmem:[%s7 + $0x6a0] sm:$0xff]
    %v2834 = vld [vmem:[%s7 + $0x6a8] sm:$0xf]
    %v2835 = vld [vmem:[%s7 + $0x6ac] sm:$0xff]
    %v2836 = vld [vmem:[%s7 + $0x6b4] sm:$0xff]
    %v2837 = vld [vmem:[%s7 + $0x6bc] sm:$0xff]
    %v2838 = vld [vmem:[%s7 + $0x6c4] sm:$0xf]
    %v2839 = vld [vmem:[%s7 + $0x6c8] sm:$0xff]
    %v2840 = vld [vmem:[%s7 + $0x6d0] sm:$0xff]
    %v2841 = vld [vmem:[%s7 + $0x6d8] sm:$0xff]
    %v2842 = vld [vmem:[%s7 + $0x6e0] sm:$0xf]
    %v2843 = vld [vmem:[%s7 + $0x6e4] sm:$0xff]
    %v2844 = vld [vmem:[%s7 + $0x6ec] sm:$0xff]
    %v2845 = vld [vmem:[%s7 + $0x6f4] sm:$0xff]
    %v2846 = vld [vmem:[%s7 + $0x6fc] sm:$0xf]
    %v2847 = vld [vmem:[%s7 + $0x700] sm:$0xff]
    %v2848 = vld [vmem:[%s7 + $0x708] sm:$0xff]
    %v2849 = vld [vmem:[%s7 + $0x710] sm:$0xff]
    %v2850 = vld [vmem:[%s7 + $0x718] sm:$0xf]
    %v2851 = vld [vmem:[%s7 + $0x71c] sm:$0xff]
    %v2852 = vld [vmem:[%s7 + $0x724] sm:$0xff]
    %v2853 = vld [vmem:[%s7 + $0x72c] sm:$0xff]
    %v2854 = vld [vmem:[%s7 + $0x734] sm:$0xf]
    %v2855 = vld [vmem:[%s7 + $0x738] sm:$0xff]
    %v2856 = vld [vmem:[%s7 + $0x740] sm:$0xff]
    %v2857 = vld [vmem:[%s7 + $0x748] sm:$0xff]
    %v2858 = vld [vmem:[%s7 + $0x750] sm:$0xf]
    %v2859 = vld [vmem:[%s7 + $0x754] sm:$0xff]
    %v2860 = vld [vmem:[%s7 + $0x75c] sm:$0xff]
    %v2861 = vld [vmem:[%s7 + $0x764] sm:$0xff]
    %v2862 = vld [vmem:[%s7 + $0x76c] sm:$0xf]
    %v2863 = vld [vmem:[%s7 + $0x770] sm:$0xff]
    %v2864 = vld [vmem:[%s7 + $0x778] sm:$0xff]
    %v2865 = vld [vmem:[%s7 + $0x780] sm:$0xff]
    %v2866 = vld [vmem:[%s7 + $0x788] sm:$0xf]
    %v2867 = vld [vmem:[%s7 + $0x78c] sm:$0xff]
    %v2868 = vld [vmem:[%s7 + $0x794] sm:$0xff]
    %v2869 = vld [vmem:[%s7 + $0x79c] sm:$0xff]
    %v2870 = vld [vmem:[%s7 + $0x7a4] sm:$0xf]
    %v2871 = vld [vmem:[%s7 + $0x7a8] sm:$0xff]
    %v2872 = vld [vmem:[%s7 + $0x7b0] sm:$0xff]
    %v2873 = vld [vmem:[%s7 + $0x7b8] sm:$0xff]
    %v2874 = vld [vmem:[%s7 + $0x7c0] sm:$0xf]
    %v2875 = vld [vmem:[%s7 + $0x7c4] sm:$0xff]
    %v2876 = vld [vmem:[%s7 + $0x7cc] sm:$0xff]
    %v2877 = vld [vmem:[%s7 + $0x7d4] sm:$0xff]
    %v2878 = vld [vmem:[%s7 + $0x7dc] sm:$0xf]
    %v2879 = vld [vmem:[%s7 + $0x7e0] sm:$0xff]
    %v2880 = vld [vmem:[%s7 + $0x7e8] sm:$0xff]
    %v2881 = vld [vmem:[%s7 + $0x7f0] sm:$0xff]
    %v2882 = vld [vmem:[%s7 + $0x7f8] sm:$0xf]
    %v2883 = vld [vmem:[%s7 + $0x7fc] sm:$0xff]
    %v2884 = vld [vmem:[%s7 + $0x804] sm:$0xff]
    %v2885 = vld [vmem:[%s7 + $0x80c] sm:$0xff]
    %v2886 = vld [vmem:[%s7 + $0x814] sm:$0xf]
    %v2887 = vld [vmem:[%s7 + $0x818] sm:$0xff]
    %v2888 = vld [vmem:[%s7 + $0x820] sm:$0xff]
    %v2889 = vld [vmem:[%s7 + $0x828] sm:$0xff]
    %v2890 = vld [vmem:[%s7 + $0x830] sm:$0xf]
    %v2891 = vld [vmem:[%s7 + $0x834] sm:$0xff]
    %v2892 = vld [vmem:[%s7 + $0x83c] sm:$0xff]
    %v2893 = vld [vmem:[%s7 + $0x844] sm:$0xff]
    %v2894 = vld [vmem:[%s7 + $0x84c] sm:$0xf]
    %v2895 = vld [vmem:[%s7 + $0x850] sm:$0xff]
    %v2896 = vld [vmem:[%s7 + $0x858] sm:$0xff]
    %v2897 = vld [vmem:[%s7 + $0x860] sm:$0xff]
    %v2898 = vld [vmem:[%s7 + $0x868] sm:$0xf]
    %v2899 = vld [vmem:[%s7 + $0x86c] sm:$0xff]
    %v2900 = vld [vmem:[%s7 + $0x874] sm:$0xff]
    %v2901 = vld [vmem:[%s7 + $0x87c] sm:$0xff]
    %v2902 = vld [vmem:[%s7 + $0x884] sm:$0xf]
    %v2903 = vld [vmem:[%s7 + $0x888] sm:$0xff]
    %v2904 = vld [vmem:[%s7 + $0x890] sm:$0xff]
    %v2905 = vld [vmem:[%s7 + $0x898] sm:$0xff]
    %v2906 = vld [vmem:[%s7 + $0x8a0] sm:$0xf]
    %v2907 = vld [vmem:[%s7 + $0x8a4] sm:$0xff]
    %v2908 = vld [vmem:[%s7 + $0x8ac] sm:$0xff]
    %v2909 = vld [vmem:[%s7 + $0x8b4] sm:$0xff]
    %v2910 = vld [vmem:[%s7 + $0x8bc] sm:$0xf]
    %v2911 = vld [vmem:[%s7 + $0x8c0] sm:$0xff]
    %v2912 = vld [vmem:[%s7 + $0x8c8] sm:$0xff]
    %v2913 = vld [vmem:[%s7 + $0x8d0] sm:$0xff]
    %v2914 = vld [vmem:[%s7 + $0x8d8] sm:$0xf]
    %v2915 = vld [vmem:[%s7 + $0x8dc] sm:$0xff]
    %v2916 = vld [vmem:[%s7 + $0x8e4] sm:$0xff]
    %v2917 = vld [vmem:[%s7 + $0x8ec] sm:$0xff]
    %v2918 = vld [vmem:[%s7 + $0x8f4] sm:$0xf]
    %v2919 = vld [vmem:[%s7 + $0x8f8] sm:$0xff]
    %v2920 = vld [vmem:[%s7 + $0x900] sm:$0xff]
    %v2921 = vld [vmem:[%s7 + $0x908] sm:$0xff]
    %v2922 = vld [vmem:[%s7 + $0x910] sm:$0xf]
    %v2923 = vld [vmem:[%s7 + $0x914] sm:$0xff]
    %v2924 = vld [vmem:[%s7 + $0x91c] sm:$0xff]
    %v2925 = vld [vmem:[%s7 + $0x924] sm:$0xff]
    %v2926 = vld [vmem:[%s7 + $0x92c] sm:$0xf]
    %v2927 = vld [vmem:[%s7 + $0x930] sm:$0xff]
    %v2928 = vld [vmem:[%s7 + $0x938] sm:$0xff]
    %v2929 = vld [vmem:[%s7 + $0x940] sm:$0xff]
    %v2930 = vld [vmem:[%s7 + $0x948] sm:$0xf]
    %v2931 = vld [vmem:[%s7 + $0x94c] sm:$0xff]
    %v2932 = vld [vmem:[%s7 + $0x954] sm:$0xff]
    %v2933 = vld [vmem:[%s7 + $0x95c] sm:$0xff]
    %v2934 = vld [vmem:[%s7 + $0x964] sm:$0xf]
    %v2935 = vld [vmem:[%s7 + $0x968] sm:$0xff]
    %v2936 = vld [vmem:[%s7 + $0x970] sm:$0xff]
    %v2937 = vld [vmem:[%s7 + $0x978] sm:$0xff]
    %v2938 = vld [vmem:[%s7 + $0x980] sm:$0xf]
    %v2939 = vld [vmem:[%s7 + $0x984] sm:$0xff]
    %v2940 = vld [vmem:[%s7 + $0x98c] sm:$0xff]
    %v2941 = vld [vmem:[%s7 + $0x994] sm:$0xff]
    %v2942 = vld [vmem:[%s7 + $0x99c] sm:$0xf]
    %v2943 = vld [vmem:[%s7 + $0x9a0] sm:$0xff]
    %v2944 = vld [vmem:[%s7 + $0x9a8] sm:$0xff]
    %v2945 = vld [vmem:[%s7 + $0x9b0] sm:$0xff]
    %v2946 = vld [vmem:[%s7 + $0x9b8] sm:$0xf]
    %v2947 = vld [vmem:[%s7 + $0x9bc] sm:$0xff]
    %v2948 = vld [vmem:[%s7 + $0x9c4] sm:$0xff]
    %v2949 = vld [vmem:[%s7 + $0x9cc] sm:$0xff]
    %v2950 = vld [vmem:[%s7 + $0x9d4] sm:$0xf]
    %v2951 = vld [vmem:[%s7 + $0x9d8] sm:$0xff]
    %v2952 = vld [vmem:[%s7 + $0x9e0] sm:$0xff]
    %v2953 = vld [vmem:[%s7 + $0x9e8] sm:$0xff]
    %v2954 = vld [vmem:[%s7 + $0x9f0] sm:$0xf]
    %v2955 = vld [vmem:[%s7 + $0x9f4] sm:$0xff]
    %v2956 = vld [vmem:[%s7 + $0x9fc] sm:$0xff]
    %v2957 = vld [vmem:[%s7 + $0xa04] sm:$0xff]
    %v2958 = vld [vmem:[%s7 + $0xa0c] sm:$0xf]
    %v2959 = vld [vmem:[%s7 + $0xa10] sm:$0xff]
    %v2960 = vld [vmem:[%s7 + $0xa18] sm:$0xff]
    %v2961 = vld [vmem:[%s7 + $0xa20] sm:$0xff]
    %v2962 = vld [vmem:[%s7 + $0xa28] sm:$0xf]
    %v2963 = vld [vmem:[%s7 + $0xa2c] sm:$0xff]
    %v2964 = vld [vmem:[%s7 + $0xa34] sm:$0xff]
    %v2965 = vld [vmem:[%s7 + $0xa3c] sm:$0xff]
    %v2966 = vld [vmem:[%s7 + $0xa44] sm:$0xf]
    %v2967 = vld [vmem:[%s7 + $0xa48] sm:$0xff]
    %v2968 = vld [vmem:[%s7 + $0xa50] sm:$0xff]
    %v2969 = vld [vmem:[%s7 + $0xa58] sm:$0xff]
    %v2970 = vld [vmem:[%s7 + $0xa60] sm:$0xf]
    %v2971 = vld [vmem:[%s7 + $0xa64] sm:$0xff]
    %v2972 = vld [vmem:[%s7 + $0xa6c] sm:$0xff]
    %v2973 = vld [vmem:[%s7 + $0xa74] sm:$0xff]
    %v2974 = vld [vmem:[%s7 + $0xa7c] sm:$0xf]
    %v2975 = vld [vmem:[%s7 + $0xa80] sm:$0xff]
    %v2976 = vld [vmem:[%s7 + $0xa88] sm:$0xff]
    %v2977 = vld [vmem:[%s7 + $0xa90] sm:$0xff]
    %v2978 = vld [vmem:[%s7 + $0xa98] sm:$0xf]
    %v2979 = vld [vmem:[%s7 + $0xa9c] sm:$0xff]
    %v2980 = vld [vmem:[%s7 + $0xaa4] sm:$0xff]
    %v2981 = vld [vmem:[%s7 + $0xaac] sm:$0xff]
    %v2982 = vld [vmem:[%s7 + $0xab4] sm:$0xf]
    %v2983 = vld [vmem:[%s7 + $0xab8] sm:$0xff]
    %v2984 = vld [vmem:[%s7 + $0xac0] sm:$0xff]
    %v2985 = vld [vmem:[%s7 + $0xac8] sm:$0xff]
    %v2986 = vld [vmem:[%s7 + $0xad0] sm:$0xf]
    %v2987 = vld [vmem:[%s7 + $0xad4] sm:$0xff]
    %v2988 = vld [vmem:[%s7 + $0xadc] sm:$0xff]
    %v2989 = vld [vmem:[%s7 + $0xae4] sm:$0xff]
    %v2990 = vld [vmem:[%s7 + $0xaec] sm:$0xf]
    %v2991 = vld [vmem:[%s7 + $0xaf0] sm:$0xff]
    %v2992 = vld [vmem:[%s7 + $0xaf8] sm:$0xff]
    %v2993 = vld [vmem:[%s7 + $0xb00] sm:$0xff]
    %v2994 = vld [vmem:[%s7 + $0xb08] sm:$0xf]
    %v2995 = vld [vmem:[%s7 + $0xb0c] sm:$0xff]
    %v2996 = vld [vmem:[%s7 + $0xb14] sm:$0xff]
    %v2997 = vld [vmem:[%s7 + $0xb1c] sm:$0xff]
    %v2998 = vld [vmem:[%s7 + $0xb24] sm:$0xf]
    %v2999 = vld [vmem:[%s7 + $0xb28] sm:$0xff]
    %v3000 = vld [vmem:[%s7 + $0xb30] sm:$0xff]
    %v3001 = vld [vmem:[%s7 + $0xb38] sm:$0xff]
    %v3002 = vld [vmem:[%s7 + $0xb40] sm:$0xf]
    %v3003 = vld [vmem:[%s7 + $0xb44] sm:$0xff]
    %v3004 = vld [vmem:[%s7 + $0xb4c] sm:$0xff]
    %v3005 = vld [vmem:[%s7 + $0xb54] sm:$0xff]
    %v3006 = vld [vmem:[%s7 + $0xb5c] sm:$0xf]
    %v3007 = vld [vmem:[%s7 + $0xb60] sm:$0xff]
    %v3008 = vld [vmem:[%s7 + $0xb68] sm:$0xff]
    %v3009 = vld [vmem:[%s7 + $0xb70] sm:$0xff]
    %v3010 = vld [vmem:[%s7 + $0xb78] sm:$0xf]
    %v3011 = vld [vmem:[%s7 + $0xb7c] sm:$0xff]
    %v3012 = vld [vmem:[%s7 + $0xb84] sm:$0xff]
    %v3013 = vld [vmem:[%s7 + $0xb8c] sm:$0xff]
    %v3014 = vld [vmem:[%s7 + $0xb94] sm:$0xf]
    %v3015 = vld [vmem:[%s7 + $0xb98] sm:$0xff]
    %v3016 = vld [vmem:[%s7 + $0xba0] sm:$0xff]
    %v3017 = vld [vmem:[%s7 + $0xba8] sm:$0xff]
    %v3018 = vld [vmem:[%s7 + $0xbb0] sm:$0xf]
    %v3019 = vld [vmem:[%s7 + $0xbb4] sm:$0xff]
    %v3020 = vld [vmem:[%s7 + $0xbbc] sm:$0xff]
    %v3021 = vld [vmem:[%s7 + $0xbc4] sm:$0xff]
    %v3022 = vld [vmem:[%s7 + $0xbcc] sm:$0xf]
    %v3023 = vld [vmem:[%s7 + $0xbd0] sm:$0xff]
    %v3024 = vld [vmem:[%s7 + $0xbd8] sm:$0xff]
    %v3025 = vld [vmem:[%s7 + $0xbe0] sm:$0xff]
    %v3026 = vld [vmem:[%s7 + $0xbe8] sm:$0xf]
    %v3027 = vld [vmem:[%s7 + $0xbec] sm:$0xff]
    %v3028 = vld [vmem:[%s7 + $0xbf4] sm:$0xff]
    %v3029 = vld [vmem:[%s7 + $0xbfc] sm:$0xff]
    %v3030 = vld [vmem:[%s7 + $0xc04] sm:$0xf]
    %v3031 = vld [vmem:[%s7 + $0xc08] sm:$0xff]
    %v3032 = vld [vmem:[%s7 + $0xc10] sm:$0xff]
    %v3033 = vld [vmem:[%s7 + $0xc18] sm:$0xff]
    %v3034 = vld [vmem:[%s7 + $0xc20] sm:$0xf]
    %v3035 = vld [vmem:[%s7 + $0xc24] sm:$0xff]
    %v3036 = vld [vmem:[%s7 + $0xc2c] sm:$0xff]
    %v3037 = vld [vmem:[%s7 + $0xc34] sm:$0xff]
    %v3038 = vld [vmem:[%s7 + $0xc3c] sm:$0xf]
    %v3039 = vld [vmem:[%s7 + $0xc40] sm:$0xff]
    %v3040 = vld [vmem:[%s7 + $0xc48] sm:$0xff]
    %v3041 = vld [vmem:[%s7 + $0xc50] sm:$0xff]
    %v3042 = vld [vmem:[%s7 + $0xc58] sm:$0xf]
    %v3043 = vld [vmem:[%s7 + $0xc5c] sm:$0xff]
    %v3044 = vld [vmem:[%s7 + $0xc64] sm:$0xff]
    %v3045 = vld [vmem:[%s7 + $0xc6c] sm:$0xff]
    %v3046 = vld [vmem:[%s7 + $0xc74] sm:$0xf]
    %v3047 = vld [vmem:[%s7 + $0xc78] sm:$0xff]
    %v3048 = vld [vmem:[%s7 + $0xc80] sm:$0xff]
    %v3049 = vld [vmem:[%s7 + $0xc88] sm:$0xff]
    %v3050 = vld [vmem:[%s7 + $0xc90] sm:$0xf]
    %v3051 = vld [vmem:[%s7 + $0xc94] sm:$0xff]
    %v3052 = vld [vmem:[%s7 + $0xc9c] sm:$0xff]
    %v3053 = vld [vmem:[%s7 + $0xca4] sm:$0xff]
    %v3054 = vld [vmem:[%s7 + $0xcac] sm:$0xf]
    %v3055 = vld [vmem:[%s7 + $0xcb0] sm:$0xff]
    %v3056 = vld [vmem:[%s7 + $0xcb8] sm:$0xff]
    %v3057 = vld [vmem:[%s7 + $0xcc0] sm:$0xff]
    %v3058 = vld [vmem:[%s7 + $0xcc8] sm:$0xf]
    %v3059 = vld [vmem:[%s7 + $0xccc] sm:$0xff]
    %v3060 = vld [vmem:[%s7 + $0xcd4] sm:$0xff]
    %v3061 = vld [vmem:[%s7 + $0xcdc] sm:$0xff]
    %v3062 = vld [vmem:[%s7 + $0xce4] sm:$0xf]
    %v3063 = vld [vmem:[%s7 + $0xce8] sm:$0xff]
    %v3064 = vld [vmem:[%s7 + $0xcf0] sm:$0xff]
    %v3065 = vld [vmem:[%s7 + $0xcf8] sm:$0xff]
    %v3066 = vld [vmem:[%s7 + $0xd00] sm:$0xf]
    %v3067 = vld [vmem:[%s7 + $0xd04] sm:$0xff]
    %v3068 = vld [vmem:[%s7 + $0xd0c] sm:$0xff]
    %v3069 = vld [vmem:[%s7 + $0xd14] sm:$0xff]
    %v3070 = vld [vmem:[%s7 + $0xd1c] sm:$0xf]
    %v3071 = vld [vmem:[%s7 + $0xd20] sm:$0xff]
    %v3072 = vld [vmem:[%s7 + $0xd28] sm:$0xff]
    %v3073 = vld [vmem:[%s7 + $0xd30] sm:$0xff]
    %v3074 = vld [vmem:[%s7 + $0xd38] sm:$0xf]
    %v3075 = vld [vmem:[%s7 + $0xd3c] sm:$0xff]
    %v3076 = vld [vmem:[%s7 + $0xd44] sm:$0xff]
    %v3077 = vld [vmem:[%s7 + $0xd4c] sm:$0xff]
    %v3078 = vld [vmem:[%s7 + $0xd54] sm:$0xf]
    %v3079 = vld [vmem:[%s7 + $0xd58] sm:$0xff]
    %v3080 = vld [vmem:[%s7 + $0xd60] sm:$0xff]
    %v3081 = vld [vmem:[%s7 + $0xd68] sm:$0xff]
    %v3082 = vld [vmem:[%s7 + $0xd70] sm:$0xf]
    %v3083 = vld [vmem:[%s7 + $0xd74] sm:$0xff]
    %v3084 = vld [vmem:[%s7 + $0xd7c] sm:$0xff]
    %v3085 = vld [vmem:[%s7 + $0xd84] sm:$0xff]
    %v3086 = vld [vmem:[%s7 + $0xd8c] sm:$0xf]
    %v3087 = vld [vmem:[%s7 + $0xd90] sm:$0xff]
    %v3088 = vld [vmem:[%s7 + $0xd98] sm:$0xff]
    %v3089 = vld [vmem:[%s7 + $0xda0] sm:$0xff]
    %v3090 = vld [vmem:[%s7 + $0xda8] sm:$0xf]
    %v3091 = vld [vmem:[%s7 + $0xdac] sm:$0xff]
    %v3092 = vld [vmem:[%s7 + $0xdb4] sm:$0xff]
    %v3093 = vld [vmem:[%s7 + $0xdbc] sm:$0xff]
    %v3094 = vld [vmem:[%s7 + $0xdc4] sm:$0xf]
    %v3095 = vld [vmem:[%s7 + $0xdc8] sm:$0xff]
    %v3096 = vld [vmem:[%s7 + $0xdd0] sm:$0xff]
    %v3097 = vld [vmem:[%s7 + $0xdd8] sm:$0xff]
    %v3098 = vld [vmem:[%s7 + $0xde0] sm:$0xf]
    %v3099 = vld [vmem:[%s7 + $0xde4] sm:$0xff]
    %v3100 = vld [vmem:[%s7 + $0xdec] sm:$0xff]
    %v3101 = vld [vmem:[%s7 + $0xdf4] sm:$0xff]
    %v3102 = vld [vmem:[%s7 + $0xdfc] sm:$0xf]
    %v3103 = vld [vmem:[%s8] sm:$0x7f]
    %v3105 = vlaneseq
    %v3106 = vshrl.u32 %v3105, 7
    %v3107 = vsub.s32 0, %v3106
    %v3108 = vrot.slane %v3103, %v3107
    %v3109 = vlaneseq
    %v3110 = vshrl.u32 %v3109, 7
    %v3111 = vsub.s32 1, %v3110
    %v3112 = vrot.slane %v3103, %v3111
    %v3113 = vlaneseq
    %v3114 = vshrl.u32 %v3113, 7
    %v3115 = vsub.s32 2, %v3114
    %v3116 = vrot.slane %v3103, %v3115
    %v3117 = vlaneseq
    %v3118 = vshrl.u32 %v3117, 7
    %v3119 = vsub.s32 3, %v3118
    %v3120 = vrot.slane %v3103, %v3119
    %v3121 = vlaneseq
    %v3122 = vshrl.u32 %v3121, 7
    %v3123 = vsub.s32 4, %v3122
    %v3124 = vrot.slane %v3103, %v3123
    %v3125 = vlaneseq
    %v3126 = vshrl.u32 %v3125, 7
    %v3127 = vsub.s32 5, %v3126
    %v3128 = vrot.slane %v3103, %v3127
    %v3129 = vlaneseq
    %v3130 = vshrl.u32 %v3129, 7
    %v3131 = vsub.s32 6, %v3130
    %v3132 = vrot.slane %v3103, %v3131
    %v3652 = vunpack.c.l.b16 %v2591
    %v3653 = vunpack.c.h.b16 %v2591
    %v3654 = vunpack.c.l.b16 %v2592
    %v3655 = vunpack.c.h.b16 %v2592
    %v3656 = vunpack.c.l.b16 %v2593
    %v3657 = vunpack.c.h.b16 %v2593
    %v3658 = vunpack.c.l.b16 %v2594
    %v3659 = vunpack.c.l.b16 %v2595
    %v3660 = vunpack.c.h.b16 %v2595
    %v3661 = vunpack.c.l.b16 %v2596
    %v3662 = vunpack.c.h.b16 %v2596
    %v3663 = vunpack.c.l.b16 %v2597
    %v3664 = vunpack.c.h.b16 %v2597
    %v3665 = vunpack.c.l.b16 %v2598
    %v3666 = vunpack.c.l.b16 %v2599
    %v3667 = vunpack.c.h.b16 %v2599
    %v3668 = vunpack.c.l.b16 %v2600
    %v3669 = vunpack.c.h.b16 %v2600
    %v3670 = vunpack.c.l.b16 %v2601
    %v3671 = vunpack.c.h.b16 %v2601
    %v3672 = vunpack.c.l.b16 %v2602
    %v3673 = vunpack.c.l.b16 %v2603
    %v3674 = vunpack.c.h.b16 %v2603
    %v3675 = vunpack.c.l.b16 %v2604
    %v3676 = vunpack.c.h.b16 %v2604
    %v3677 = vunpack.c.l.b16 %v2605
    %v3678 = vunpack.c.h.b16 %v2605
    %v3679 = vunpack.c.l.b16 %v2606
    %v3680 = vunpack.c.l.b16 %v2607
    %v3681 = vunpack.c.h.b16 %v2607
    %v3682 = vunpack.c.l.b16 %v2608
    %v3683 = vunpack.c.h.b16 %v2608
    %v3684 = vunpack.c.l.b16 %v2609
    %v3685 = vunpack.c.h.b16 %v2609
    %v3686 = vunpack.c.l.b16 %v2610
    %v3687 = vunpack.c.l.b16 %v2611
    %v3688 = vunpack.c.h.b16 %v2611
    %v3689 = vunpack.c.l.b16 %v2612
    %v3690 = vunpack.c.h.b16 %v2612
    %v3691 = vunpack.c.l.b16 %v2613
    %v3692 = vunpack.c.h.b16 %v2613
    %v3693 = vunpack.c.l.b16 %v2614
    %v3694 = vunpack.c.l.b16 %v2615
    %v3695 = vunpack.c.h.b16 %v2615
    %v3696 = vunpack.c.l.b16 %v2616
    %v3697 = vunpack.c.h.b16 %v2616
    %v3698 = vunpack.c.l.b16 %v2617
    %v3699 = vunpack.c.h.b16 %v2617
    %v3700 = vunpack.c.l.b16 %v2618
    %v3701 = vunpack.c.l.b16 %v2619
    %v3702 = vunpack.c.h.b16 %v2619
    %v3703 = vunpack.c.l.b16 %v2620
    %v3704 = vunpack.c.h.b16 %v2620
    %v3705 = vunpack.c.l.b16 %v2621
    %v3706 = vunpack.c.h.b16 %v2621
    %v3707 = vunpack.c.l.b16 %v2622
    %v3708 = vunpack.c.l.b16 %v2623
    %v3709 = vunpack.c.h.b16 %v2623
    %v3710 = vunpack.c.l.b16 %v2624
    %v3711 = vunpack.c.h.b16 %v2624
    %v3712 = vunpack.c.l.b16 %v2625
    %v3713 = vunpack.c.h.b16 %v2625
    %v3714 = vunpack.c.l.b16 %v2626
    %v3715 = vunpack.c.l.b16 %v2627
    %v3716 = vunpack.c.h.b16 %v2627
    %v3717 = vunpack.c.l.b16 %v2628
    %v3718 = vunpack.c.h.b16 %v2628
    %v3719 = vunpack.c.l.b16 %v2629
    %v3720 = vunpack.c.h.b16 %v2629
    %v3721 = vunpack.c.l.b16 %v2630
    %v3722 = vunpack.c.l.b16 %v2631
    %v3723 = vunpack.c.h.b16 %v2631
    %v3724 = vunpack.c.l.b16 %v2632
    %v3725 = vunpack.c.h.b16 %v2632
    %v3726 = vunpack.c.l.b16 %v2633
    %v3727 = vunpack.c.h.b16 %v2633
    %v3728 = vunpack.c.l.b16 %v2634
    %v3729 = vunpack.c.l.b16 %v2635
    %v3730 = vunpack.c.h.b16 %v2635
    %v3731 = vunpack.c.l.b16 %v2636
    %v3732 = vunpack.c.h.b16 %v2636
    %v3733 = vunpack.c.l.b16 %v2637
    %v3734 = vunpack.c.h.b16 %v2637
    %v3735 = vunpack.c.l.b16 %v2638
    %v3736 = vunpack.c.l.b16 %v2639
    %v3737 = vunpack.c.h.b16 %v2639
    %v3738 = vunpack.c.l.b16 %v2640
    %v3739 = vunpack.c.h.b16 %v2640
    %v3740 = vunpack.c.l.b16 %v2641
    %v3741 = vunpack.c.h.b16 %v2641
    %v3742 = vunpack.c.l.b16 %v2642
    %v3743 = vunpack.c.l.b16 %v2643
    %v3744 = vunpack.c.h.b16 %v2643
    %v3745 = vunpack.c.l.b16 %v2644
    %v3746 = vunpack.c.h.b16 %v2644
    %v3747 = vunpack.c.l.b16 %v2645
    %v3748 = vunpack.c.h.b16 %v2645
    %v3749 = vunpack.c.l.b16 %v2646
    %v3750 = vunpack.c.l.b16 %v2647
    %v3751 = vunpack.c.h.b16 %v2647
    %v3752 = vunpack.c.l.b16 %v2648
    %v3753 = vunpack.c.h.b16 %v2648
    %v3754 = vunpack.c.l.b16 %v2649
    %v3755 = vunpack.c.h.b16 %v2649
    %v3756 = vunpack.c.l.b16 %v2650
    %v3757 = vunpack.c.l.b16 %v2651
    %v3758 = vunpack.c.h.b16 %v2651
    %v3759 = vunpack.c.l.b16 %v2652
    %v3760 = vunpack.c.h.b16 %v2652
    %v3761 = vunpack.c.l.b16 %v2653
    %v3762 = vunpack.c.h.b16 %v2653
    %v3763 = vunpack.c.l.b16 %v2654
    %v3764 = vunpack.c.l.b16 %v2655
    %v3765 = vunpack.c.h.b16 %v2655
    %v3766 = vunpack.c.l.b16 %v2656
    %v3767 = vunpack.c.h.b16 %v2656
    %v3768 = vunpack.c.l.b16 %v2657
    %v3769 = vunpack.c.h.b16 %v2657
    %v3770 = vunpack.c.l.b16 %v2658
    %v3771 = vunpack.c.l.b16 %v2659
    %v3772 = vunpack.c.h.b16 %v2659
    %v3773 = vunpack.c.l.b16 %v2660
    %v3774 = vunpack.c.h.b16 %v2660
    %v3775 = vunpack.c.l.b16 %v2661
    %v3776 = vunpack.c.h.b16 %v2661
    %v3777 = vunpack.c.l.b16 %v2662
    %v3778 = vunpack.c.l.b16 %v2663
    %v3779 = vunpack.c.h.b16 %v2663
    %v3780 = vunpack.c.l.b16 %v2664
    %v3781 = vunpack.c.h.b16 %v2664
    %v3782 = vunpack.c.l.b16 %v2665
    %v3783 = vunpack.c.h.b16 %v2665
    %v3784 = vunpack.c.l.b16 %v2666
    %v3785 = vunpack.c.l.b16 %v2667
    %v3786 = vunpack.c.h.b16 %v2667
    %v3787 = vunpack.c.l.b16 %v2668
    %v3788 = vunpack.c.h.b16 %v2668
    %v3789 = vunpack.c.l.b16 %v2669
    %v3790 = vunpack.c.h.b16 %v2669
    %v3791 = vunpack.c.l.b16 %v2670
    %v3792 = vunpack.c.l.b16 %v2671
    %v3793 = vunpack.c.h.b16 %v2671
    %v3794 = vunpack.c.l.b16 %v2672
    %v3795 = vunpack.c.h.b16 %v2672
    %v3796 = vunpack.c.l.b16 %v2673
    %v3797 = vunpack.c.h.b16 %v2673
    %v3798 = vunpack.c.l.b16 %v2674
    %v3799 = vunpack.c.l.b16 %v2675
    %v3800 = vunpack.c.h.b16 %v2675
    %v3801 = vunpack.c.l.b16 %v2676
    %v3802 = vunpack.c.h.b16 %v2676
    %v3803 = vunpack.c.l.b16 %v2677
    %v3804 = vunpack.c.h.b16 %v2677
    %v3805 = vunpack.c.l.b16 %v2678
    %v3806 = vunpack.c.l.b16 %v2679
    %v3807 = vunpack.c.h.b16 %v2679
    %v3808 = vunpack.c.l.b16 %v2680
    %v3809 = vunpack.c.h.b16 %v2680
    %v3810 = vunpack.c.l.b16 %v2681
    %v3811 = vunpack.c.h.b16 %v2681
    %v3812 = vunpack.c.l.b16 %v2682
    %v3813 = vunpack.c.l.b16 %v2683
    %v3814 = vunpack.c.h.b16 %v2683
    %v3815 = vunpack.c.l.b16 %v2684
    %v3816 = vunpack.c.h.b16 %v2684
    %v3817 = vunpack.c.l.b16 %v2685
    %v3818 = vunpack.c.h.b16 %v2685
    %v3819 = vunpack.c.l.b16 %v2686
    %v3820 = vunpack.c.l.b16 %v2687
    %v3821 = vunpack.c.h.b16 %v2687
    %v3822 = vunpack.c.l.b16 %v2688
    %v3823 = vunpack.c.h.b16 %v2688
    %v3824 = vunpack.c.l.b16 %v2689
    %v3825 = vunpack.c.h.b16 %v2689
    %v3826 = vunpack.c.l.b16 %v2690
    %v3827 = vunpack.c.l.b16 %v2691
    %v3828 = vunpack.c.h.b16 %v2691
    %v3829 = vunpack.c.l.b16 %v2692
    %v3830 = vunpack.c.h.b16 %v2692
    %v3831 = vunpack.c.l.b16 %v2693
    %v3832 = vunpack.c.h.b16 %v2693
    %v3833 = vunpack.c.l.b16 %v2694
    %v3834 = vunpack.c.l.b16 %v2695
    %v3835 = vunpack.c.h.b16 %v2695
    %v3836 = vunpack.c.l.b16 %v2696
    %v3837 = vunpack.c.h.b16 %v2696
    %v3838 = vunpack.c.l.b16 %v2697
    %v3839 = vunpack.c.h.b16 %v2697
    %v3840 = vunpack.c.l.b16 %v2698
    %v3841 = vunpack.c.l.b16 %v2699
    %v3842 = vunpack.c.h.b16 %v2699
    %v3843 = vunpack.c.l.b16 %v2700
    %v3844 = vunpack.c.h.b16 %v2700
    %v3845 = vunpack.c.l.b16 %v2701
    %v3846 = vunpack.c.h.b16 %v2701
    %v3847 = vunpack.c.l.b16 %v2702
    %v3848 = vunpack.c.l.b16 %v2703
    %v3849 = vunpack.c.h.b16 %v2703
    %v3850 = vunpack.c.l.b16 %v2704
    %v3851 = vunpack.c.h.b16 %v2704
    %v3852 = vunpack.c.l.b16 %v2705
    %v3853 = vunpack.c.h.b16 %v2705
    %v3854 = vunpack.c.l.b16 %v2706
    %v3855 = vunpack.c.l.b16 %v2707
    %v3856 = vunpack.c.h.b16 %v2707
    %v3857 = vunpack.c.l.b16 %v2708
    %v3858 = vunpack.c.h.b16 %v2708
    %v3859 = vunpack.c.l.b16 %v2709
    %v3860 = vunpack.c.h.b16 %v2709
    %v3861 = vunpack.c.l.b16 %v2710
    %v3862 = vunpack.c.l.b16 %v2711
    %v3863 = vunpack.c.h.b16 %v2711
    %v3864 = vunpack.c.l.b16 %v2712
    %v3865 = vunpack.c.h.b16 %v2712
    %v3866 = vunpack.c.l.b16 %v2713
    %v3867 = vunpack.c.h.b16 %v2713
    %v3868 = vunpack.c.l.b16 %v2714
    %v3869 = vunpack.c.l.b16 %v2715
    %v3870 = vunpack.c.h.b16 %v2715
    %v3871 = vunpack.c.l.b16 %v2716
    %v3872 = vunpack.c.h.b16 %v2716
    %v3873 = vunpack.c.l.b16 %v2717
    %v3874 = vunpack.c.h.b16 %v2717
    %v3875 = vunpack.c.l.b16 %v2718
    %v3876 = vunpack.c.l.b16 %v2719
    %v3877 = vunpack.c.h.b16 %v2719
    %v3878 = vunpack.c.l.b16 %v2720
    %v3879 = vunpack.c.h.b16 %v2720
    %v3880 = vunpack.c.l.b16 %v2721
    %v3881 = vunpack.c.h.b16 %v2721
    %v3882 = vunpack.c.l.b16 %v2722
    %v3883 = vunpack.c.l.b16 %v2723
    %v3884 = vunpack.c.h.b16 %v2723
    %v3885 = vunpack.c.l.b16 %v2724
    %v3886 = vunpack.c.h.b16 %v2724
    %v3887 = vunpack.c.l.b16 %v2725
    %v3888 = vunpack.c.h.b16 %v2725
    %v3889 = vunpack.c.l.b16 %v2726
    %v3890 = vunpack.c.l.b16 %v2727
    %v3891 = vunpack.c.h.b16 %v2727
    %v3892 = vunpack.c.l.b16 %v2728
    %v3893 = vunpack.c.h.b16 %v2728
    %v3894 = vunpack.c.l.b16 %v2729
    %v3895 = vunpack.c.h.b16 %v2729
    %v3896 = vunpack.c.l.b16 %v2730
    %v3897 = vunpack.c.l.b16 %v2731
    %v3898 = vunpack.c.h.b16 %v2731
    %v3899 = vunpack.c.l.b16 %v2732
    %v3900 = vunpack.c.h.b16 %v2732
    %v3901 = vunpack.c.l.b16 %v2733
    %v3902 = vunpack.c.h.b16 %v2733
    %v3903 = vunpack.c.l.b16 %v2734
    %v3904 = vunpack.c.l.b16 %v2735
    %v3905 = vunpack.c.h.b16 %v2735
    %v3906 = vunpack.c.l.b16 %v2736
    %v3907 = vunpack.c.h.b16 %v2736
    %v3908 = vunpack.c.l.b16 %v2737
    %v3909 = vunpack.c.h.b16 %v2737
    %v3910 = vunpack.c.l.b16 %v2738
    %v3911 = vunpack.c.l.b16 %v2739
    %v3912 = vunpack.c.h.b16 %v2739
    %v3913 = vunpack.c.l.b16 %v2740
    %v3914 = vunpack.c.h.b16 %v2740
    %v3915 = vunpack.c.l.b16 %v2741
    %v3916 = vunpack.c.h.b16 %v2741
    %v3917 = vunpack.c.l.b16 %v2742
    %v3918 = vunpack.c.l.b16 %v2743
    %v3919 = vunpack.c.h.b16 %v2743
    %v3920 = vunpack.c.l.b16 %v2744
    %v3921 = vunpack.c.h.b16 %v2744
    %v3922 = vunpack.c.l.b16 %v2745
    %v3923 = vunpack.c.h.b16 %v2745
    %v3924 = vunpack.c.l.b16 %v2746
    %v3925 = vunpack.c.l.b16 %v2747
    %v3926 = vunpack.c.h.b16 %v2747
    %v3927 = vunpack.c.l.b16 %v2748
    %v3928 = vunpack.c.h.b16 %v2748
    %v3929 = vunpack.c.l.b16 %v2749
    %v3930 = vunpack.c.h.b16 %v2749
    %v3931 = vunpack.c.l.b16 %v2750
    %v3932 = vunpack.c.l.b16 %v2751
    %v3933 = vunpack.c.h.b16 %v2751
    %v3934 = vunpack.c.l.b16 %v2752
    %v3935 = vunpack.c.h.b16 %v2752
    %v3936 = vunpack.c.l.b16 %v2753
    %v3937 = vunpack.c.h.b16 %v2753
    %v3938 = vunpack.c.l.b16 %v2754
    %v3939 = vunpack.c.l.b16 %v2755
    %v3940 = vunpack.c.h.b16 %v2755
    %v3941 = vunpack.c.l.b16 %v2756
    %v3942 = vunpack.c.h.b16 %v2756
    %v3943 = vunpack.c.l.b16 %v2757
    %v3944 = vunpack.c.h.b16 %v2757
    %v3945 = vunpack.c.l.b16 %v2758
    %v3946 = vunpack.c.l.b16 %v2759
    %v3947 = vunpack.c.h.b16 %v2759
    %v3948 = vunpack.c.l.b16 %v2760
    %v3949 = vunpack.c.h.b16 %v2760
    %v3950 = vunpack.c.l.b16 %v2761
    %v3951 = vunpack.c.h.b16 %v2761
    %v3952 = vunpack.c.l.b16 %v2762
    %v3953 = vunpack.c.l.b16 %v2763
    %v3954 = vunpack.c.h.b16 %v2763
    %v3955 = vunpack.c.l.b16 %v2764
    %v3956 = vunpack.c.h.b16 %v2764
    %v3957 = vunpack.c.l.b16 %v2765
    %v3958 = vunpack.c.h.b16 %v2765
    %v3959 = vunpack.c.l.b16 %v2766
    %v3960 = vunpack.c.l.b16 %v2767
    %v3961 = vunpack.c.h.b16 %v2767
    %v3962 = vunpack.c.l.b16 %v2768
    %v3963 = vunpack.c.h.b16 %v2768
    %v3964 = vunpack.c.l.b16 %v2769
    %v3965 = vunpack.c.h.b16 %v2769
    %v3966 = vunpack.c.l.b16 %v2770
    %v3967 = vunpack.c.l.b16 %v2771
    %v3968 = vunpack.c.h.b16 %v2771
    %v3969 = vunpack.c.l.b16 %v2772
    %v3970 = vunpack.c.h.b16 %v2772
    %v3971 = vunpack.c.l.b16 %v2773
    %v3972 = vunpack.c.h.b16 %v2773
    %v3973 = vunpack.c.l.b16 %v2774
    %v3974 = vunpack.c.l.b16 %v2775
    %v3975 = vunpack.c.h.b16 %v2775
    %v3976 = vunpack.c.l.b16 %v2776
    %v3977 = vunpack.c.h.b16 %v2776
    %v3978 = vunpack.c.l.b16 %v2777
    %v3979 = vunpack.c.h.b16 %v2777
    %v3980 = vunpack.c.l.b16 %v2778
    %v3981 = vunpack.c.l.b16 %v2779
    %v3982 = vunpack.c.h.b16 %v2779
    %v3983 = vunpack.c.l.b16 %v2780
    %v3984 = vunpack.c.h.b16 %v2780
    %v3985 = vunpack.c.l.b16 %v2781
    %v3986 = vunpack.c.h.b16 %v2781
    %v3987 = vunpack.c.l.b16 %v2782
    %v3988 = vunpack.c.l.b16 %v2783
    %v3989 = vunpack.c.h.b16 %v2783
    %v3990 = vunpack.c.l.b16 %v2784
    %v3991 = vunpack.c.h.b16 %v2784
    %v3992 = vunpack.c.l.b16 %v2785
    %v3993 = vunpack.c.h.b16 %v2785
    %v3994 = vunpack.c.l.b16 %v2786
    %v3995 = vunpack.c.l.b16 %v2787
    %v3996 = vunpack.c.h.b16 %v2787
    %v3997 = vunpack.c.l.b16 %v2788
    %v3998 = vunpack.c.h.b16 %v2788
    %v3999 = vunpack.c.l.b16 %v2789
    %v4000 = vunpack.c.h.b16 %v2789
    %v4001 = vunpack.c.l.b16 %v2790
    %v4002 = vunpack.c.l.b16 %v2791
    %v4003 = vunpack.c.h.b16 %v2791
    %v4004 = vunpack.c.l.b16 %v2792
    %v4005 = vunpack.c.h.b16 %v2792
    %v4006 = vunpack.c.l.b16 %v2793
    %v4007 = vunpack.c.h.b16 %v2793
    %v4008 = vunpack.c.l.b16 %v2794
    %v4009 = vunpack.c.l.b16 %v2795
    %v4010 = vunpack.c.h.b16 %v2795
    %v4011 = vunpack.c.l.b16 %v2796
    %v4012 = vunpack.c.h.b16 %v2796
    %v4013 = vunpack.c.l.b16 %v2797
    %v4014 = vunpack.c.h.b16 %v2797
    %v4015 = vunpack.c.l.b16 %v2798
    %v4016 = vunpack.c.l.b16 %v2799
    %v4017 = vunpack.c.h.b16 %v2799
    %v4018 = vunpack.c.l.b16 %v2800
    %v4019 = vunpack.c.h.b16 %v2800
    %v4020 = vunpack.c.l.b16 %v2801
    %v4021 = vunpack.c.h.b16 %v2801
    %v4022 = vunpack.c.l.b16 %v2802
    %v4023 = vunpack.c.l.b16 %v2803
    %v4024 = vunpack.c.h.b16 %v2803
    %v4025 = vunpack.c.l.b16 %v2804
    %v4026 = vunpack.c.h.b16 %v2804
    %v4027 = vunpack.c.l.b16 %v2805
    %v4028 = vunpack.c.h.b16 %v2805
    %v4029 = vunpack.c.l.b16 %v2806
    %v4030 = vunpack.c.l.b16 %v2807
    %v4031 = vunpack.c.h.b16 %v2807
    %v4032 = vunpack.c.l.b16 %v2808
    %v4033 = vunpack.c.h.b16 %v2808
    %v4034 = vunpack.c.l.b16 %v2809
    %v4035 = vunpack.c.h.b16 %v2809
    %v4036 = vunpack.c.l.b16 %v2810
    %v4037 = vunpack.c.l.b16 %v2811
    %v4038 = vunpack.c.h.b16 %v2811
    %v4039 = vunpack.c.l.b16 %v2812
    %v4040 = vunpack.c.h.b16 %v2812
    %v4041 = vunpack.c.l.b16 %v2813
    %v4042 = vunpack.c.h.b16 %v2813
    %v4043 = vunpack.c.l.b16 %v2814
    %v4044 = vunpack.c.l.b16 %v2815
    %v4045 = vunpack.c.h.b16 %v2815
    %v4046 = vunpack.c.l.b16 %v2816
    %v4047 = vunpack.c.h.b16 %v2816
    %v4048 = vunpack.c.l.b16 %v2817
    %v4049 = vunpack.c.h.b16 %v2817
    %v4050 = vunpack.c.l.b16 %v2818
    %v4051 = vunpack.c.l.b16 %v2819
    %v4052 = vunpack.c.h.b16 %v2819
    %v4053 = vunpack.c.l.b16 %v2820
    %v4054 = vunpack.c.h.b16 %v2820
    %v4055 = vunpack.c.l.b16 %v2821
    %v4056 = vunpack.c.h.b16 %v2821
    %v4057 = vunpack.c.l.b16 %v2822
    %v4058 = vunpack.c.l.b16 %v2823
    %v4059 = vunpack.c.h.b16 %v2823
    %v4060 = vunpack.c.l.b16 %v2824
    %v4061 = vunpack.c.h.b16 %v2824
    %v4062 = vunpack.c.l.b16 %v2825
    %v4063 = vunpack.c.h.b16 %v2825
    %v4064 = vunpack.c.l.b16 %v2826
    %v4065 = vunpack.c.l.b16 %v2827
    %v4066 = vunpack.c.h.b16 %v2827
    %v4067 = vunpack.c.l.b16 %v2828
    %v4068 = vunpack.c.h.b16 %v2828
    %v4069 = vunpack.c.l.b16 %v2829
    %v4070 = vunpack.c.h.b16 %v2829
    %v4071 = vunpack.c.l.b16 %v2830
    %v4072 = vunpack.c.l.b16 %v2831
    %v4073 = vunpack.c.h.b16 %v2831
    %v4074 = vunpack.c.l.b16 %v2832
    %v4075 = vunpack.c.h.b16 %v2832
    %v4076 = vunpack.c.l.b16 %v2833
    %v4077 = vunpack.c.h.b16 %v2833
    %v4078 = vunpack.c.l.b16 %v2834
    %v4079 = vunpack.c.l.b16 %v2835
    %v4080 = vunpack.c.h.b16 %v2835
    %v4081 = vunpack.c.l.b16 %v2836
    %v4082 = vunpack.c.h.b16 %v2836
    %v4083 = vunpack.c.l.b16 %v2837
    %v4084 = vunpack.c.h.b16 %v2837
    %v4085 = vunpack.c.l.b16 %v2838
    %v4086 = vunpack.c.l.b16 %v2839
    %v4087 = vunpack.c.h.b16 %v2839
    %v4088 = vunpack.c.l.b16 %v2840
    %v4089 = vunpack.c.h.b16 %v2840
    %v4090 = vunpack.c.l.b16 %v2841
    %v4091 = vunpack.c.h.b16 %v2841
    %v4092 = vunpack.c.l.b16 %v2842
    %v4093 = vunpack.c.l.b16 %v2843
    %v4094 = vunpack.c.h.b16 %v2843
    %v4095 = vunpack.c.l.b16 %v2844
    %v4096 = vunpack.c.h.b16 %v2844
    %v4097 = vunpack.c.l.b16 %v2845
    %v4098 = vunpack.c.h.b16 %v2845
    %v4099 = vunpack.c.l.b16 %v2846
    %v4100 = vunpack.c.l.b16 %v2847
    %v4101 = vunpack.c.h.b16 %v2847
    %v4102 = vunpack.c.l.b16 %v2848
    %v4103 = vunpack.c.h.b16 %v2848
    %v4104 = vunpack.c.l.b16 %v2849
    %v4105 = vunpack.c.h.b16 %v2849
    %v4106 = vunpack.c.l.b16 %v2850
    %v4107 = vunpack.c.l.b16 %v2851
    %v4108 = vunpack.c.h.b16 %v2851
    %v4109 = vunpack.c.l.b16 %v2852
    %v4110 = vunpack.c.h.b16 %v2852
    %v4111 = vunpack.c.l.b16 %v2853
    %v4112 = vunpack.c.h.b16 %v2853
    %v4113 = vunpack.c.l.b16 %v2854
    %v4114 = vunpack.c.l.b16 %v2855
    %v4115 = vunpack.c.h.b16 %v2855
    %v4116 = vunpack.c.l.b16 %v2856
    %v4117 = vunpack.c.h.b16 %v2856
    %v4118 = vunpack.c.l.b16 %v2857
    %v4119 = vunpack.c.h.b16 %v2857
    %v4120 = vunpack.c.l.b16 %v2858
    %v4121 = vunpack.c.l.b16 %v2859
    %v4122 = vunpack.c.h.b16 %v2859
    %v4123 = vunpack.c.l.b16 %v2860
    %v4124 = vunpack.c.h.b16 %v2860
    %v4125 = vunpack.c.l.b16 %v2861
    %v4126 = vunpack.c.h.b16 %v2861
    %v4127 = vunpack.c.l.b16 %v2862
    %v4128 = vunpack.c.l.b16 %v2863
    %v4129 = vunpack.c.h.b16 %v2863
    %v4130 = vunpack.c.l.b16 %v2864
    %v4131 = vunpack.c.h.b16 %v2864
    %v4132 = vunpack.c.l.b16 %v2865
    %v4133 = vunpack.c.h.b16 %v2865
    %v4134 = vunpack.c.l.b16 %v2866
    %v4135 = vunpack.c.l.b16 %v2867
    %v4136 = vunpack.c.h.b16 %v2867
    %v4137 = vunpack.c.l.b16 %v2868
    %v4138 = vunpack.c.h.b16 %v2868
    %v4139 = vunpack.c.l.b16 %v2869
    %v4140 = vunpack.c.h.b16 %v2869
    %v4141 = vunpack.c.l.b16 %v2870
    %v4142 = vunpack.c.l.b16 %v2871
    %v4143 = vunpack.c.h.b16 %v2871
    %v4144 = vunpack.c.l.b16 %v2872
    %v4145 = vunpack.c.h.b16 %v2872
    %v4146 = vunpack.c.l.b16 %v2873
    %v4147 = vunpack.c.h.b16 %v2873
    %v4148 = vunpack.c.l.b16 %v2874
    %v4149 = vunpack.c.l.b16 %v2875
    %v4150 = vunpack.c.h.b16 %v2875
    %v4151 = vunpack.c.l.b16 %v2876
    %v4152 = vunpack.c.h.b16 %v2876
    %v4153 = vunpack.c.l.b16 %v2877
    %v4154 = vunpack.c.h.b16 %v2877
    %v4155 = vunpack.c.l.b16 %v2878
    %v4156 = vunpack.c.l.b16 %v2879
    %v4157 = vunpack.c.h.b16 %v2879
    %v4158 = vunpack.c.l.b16 %v2880
    %v4159 = vunpack.c.h.b16 %v2880
    %v4160 = vunpack.c.l.b16 %v2881
    %v4161 = vunpack.c.h.b16 %v2881
    %v4162 = vunpack.c.l.b16 %v2882
    %v4163 = vunpack.c.l.b16 %v2883
    %v4164 = vunpack.c.h.b16 %v2883
    %v4165 = vunpack.c.l.b16 %v2884
    %v4166 = vunpack.c.h.b16 %v2884
    %v4167 = vunpack.c.l.b16 %v2885
    %v4168 = vunpack.c.h.b16 %v2885
    %v4169 = vunpack.c.l.b16 %v2886
    %v4170 = vunpack.c.l.b16 %v2887
    %v4171 = vunpack.c.h.b16 %v2887
    %v4172 = vunpack.c.l.b16 %v2888
    %v4173 = vunpack.c.h.b16 %v2888
    %v4174 = vunpack.c.l.b16 %v2889
    %v4175 = vunpack.c.h.b16 %v2889
    %v4176 = vunpack.c.l.b16 %v2890
    %v4177 = vunpack.c.l.b16 %v2891
    %v4178 = vunpack.c.h.b16 %v2891
    %v4179 = vunpack.c.l.b16 %v2892
    %v4180 = vunpack.c.h.b16 %v2892
    %v4181 = vunpack.c.l.b16 %v2893
    %v4182 = vunpack.c.h.b16 %v2893
    %v4183 = vunpack.c.l.b16 %v2894
    %v4184 = vunpack.c.l.b16 %v2895
    %v4185 = vunpack.c.h.b16 %v2895
    %v4186 = vunpack.c.l.b16 %v2896
    %v4187 = vunpack.c.h.b16 %v2896
    %v4188 = vunpack.c.l.b16 %v2897
    %v4189 = vunpack.c.h.b16 %v2897
    %v4190 = vunpack.c.l.b16 %v2898
    %v4191 = vunpack.c.l.b16 %v2899
    %v4192 = vunpack.c.h.b16 %v2899
    %v4193 = vunpack.c.l.b16 %v2900
    %v4194 = vunpack.c.h.b16 %v2900
    %v4195 = vunpack.c.l.b16 %v2901
    %v4196 = vunpack.c.h.b16 %v2901
    %v4197 = vunpack.c.l.b16 %v2902
    %v4198 = vunpack.c.l.b16 %v2903
    %v4199 = vunpack.c.h.b16 %v2903
    %v4200 = vunpack.c.l.b16 %v2904
    %v4201 = vunpack.c.h.b16 %v2904
    %v4202 = vunpack.c.l.b16 %v2905
    %v4203 = vunpack.c.h.b16 %v2905
    %v4204 = vunpack.c.l.b16 %v2906
    %v4205 = vunpack.c.l.b16 %v2907
    %v4206 = vunpack.c.h.b16 %v2907
    %v4207 = vunpack.c.l.b16 %v2908
    %v4208 = vunpack.c.h.b16 %v2908
    %v4209 = vunpack.c.l.b16 %v2909
    %v4210 = vunpack.c.h.b16 %v2909
    %v4211 = vunpack.c.l.b16 %v2910
    %v4212 = vunpack.c.l.b16 %v2911
    %v4213 = vunpack.c.h.b16 %v2911
    %v4214 = vunpack.c.l.b16 %v2912
    %v4215 = vunpack.c.h.b16 %v2912
    %v4216 = vunpack.c.l.b16 %v2913
    %v4217 = vunpack.c.h.b16 %v2913
    %v4218 = vunpack.c.l.b16 %v2914
    %v4219 = vunpack.c.l.b16 %v2915
    %v4220 = vunpack.c.h.b16 %v2915
    %v4221 = vunpack.c.l.b16 %v2916
    %v4222 = vunpack.c.h.b16 %v2916
    %v4223 = vunpack.c.l.b16 %v2917
    %v4224 = vunpack.c.h.b16 %v2917
    %v4225 = vunpack.c.l.b16 %v2918
    %v4226 = vunpack.c.l.b16 %v2919
    %v4227 = vunpack.c.h.b16 %v2919
    %v4228 = vunpack.c.l.b16 %v2920
    %v4229 = vunpack.c.h.b16 %v2920
    %v4230 = vunpack.c.l.b16 %v2921
    %v4231 = vunpack.c.h.b16 %v2921
    %v4232 = vunpack.c.l.b16 %v2922
    %v4233 = vunpack.c.l.b16 %v2923
    %v4234 = vunpack.c.h.b16 %v2923
    %v4235 = vunpack.c.l.b16 %v2924
    %v4236 = vunpack.c.h.b16 %v2924
    %v4237 = vunpack.c.l.b16 %v2925
    %v4238 = vunpack.c.h.b16 %v2925
    %v4239 = vunpack.c.l.b16 %v2926
    %v4240 = vunpack.c.l.b16 %v2927
    %v4241 = vunpack.c.h.b16 %v2927
    %v4242 = vunpack.c.l.b16 %v2928
    %v4243 = vunpack.c.h.b16 %v2928
    %v4244 = vunpack.c.l.b16 %v2929
    %v4245 = vunpack.c.h.b16 %v2929
    %v4246 = vunpack.c.l.b16 %v2930
    %v4247 = vunpack.c.l.b16 %v2931
    %v4248 = vunpack.c.h.b16 %v2931
    %v4249 = vunpack.c.l.b16 %v2932
    %v4250 = vunpack.c.h.b16 %v2932
    %v4251 = vunpack.c.l.b16 %v2933
    %v4252 = vunpack.c.h.b16 %v2933
    %v4253 = vunpack.c.l.b16 %v2934
    %v4254 = vunpack.c.l.b16 %v2935
    %v4255 = vunpack.c.h.b16 %v2935
    %v4256 = vunpack.c.l.b16 %v2936
    %v4257 = vunpack.c.h.b16 %v2936
    %v4258 = vunpack.c.l.b16 %v2937
    %v4259 = vunpack.c.h.b16 %v2937
    %v4260 = vunpack.c.l.b16 %v2938
    %v4261 = vunpack.c.l.b16 %v2939
    %v4262 = vunpack.c.h.b16 %v2939
    %v4263 = vunpack.c.l.b16 %v2940
    %v4264 = vunpack.c.h.b16 %v2940
    %v4265 = vunpack.c.l.b16 %v2941
    %v4266 = vunpack.c.h.b16 %v2941
    %v4267 = vunpack.c.l.b16 %v2942
    %v4268 = vunpack.c.l.b16 %v2943
    %v4269 = vunpack.c.h.b16 %v2943
    %v4270 = vunpack.c.l.b16 %v2944
    %v4271 = vunpack.c.h.b16 %v2944
    %v4272 = vunpack.c.l.b16 %v2945
    %v4273 = vunpack.c.h.b16 %v2945
    %v4274 = vunpack.c.l.b16 %v2946
    %v4275 = vunpack.c.l.b16 %v2947
    %v4276 = vunpack.c.h.b16 %v2947
    %v4277 = vunpack.c.l.b16 %v2948
    %v4278 = vunpack.c.h.b16 %v2948
    %v4279 = vunpack.c.l.b16 %v2949
    %v4280 = vunpack.c.h.b16 %v2949
    %v4281 = vunpack.c.l.b16 %v2950
    %v4282 = vunpack.c.l.b16 %v2951
    %v4283 = vunpack.c.h.b16 %v2951
    %v4284 = vunpack.c.l.b16 %v2952
    %v4285 = vunpack.c.h.b16 %v2952
    %v4286 = vunpack.c.l.b16 %v2953
    %v4287 = vunpack.c.h.b16 %v2953
    %v4288 = vunpack.c.l.b16 %v2954
    %v4289 = vunpack.c.l.b16 %v2955
    %v4290 = vunpack.c.h.b16 %v2955
    %v4291 = vunpack.c.l.b16 %v2956
    %v4292 = vunpack.c.h.b16 %v2956
    %v4293 = vunpack.c.l.b16 %v2957
    %v4294 = vunpack.c.h.b16 %v2957
    %v4295 = vunpack.c.l.b16 %v2958
    %v4296 = vunpack.c.l.b16 %v2959
    %v4297 = vunpack.c.h.b16 %v2959
    %v4298 = vunpack.c.l.b16 %v2960
    %v4299 = vunpack.c.h.b16 %v2960
    %v4300 = vunpack.c.l.b16 %v2961
    %v4301 = vunpack.c.h.b16 %v2961
    %v4302 = vunpack.c.l.b16 %v2962
    %v4303 = vunpack.c.l.b16 %v2963
    %v4304 = vunpack.c.h.b16 %v2963
    %v4305 = vunpack.c.l.b16 %v2964
    %v4306 = vunpack.c.h.b16 %v2964
    %v4307 = vunpack.c.l.b16 %v2965
    %v4308 = vunpack.c.h.b16 %v2965
    %v4309 = vunpack.c.l.b16 %v2966
    %v4310 = vunpack.c.l.b16 %v2967
    %v4311 = vunpack.c.h.b16 %v2967
    %v4312 = vunpack.c.l.b16 %v2968
    %v4313 = vunpack.c.h.b16 %v2968
    %v4314 = vunpack.c.l.b16 %v2969
    %v4315 = vunpack.c.h.b16 %v2969
    %v4316 = vunpack.c.l.b16 %v2970
    %v4317 = vunpack.c.l.b16 %v2971
    %v4318 = vunpack.c.h.b16 %v2971
    %v4319 = vunpack.c.l.b16 %v2972
    %v4320 = vunpack.c.h.b16 %v2972
    %v4321 = vunpack.c.l.b16 %v2973
    %v4322 = vunpack.c.h.b16 %v2973
    %v4323 = vunpack.c.l.b16 %v2974
    %v4324 = vunpack.c.l.b16 %v2975
    %v4325 = vunpack.c.h.b16 %v2975
    %v4326 = vunpack.c.l.b16 %v2976
    %v4327 = vunpack.c.h.b16 %v2976
    %v4328 = vunpack.c.l.b16 %v2977
    %v4329 = vunpack.c.h.b16 %v2977
    %v4330 = vunpack.c.l.b16 %v2978
    %v4331 = vunpack.c.l.b16 %v2979
    %v4332 = vunpack.c.h.b16 %v2979
    %v4333 = vunpack.c.l.b16 %v2980
    %v4334 = vunpack.c.h.b16 %v2980
    %v4335 = vunpack.c.l.b16 %v2981
    %v4336 = vunpack.c.h.b16 %v2981
    %v4337 = vunpack.c.l.b16 %v2982
    %v4338 = vunpack.c.l.b16 %v2983
    %v4339 = vunpack.c.h.b16 %v2983
    %v4340 = vunpack.c.l.b16 %v2984
    %v4341 = vunpack.c.h.b16 %v2984
    %v4342 = vunpack.c.l.b16 %v2985
    %v4343 = vunpack.c.h.b16 %v2985
    %v4344 = vunpack.c.l.b16 %v2986
    %v4345 = vunpack.c.l.b16 %v2987
    %v4346 = vunpack.c.h.b16 %v2987
    %v4347 = vunpack.c.l.b16 %v2988
    %v4348 = vunpack.c.h.b16 %v2988
    %v4349 = vunpack.c.l.b16 %v2989
    %v4350 = vunpack.c.h.b16 %v2989
    %v4351 = vunpack.c.l.b16 %v2990
    %v4352 = vunpack.c.l.b16 %v2991
    %v4353 = vunpack.c.h.b16 %v2991
    %v4354 = vunpack.c.l.b16 %v2992
    %v4355 = vunpack.c.h.b16 %v2992
    %v4356 = vunpack.c.l.b16 %v2993
    %v4357 = vunpack.c.h.b16 %v2993
    %v4358 = vunpack.c.l.b16 %v2994
    %v4359 = vunpack.c.l.b16 %v2995
    %v4360 = vunpack.c.h.b16 %v2995
    %v4361 = vunpack.c.l.b16 %v2996
    %v4362 = vunpack.c.h.b16 %v2996
    %v4363 = vunpack.c.l.b16 %v2997
    %v4364 = vunpack.c.h.b16 %v2997
    %v4365 = vunpack.c.l.b16 %v2998
    %v4366 = vunpack.c.l.b16 %v2999
    %v4367 = vunpack.c.h.b16 %v2999
    %v4368 = vunpack.c.l.b16 %v3000
    %v4369 = vunpack.c.h.b16 %v3000
    %v4370 = vunpack.c.l.b16 %v3001
    %v4371 = vunpack.c.h.b16 %v3001
    %v4372 = vunpack.c.l.b16 %v3002
    %v4373 = vunpack.c.l.b16 %v3003
    %v4374 = vunpack.c.h.b16 %v3003
    %v4375 = vunpack.c.l.b16 %v3004
    %v4376 = vunpack.c.h.b16 %v3004
    %v4377 = vunpack.c.l.b16 %v3005
    %v4378 = vunpack.c.h.b16 %v3005
    %v4379 = vunpack.c.l.b16 %v3006
    %v4380 = vunpack.c.l.b16 %v3007
    %v4381 = vunpack.c.h.b16 %v3007
    %v4382 = vunpack.c.l.b16 %v3008
    %v4383 = vunpack.c.h.b16 %v3008
    %v4384 = vunpack.c.l.b16 %v3009
    %v4385 = vunpack.c.h.b16 %v3009
    %v4386 = vunpack.c.l.b16 %v3010
    %v4387 = vunpack.c.l.b16 %v3011
    %v4388 = vunpack.c.h.b16 %v3011
    %v4389 = vunpack.c.l.b16 %v3012
    %v4390 = vunpack.c.h.b16 %v3012
    %v4391 = vunpack.c.l.b16 %v3013
    %v4392 = vunpack.c.h.b16 %v3013
    %v4393 = vunpack.c.l.b16 %v3014
    %v4394 = vunpack.c.l.b16 %v3015
    %v4395 = vunpack.c.h.b16 %v3015
    %v4396 = vunpack.c.l.b16 %v3016
    %v4397 = vunpack.c.h.b16 %v3016
    %v4398 = vunpack.c.l.b16 %v3017
    %v4399 = vunpack.c.h.b16 %v3017
    %v4400 = vunpack.c.l.b16 %v3018
    %v4401 = vunpack.c.l.b16 %v3019
    %v4402 = vunpack.c.h.b16 %v3019
    %v4403 = vunpack.c.l.b16 %v3020
    %v4404 = vunpack.c.h.b16 %v3020
    %v4405 = vunpack.c.l.b16 %v3021
    %v4406 = vunpack.c.h.b16 %v3021
    %v4407 = vunpack.c.l.b16 %v3022
    %v4408 = vunpack.c.l.b16 %v3023
    %v4409 = vunpack.c.h.b16 %v3023
    %v4410 = vunpack.c.l.b16 %v3024
    %v4411 = vunpack.c.h.b16 %v3024
    %v4412 = vunpack.c.l.b16 %v3025
    %v4413 = vunpack.c.h.b16 %v3025
    %v4414 = vunpack.c.l.b16 %v3026
    %v4415 = vunpack.c.l.b16 %v3027
    %v4416 = vunpack.c.h.b16 %v3027
    %v4417 = vunpack.c.l.b16 %v3028
    %v4418 = vunpack.c.h.b16 %v3028
    %v4419 = vunpack.c.l.b16 %v3029
    %v4420 = vunpack.c.h.b16 %v3029
    %v4421 = vunpack.c.l.b16 %v3030
    %v4422 = vunpack.c.l.b16 %v3031
    %v4423 = vunpack.c.h.b16 %v3031
    %v4424 = vunpack.c.l.b16 %v3032
    %v4425 = vunpack.c.h.b16 %v3032
    %v4426 = vunpack.c.l.b16 %v3033
    %v4427 = vunpack.c.h.b16 %v3033
    %v4428 = vunpack.c.l.b16 %v3034
    %v4429 = vunpack.c.l.b16 %v3035
    %v4430 = vunpack.c.h.b16 %v3035
    %v4431 = vunpack.c.l.b16 %v3036
    %v4432 = vunpack.c.h.b16 %v3036
    %v4433 = vunpack.c.l.b16 %v3037
    %v4434 = vunpack.c.h.b16 %v3037
    %v4435 = vunpack.c.l.b16 %v3038
    %v4436 = vunpack.c.l.b16 %v3039
    %v4437 = vunpack.c.h.b16 %v3039
    %v4438 = vunpack.c.l.b16 %v3040
    %v4439 = vunpack.c.h.b16 %v3040
    %v4440 = vunpack.c.l.b16 %v3041
    %v4441 = vunpack.c.h.b16 %v3041
    %v4442 = vunpack.c.l.b16 %v3042
    %v4443 = vunpack.c.l.b16 %v3043
    %v4444 = vunpack.c.h.b16 %v3043
    %v4445 = vunpack.c.l.b16 %v3044
    %v4446 = vunpack.c.h.b16 %v3044
    %v4447 = vunpack.c.l.b16 %v3045
    %v4448 = vunpack.c.h.b16 %v3045
    %v4449 = vunpack.c.l.b16 %v3046
    %v4450 = vunpack.c.l.b16 %v3047
    %v4451 = vunpack.c.h.b16 %v3047
    %v4452 = vunpack.c.l.b16 %v3048
    %v4453 = vunpack.c.h.b16 %v3048
    %v4454 = vunpack.c.l.b16 %v3049
    %v4455 = vunpack.c.h.b16 %v3049
    %v4456 = vunpack.c.l.b16 %v3050
    %v4457 = vunpack.c.l.b16 %v3051
    %v4458 = vunpack.c.h.b16 %v3051
    %v4459 = vunpack.c.l.b16 %v3052
    %v4460 = vunpack.c.h.b16 %v3052
    %v4461 = vunpack.c.l.b16 %v3053
    %v4462 = vunpack.c.h.b16 %v3053
    %v4463 = vunpack.c.l.b16 %v3054
    %v4464 = vunpack.c.l.b16 %v3055
    %v4465 = vunpack.c.h.b16 %v3055
    %v4466 = vunpack.c.l.b16 %v3056
    %v4467 = vunpack.c.h.b16 %v3056
    %v4468 = vunpack.c.l.b16 %v3057
    %v4469 = vunpack.c.h.b16 %v3057
    %v4470 = vunpack.c.l.b16 %v3058
    %v4471 = vunpack.c.l.b16 %v3059
    %v4472 = vunpack.c.h.b16 %v3059
    %v4473 = vunpack.c.l.b16 %v3060
    %v4474 = vunpack.c.h.b16 %v3060
    %v4475 = vunpack.c.l.b16 %v3061
    %v4476 = vunpack.c.h.b16 %v3061
    %v4477 = vunpack.c.l.b16 %v3062
    %v4478 = vunpack.c.l.b16 %v3063
    %v4479 = vunpack.c.h.b16 %v3063
    %v4480 = vunpack.c.l.b16 %v3064
    %v4481 = vunpack.c.h.b16 %v3064
    %v4482 = vunpack.c.l.b16 %v3065
    %v4483 = vunpack.c.h.b16 %v3065
    %v4484 = vunpack.c.l.b16 %v3066
    %v4485 = vunpack.c.l.b16 %v3067
    %v4486 = vunpack.c.h.b16 %v3067
    %v4487 = vunpack.c.l.b16 %v3068
    %v4488 = vunpack.c.h.b16 %v3068
    %v4489 = vunpack.c.l.b16 %v3069
    %v4490 = vunpack.c.h.b16 %v3069
    %v4491 = vunpack.c.l.b16 %v3070
    %v4492 = vunpack.c.l.b16 %v3071
    %v4493 = vunpack.c.h.b16 %v3071
    %v4494 = vunpack.c.l.b16 %v3072
    %v4495 = vunpack.c.h.b16 %v3072
    %v4496 = vunpack.c.l.b16 %v3073
    %v4497 = vunpack.c.h.b16 %v3073
    %v4498 = vunpack.c.l.b16 %v3074
    %v4499 = vunpack.c.l.b16 %v3075
    %v4500 = vunpack.c.h.b16 %v3075
    %v4501 = vunpack.c.l.b16 %v3076
    %v4502 = vunpack.c.h.b16 %v3076
    %v4503 = vunpack.c.l.b16 %v3077
    %v4504 = vunpack.c.h.b16 %v3077
    %v4505 = vunpack.c.l.b16 %v3078
    %v4506 = vunpack.c.l.b16 %v3079
    %v4507 = vunpack.c.h.b16 %v3079
    %v4508 = vunpack.c.l.b16 %v3080
    %v4509 = vunpack.c.h.b16 %v3080
    %v4510 = vunpack.c.l.b16 %v3081
    %v4511 = vunpack.c.h.b16 %v3081
    %v4512 = vunpack.c.l.b16 %v3082
    %v4513 = vunpack.c.l.b16 %v3083
    %v4514 = vunpack.c.h.b16 %v3083
    %v4515 = vunpack.c.l.b16 %v3084
    %v4516 = vunpack.c.h.b16 %v3084
    %v4517 = vunpack.c.l.b16 %v3085
    %v4518 = vunpack.c.h.b16 %v3085
    %v4519 = vunpack.c.l.b16 %v3086
    %v4520 = vunpack.c.l.b16 %v3087
    %v4521 = vunpack.c.h.b16 %v3087
    %v4522 = vunpack.c.l.b16 %v3088
    %v4523 = vunpack.c.h.b16 %v3088
    %v4524 = vunpack.c.l.b16 %v3089
    %v4525 = vunpack.c.h.b16 %v3089
    %v4526 = vunpack.c.l.b16 %v3090
    %v4527 = vunpack.c.l.b16 %v3091
    %v4528 = vunpack.c.h.b16 %v3091
    %v4529 = vunpack.c.l.b16 %v3092
    %v4530 = vunpack.c.h.b16 %v3092
    %v4531 = vunpack.c.l.b16 %v3093
    %v4532 = vunpack.c.h.b16 %v3093
    %v4533 = vunpack.c.l.b16 %v3094
    %v4534 = vunpack.c.l.b16 %v3095
    %v4535 = vunpack.c.h.b16 %v3095
    %v4536 = vunpack.c.l.b16 %v3096
    %v4537 = vunpack.c.h.b16 %v3096
    %v4538 = vunpack.c.l.b16 %v3097
    %v4539 = vunpack.c.h.b16 %v3097
    %v4540 = vunpack.c.l.b16 %v3098
    %v4541 = vunpack.c.l.b16 %v3099
    %v4542 = vunpack.c.h.b16 %v3099
    %v4543 = vunpack.c.l.b16 %v3100
    %v4544 = vunpack.c.h.b16 %v3100
    %v4545 = vunpack.c.l.b16 %v3101
    %v4546 = vunpack.c.h.b16 %v3101
    %v4547 = vunpack.c.l.b16 %v3102
    %v4548 = vpack.c.b16 %v3659, %v3652
    %v4549 = vpack.c.b16 %v3660, %v3653
    %v4550 = vpack.c.b16 %v3661, %v3654
    %v4551 = vpack.c.b16 %v3662, %v3655
    %v4552 = vpack.c.b16 %v3663, %v3656
    %v4553 = vpack.c.b16 %v3664, %v3657
    %v4554 = vpack.c.b16 %v3665, %v3658
    %v4555 = vpack.c.b16 %v3673, %v3666
    %v4556 = vpack.c.b16 %v3674, %v3667
    %v4557 = vpack.c.b16 %v3675, %v3668
    %v4558 = vpack.c.b16 %v3676, %v3669
    %v4559 = vpack.c.b16 %v3677, %v3670
    %v4560 = vpack.c.b16 %v3678, %v3671
    %v4561 = vpack.c.b16 %v3679, %v3672
    %v4562 = vpack.c.b16 %v3687, %v3680
    %v4563 = vpack.c.b16 %v3688, %v3681
    %v4564 = vpack.c.b16 %v3689, %v3682
    %v4565 = vpack.c.b16 %v3690, %v3683
    %v4566 = vpack.c.b16 %v3691, %v3684
    %v4567 = vpack.c.b16 %v3692, %v3685
    %v4568 = vpack.c.b16 %v3693, %v3686
    %v4569 = vpack.c.b16 %v3701, %v3694
    %v4570 = vpack.c.b16 %v3702, %v3695
    %v4571 = vpack.c.b16 %v3703, %v3696
    %v4572 = vpack.c.b16 %v3704, %v3697
    %v4573 = vpack.c.b16 %v3705, %v3698
    %v4574 = vpack.c.b16 %v3706, %v3699
    %v4575 = vpack.c.b16 %v3707, %v3700
    %v4576 = vpack.c.b16 %v3715, %v3708
    %v4577 = vpack.c.b16 %v3716, %v3709
    %v4578 = vpack.c.b16 %v3717, %v3710
    %v4579 = vpack.c.b16 %v3718, %v3711
    %v4580 = vpack.c.b16 %v3719, %v3712
    %v4581 = vpack.c.b16 %v3720, %v3713
    %v4582 = vpack.c.b16 %v3721, %v3714
    %v4583 = vpack.c.b16 %v3729, %v3722
    %v4584 = vpack.c.b16 %v3730, %v3723
    %v4585 = vpack.c.b16 %v3731, %v3724
    %v4586 = vpack.c.b16 %v3732, %v3725
    %v4587 = vpack.c.b16 %v3733, %v3726
    %v4588 = vpack.c.b16 %v3734, %v3727
    %v4589 = vpack.c.b16 %v3735, %v3728
    %v4590 = vpack.c.b16 %v3743, %v3736
    %v4591 = vpack.c.b16 %v3744, %v3737
    %v4592 = vpack.c.b16 %v3745, %v3738
    %v4593 = vpack.c.b16 %v3746, %v3739
    %v4594 = vpack.c.b16 %v3747, %v3740
    %v4595 = vpack.c.b16 %v3748, %v3741
    %v4596 = vpack.c.b16 %v3749, %v3742
    %v4597 = vpack.c.b16 %v3757, %v3750
    %v4598 = vpack.c.b16 %v3758, %v3751
    %v4599 = vpack.c.b16 %v3759, %v3752
    %v4600 = vpack.c.b16 %v3760, %v3753
    %v4601 = vpack.c.b16 %v3761, %v3754
    %v4602 = vpack.c.b16 %v3762, %v3755
    %v4603 = vpack.c.b16 %v3763, %v3756
    %v4604 = vpack.c.b16 %v3771, %v3764
    %v4605 = vpack.c.b16 %v3772, %v3765
    %v4606 = vpack.c.b16 %v3773, %v3766
    %v4607 = vpack.c.b16 %v3774, %v3767
    %v4608 = vpack.c.b16 %v3775, %v3768
    %v4609 = vpack.c.b16 %v3776, %v3769
    %v4610 = vpack.c.b16 %v3777, %v3770
    %v4611 = vpack.c.b16 %v3785, %v3778
    %v4612 = vpack.c.b16 %v3786, %v3779
    %v4613 = vpack.c.b16 %v3787, %v3780
    %v4614 = vpack.c.b16 %v3788, %v3781
    %v4615 = vpack.c.b16 %v3789, %v3782
    %v4616 = vpack.c.b16 %v3790, %v3783
    %v4617 = vpack.c.b16 %v3791, %v3784
    %v4618 = vpack.c.b16 %v3799, %v3792
    %v4619 = vpack.c.b16 %v3800, %v3793
    %v4620 = vpack.c.b16 %v3801, %v3794
    %v4621 = vpack.c.b16 %v3802, %v3795
    %v4622 = vpack.c.b16 %v3803, %v3796
    %v4623 = vpack.c.b16 %v3804, %v3797
    %v4624 = vpack.c.b16 %v3805, %v3798
    %v4625 = vpack.c.b16 %v3813, %v3806
    %v4626 = vpack.c.b16 %v3814, %v3807
    %v4627 = vpack.c.b16 %v3815, %v3808
    %v4628 = vpack.c.b16 %v3816, %v3809
    %v4629 = vpack.c.b16 %v3817, %v3810
    %v4630 = vpack.c.b16 %v3818, %v3811
    %v4631 = vpack.c.b16 %v3819, %v3812
    %v4632 = vpack.c.b16 %v3827, %v3820
    %v4633 = vpack.c.b16 %v3828, %v3821
    %v4634 = vpack.c.b16 %v3829, %v3822
    %v4635 = vpack.c.b16 %v3830, %v3823
    %v4636 = vpack.c.b16 %v3831, %v3824
    %v4637 = vpack.c.b16 %v3832, %v3825
    %v4638 = vpack.c.b16 %v3833, %v3826
    %v4639 = vpack.c.b16 %v3841, %v3834
    %v4640 = vpack.c.b16 %v3842, %v3835
    %v4641 = vpack.c.b16 %v3843, %v3836
    %v4642 = vpack.c.b16 %v3844, %v3837
    %v4643 = vpack.c.b16 %v3845, %v3838
    %v4644 = vpack.c.b16 %v3846, %v3839
    %v4645 = vpack.c.b16 %v3847, %v3840
    %v4646 = vpack.c.b16 %v3855, %v3848
    %v4647 = vpack.c.b16 %v3856, %v3849
    %v4648 = vpack.c.b16 %v3857, %v3850
    %v4649 = vpack.c.b16 %v3858, %v3851
    %v4650 = vpack.c.b16 %v3859, %v3852
    %v4651 = vpack.c.b16 %v3860, %v3853
    %v4652 = vpack.c.b16 %v3861, %v3854
    %v4653 = vpack.c.b16 %v3869, %v3862
    %v4654 = vpack.c.b16 %v3870, %v3863
    %v4655 = vpack.c.b16 %v3871, %v3864
    %v4656 = vpack.c.b16 %v3872, %v3865
    %v4657 = vpack.c.b16 %v3873, %v3866
    %v4658 = vpack.c.b16 %v3874, %v3867
    %v4659 = vpack.c.b16 %v3875, %v3868
    %v4660 = vpack.c.b16 %v3883, %v3876
    %v4661 = vpack.c.b16 %v3884, %v3877
    %v4662 = vpack.c.b16 %v3885, %v3878
    %v4663 = vpack.c.b16 %v3886, %v3879
    %v4664 = vpack.c.b16 %v3887, %v3880
    %v4665 = vpack.c.b16 %v3888, %v3881
    %v4666 = vpack.c.b16 %v3889, %v3882
    %v4667 = vpack.c.b16 %v3897, %v3890
    %v4668 = vpack.c.b16 %v3898, %v3891
    %v4669 = vpack.c.b16 %v3899, %v3892
    %v4670 = vpack.c.b16 %v3900, %v3893
    %v4671 = vpack.c.b16 %v3901, %v3894
    %v4672 = vpack.c.b16 %v3902, %v3895
    %v4673 = vpack.c.b16 %v3903, %v3896
    %v4674 = vpack.c.b16 %v3911, %v3904
    %v4675 = vpack.c.b16 %v3912, %v3905
    %v4676 = vpack.c.b16 %v3913, %v3906
    %v4677 = vpack.c.b16 %v3914, %v3907
    %v4678 = vpack.c.b16 %v3915, %v3908
    %v4679 = vpack.c.b16 %v3916, %v3909
    %v4680 = vpack.c.b16 %v3917, %v3910
    %v4681 = vpack.c.b16 %v3925, %v3918
    %v4682 = vpack.c.b16 %v3926, %v3919
    %v4683 = vpack.c.b16 %v3927, %v3920
    %v4684 = vpack.c.b16 %v3928, %v3921
    %v4685 = vpack.c.b16 %v3929, %v3922
    %v4686 = vpack.c.b16 %v3930, %v3923
    %v4687 = vpack.c.b16 %v3931, %v3924
    %v4688 = vpack.c.b16 %v3939, %v3932
    %v4689 = vpack.c.b16 %v3940, %v3933
    %v4690 = vpack.c.b16 %v3941, %v3934
    %v4691 = vpack.c.b16 %v3942, %v3935
    %v4692 = vpack.c.b16 %v3943, %v3936
    %v4693 = vpack.c.b16 %v3944, %v3937
    %v4694 = vpack.c.b16 %v3945, %v3938
    %v4695 = vpack.c.b16 %v3953, %v3946
    %v4696 = vpack.c.b16 %v3954, %v3947
    %v4697 = vpack.c.b16 %v3955, %v3948
    %v4698 = vpack.c.b16 %v3956, %v3949
    %v4699 = vpack.c.b16 %v3957, %v3950
    %v4700 = vpack.c.b16 %v3958, %v3951
    %v4701 = vpack.c.b16 %v3959, %v3952
    %v4702 = vpack.c.b16 %v3967, %v3960
    %v4703 = vpack.c.b16 %v3968, %v3961
    %v4704 = vpack.c.b16 %v3969, %v3962
    %v4705 = vpack.c.b16 %v3970, %v3963
    %v4706 = vpack.c.b16 %v3971, %v3964
    %v4707 = vpack.c.b16 %v3972, %v3965
    %v4708 = vpack.c.b16 %v3973, %v3966
    %v4709 = vpack.c.b16 %v3981, %v3974
    %v4710 = vpack.c.b16 %v3982, %v3975
    %v4711 = vpack.c.b16 %v3983, %v3976
    %v4712 = vpack.c.b16 %v3984, %v3977
    %v4713 = vpack.c.b16 %v3985, %v3978
    %v4714 = vpack.c.b16 %v3986, %v3979
    %v4715 = vpack.c.b16 %v3987, %v3980
    %v4716 = vpack.c.b16 %v3995, %v3988
    %v4717 = vpack.c.b16 %v3996, %v3989
    %v4718 = vpack.c.b16 %v3997, %v3990
    %v4719 = vpack.c.b16 %v3998, %v3991
    %v4720 = vpack.c.b16 %v3999, %v3992
    %v4721 = vpack.c.b16 %v4000, %v3993
    %v4722 = vpack.c.b16 %v4001, %v3994
    %v4723 = vpack.c.b16 %v4009, %v4002
    %v4724 = vpack.c.b16 %v4010, %v4003
    %v4725 = vpack.c.b16 %v4011, %v4004
    %v4726 = vpack.c.b16 %v4012, %v4005
    %v4727 = vpack.c.b16 %v4013, %v4006
    %v4728 = vpack.c.b16 %v4014, %v4007
    %v4729 = vpack.c.b16 %v4015, %v4008
    %v4730 = vpack.c.b16 %v4023, %v4016
    %v4731 = vpack.c.b16 %v4024, %v4017
    %v4732 = vpack.c.b16 %v4025, %v4018
    %v4733 = vpack.c.b16 %v4026, %v4019
    %v4734 = vpack.c.b16 %v4027, %v4020
    %v4735 = vpack.c.b16 %v4028, %v4021
    %v4736 = vpack.c.b16 %v4029, %v4022
    %v4737 = vpack.c.b16 %v4037, %v4030
    %v4738 = vpack.c.b16 %v4038, %v4031
    %v4739 = vpack.c.b16 %v4039, %v4032
    %v4740 = vpack.c.b16 %v4040, %v4033
    %v4741 = vpack.c.b16 %v4041, %v4034
    %v4742 = vpack.c.b16 %v4042, %v4035
    %v4743 = vpack.c.b16 %v4043, %v4036
    %v4744 = vpack.c.b16 %v4051, %v4044
    %v4745 = vpack.c.b16 %v4052, %v4045
    %v4746 = vpack.c.b16 %v4053, %v4046
    %v4747 = vpack.c.b16 %v4054, %v4047
    %v4748 = vpack.c.b16 %v4055, %v4048
    %v4749 = vpack.c.b16 %v4056, %v4049
    %v4750 = vpack.c.b16 %v4057, %v4050
    %v4751 = vpack.c.b16 %v4065, %v4058
    %v4752 = vpack.c.b16 %v4066, %v4059
    %v4753 = vpack.c.b16 %v4067, %v4060
    %v4754 = vpack.c.b16 %v4068, %v4061
    %v4755 = vpack.c.b16 %v4069, %v4062
    %v4756 = vpack.c.b16 %v4070, %v4063
    %v4757 = vpack.c.b16 %v4071, %v4064
    %v4758 = vpack.c.b16 %v4079, %v4072
    %v4759 = vpack.c.b16 %v4080, %v4073
    %v4760 = vpack.c.b16 %v4081, %v4074
    %v4761 = vpack.c.b16 %v4082, %v4075
    %v4762 = vpack.c.b16 %v4083, %v4076
    %v4763 = vpack.c.b16 %v4084, %v4077
    %v4764 = vpack.c.b16 %v4085, %v4078
    %v4765 = vpack.c.b16 %v4093, %v4086
    %v4766 = vpack.c.b16 %v4094, %v4087
    %v4767 = vpack.c.b16 %v4095, %v4088
    %v4768 = vpack.c.b16 %v4096, %v4089
    %v4769 = vpack.c.b16 %v4097, %v4090
    %v4770 = vpack.c.b16 %v4098, %v4091
    %v4771 = vpack.c.b16 %v4099, %v4092
    %v4772 = vpack.c.b16 %v4107, %v4100
    %v4773 = vpack.c.b16 %v4108, %v4101
    %v4774 = vpack.c.b16 %v4109, %v4102
    %v4775 = vpack.c.b16 %v4110, %v4103
    %v4776 = vpack.c.b16 %v4111, %v4104
    %v4777 = vpack.c.b16 %v4112, %v4105
    %v4778 = vpack.c.b16 %v4113, %v4106
    %v4779 = vpack.c.b16 %v4121, %v4114
    %v4780 = vpack.c.b16 %v4122, %v4115
    %v4781 = vpack.c.b16 %v4123, %v4116
    %v4782 = vpack.c.b16 %v4124, %v4117
    %v4783 = vpack.c.b16 %v4125, %v4118
    %v4784 = vpack.c.b16 %v4126, %v4119
    %v4785 = vpack.c.b16 %v4127, %v4120
    %v4786 = vpack.c.b16 %v4135, %v4128
    %v4787 = vpack.c.b16 %v4136, %v4129
    %v4788 = vpack.c.b16 %v4137, %v4130
    %v4789 = vpack.c.b16 %v4138, %v4131
    %v4790 = vpack.c.b16 %v4139, %v4132
    %v4791 = vpack.c.b16 %v4140, %v4133
    %v4792 = vpack.c.b16 %v4141, %v4134
    %v4793 = vpack.c.b16 %v4149, %v4142
    %v4794 = vpack.c.b16 %v4150, %v4143
    %v4795 = vpack.c.b16 %v4151, %v4144
    %v4796 = vpack.c.b16 %v4152, %v4145
    %v4797 = vpack.c.b16 %v4153, %v4146
    %v4798 = vpack.c.b16 %v4154, %v4147
    %v4799 = vpack.c.b16 %v4155, %v4148
    %v4800 = vpack.c.b16 %v4163, %v4156
    %v4801 = vpack.c.b16 %v4164, %v4157
    %v4802 = vpack.c.b16 %v4165, %v4158
    %v4803 = vpack.c.b16 %v4166, %v4159
    %v4804 = vpack.c.b16 %v4167, %v4160
    %v4805 = vpack.c.b16 %v4168, %v4161
    %v4806 = vpack.c.b16 %v4169, %v4162
    %v4807 = vpack.c.b16 %v4177, %v4170
    %v4808 = vpack.c.b16 %v4178, %v4171
    %v4809 = vpack.c.b16 %v4179, %v4172
    %v4810 = vpack.c.b16 %v4180, %v4173
    %v4811 = vpack.c.b16 %v4181, %v4174
    %v4812 = vpack.c.b16 %v4182, %v4175
    %v4813 = vpack.c.b16 %v4183, %v4176
    %v4814 = vpack.c.b16 %v4191, %v4184
    %v4815 = vpack.c.b16 %v4192, %v4185
    %v4816 = vpack.c.b16 %v4193, %v4186
    %v4817 = vpack.c.b16 %v4194, %v4187
    %v4818 = vpack.c.b16 %v4195, %v4188
    %v4819 = vpack.c.b16 %v4196, %v4189
    %v4820 = vpack.c.b16 %v4197, %v4190
    %v4821 = vpack.c.b16 %v4205, %v4198
    %v4822 = vpack.c.b16 %v4206, %v4199
    %v4823 = vpack.c.b16 %v4207, %v4200
    %v4824 = vpack.c.b16 %v4208, %v4201
    %v4825 = vpack.c.b16 %v4209, %v4202
    %v4826 = vpack.c.b16 %v4210, %v4203
    %v4827 = vpack.c.b16 %v4211, %v4204
    %v4828 = vpack.c.b16 %v4219, %v4212
    %v4829 = vpack.c.b16 %v4220, %v4213
    %v4830 = vpack.c.b16 %v4221, %v4214
    %v4831 = vpack.c.b16 %v4222, %v4215
    %v4832 = vpack.c.b16 %v4223, %v4216
    %v4833 = vpack.c.b16 %v4224, %v4217
    %v4834 = vpack.c.b16 %v4225, %v4218
    %v4835 = vpack.c.b16 %v4233, %v4226
    %v4836 = vpack.c.b16 %v4234, %v4227
    %v4837 = vpack.c.b16 %v4235, %v4228
    %v4838 = vpack.c.b16 %v4236, %v4229
    %v4839 = vpack.c.b16 %v4237, %v4230
    %v4840 = vpack.c.b16 %v4238, %v4231
    %v4841 = vpack.c.b16 %v4239, %v4232
    %v4842 = vpack.c.b16 %v4247, %v4240
    %v4843 = vpack.c.b16 %v4248, %v4241
    %v4844 = vpack.c.b16 %v4249, %v4242
    %v4845 = vpack.c.b16 %v4250, %v4243
    %v4846 = vpack.c.b16 %v4251, %v4244
    %v4847 = vpack.c.b16 %v4252, %v4245
    %v4848 = vpack.c.b16 %v4253, %v4246
    %v4849 = vpack.c.b16 %v4261, %v4254
    %v4850 = vpack.c.b16 %v4262, %v4255
    %v4851 = vpack.c.b16 %v4263, %v4256
    %v4852 = vpack.c.b16 %v4264, %v4257
    %v4853 = vpack.c.b16 %v4265, %v4258
    %v4854 = vpack.c.b16 %v4266, %v4259
    %v4855 = vpack.c.b16 %v4267, %v4260
    %v4856 = vpack.c.b16 %v4275, %v4268
    %v4857 = vpack.c.b16 %v4276, %v4269
    %v4858 = vpack.c.b16 %v4277, %v4270
    %v4859 = vpack.c.b16 %v4278, %v4271
    %v4860 = vpack.c.b16 %v4279, %v4272
    %v4861 = vpack.c.b16 %v4280, %v4273
    %v4862 = vpack.c.b16 %v4281, %v4274
    %v4863 = vpack.c.b16 %v4289, %v4282
    %v4864 = vpack.c.b16 %v4290, %v4283
    %v4865 = vpack.c.b16 %v4291, %v4284
    %v4866 = vpack.c.b16 %v4292, %v4285
    %v4867 = vpack.c.b16 %v4293, %v4286
    %v4868 = vpack.c.b16 %v4294, %v4287
    %v4869 = vpack.c.b16 %v4295, %v4288
    %v4870 = vpack.c.b16 %v4303, %v4296
    %v4871 = vpack.c.b16 %v4304, %v4297
    %v4872 = vpack.c.b16 %v4305, %v4298
    %v4873 = vpack.c.b16 %v4306, %v4299
    %v4874 = vpack.c.b16 %v4307, %v4300
    %v4875 = vpack.c.b16 %v4308, %v4301
    %v4876 = vpack.c.b16 %v4309, %v4302
    %v4877 = vpack.c.b16 %v4317, %v4310
    %v4878 = vpack.c.b16 %v4318, %v4311
    %v4879 = vpack.c.b16 %v4319, %v4312
    %v4880 = vpack.c.b16 %v4320, %v4313
    %v4881 = vpack.c.b16 %v4321, %v4314
    %v4882 = vpack.c.b16 %v4322, %v4315
    %v4883 = vpack.c.b16 %v4323, %v4316
    %v4884 = vpack.c.b16 %v4331, %v4324
    %v4885 = vpack.c.b16 %v4332, %v4325
    %v4886 = vpack.c.b16 %v4333, %v4326
    %v4887 = vpack.c.b16 %v4334, %v4327
    %v4888 = vpack.c.b16 %v4335, %v4328
    %v4889 = vpack.c.b16 %v4336, %v4329
    %v4890 = vpack.c.b16 %v4337, %v4330
    %v4891 = vpack.c.b16 %v4345, %v4338
    %v4892 = vpack.c.b16 %v4346, %v4339
    %v4893 = vpack.c.b16 %v4347, %v4340
    %v4894 = vpack.c.b16 %v4348, %v4341
    %v4895 = vpack.c.b16 %v4349, %v4342
    %v4896 = vpack.c.b16 %v4350, %v4343
    %v4897 = vpack.c.b16 %v4351, %v4344
    %v4898 = vpack.c.b16 %v4359, %v4352
    %v4899 = vpack.c.b16 %v4360, %v4353
    %v4900 = vpack.c.b16 %v4361, %v4354
    %v4901 = vpack.c.b16 %v4362, %v4355
    %v4902 = vpack.c.b16 %v4363, %v4356
    %v4903 = vpack.c.b16 %v4364, %v4357
    %v4904 = vpack.c.b16 %v4365, %v4358
    %v4905 = vpack.c.b16 %v4373, %v4366
    %v4906 = vpack.c.b16 %v4374, %v4367
    %v4907 = vpack.c.b16 %v4375, %v4368
    %v4908 = vpack.c.b16 %v4376, %v4369
    %v4909 = vpack.c.b16 %v4377, %v4370
    %v4910 = vpack.c.b16 %v4378, %v4371
    %v4911 = vpack.c.b16 %v4379, %v4372
    %v4912 = vpack.c.b16 %v4387, %v4380
    %v4913 = vpack.c.b16 %v4388, %v4381
    %v4914 = vpack.c.b16 %v4389, %v4382
    %v4915 = vpack.c.b16 %v4390, %v4383
    %v4916 = vpack.c.b16 %v4391, %v4384
    %v4917 = vpack.c.b16 %v4392, %v4385
    %v4918 = vpack.c.b16 %v4393, %v4386
    %v4919 = vpack.c.b16 %v4401, %v4394
    %v4920 = vpack.c.b16 %v4402, %v4395
    %v4921 = vpack.c.b16 %v4403, %v4396
    %v4922 = vpack.c.b16 %v4404, %v4397
    %v4923 = vpack.c.b16 %v4405, %v4398
    %v4924 = vpack.c.b16 %v4406, %v4399
    %v4925 = vpack.c.b16 %v4407, %v4400
    %v4926 = vpack.c.b16 %v4415, %v4408
    %v4927 = vpack.c.b16 %v4416, %v4409
    %v4928 = vpack.c.b16 %v4417, %v4410
    %v4929 = vpack.c.b16 %v4418, %v4411
    %v4930 = vpack.c.b16 %v4419, %v4412
    %v4931 = vpack.c.b16 %v4420, %v4413
    %v4932 = vpack.c.b16 %v4421, %v4414
    %v4933 = vpack.c.b16 %v4429, %v4422
    %v4934 = vpack.c.b16 %v4430, %v4423
    %v4935 = vpack.c.b16 %v4431, %v4424
    %v4936 = vpack.c.b16 %v4432, %v4425
    %v4937 = vpack.c.b16 %v4433, %v4426
    %v4938 = vpack.c.b16 %v4434, %v4427
    %v4939 = vpack.c.b16 %v4435, %v4428
    %v4940 = vpack.c.b16 %v4443, %v4436
    %v4941 = vpack.c.b16 %v4444, %v4437
    %v4942 = vpack.c.b16 %v4445, %v4438
    %v4943 = vpack.c.b16 %v4446, %v4439
    %v4944 = vpack.c.b16 %v4447, %v4440
    %v4945 = vpack.c.b16 %v4448, %v4441
    %v4946 = vpack.c.b16 %v4449, %v4442
    %v4947 = vpack.c.b16 %v4457, %v4450
    %v4948 = vpack.c.b16 %v4458, %v4451
    %v4949 = vpack.c.b16 %v4459, %v4452
    %v4950 = vpack.c.b16 %v4460, %v4453
    %v4951 = vpack.c.b16 %v4461, %v4454
    %v4952 = vpack.c.b16 %v4462, %v4455
    %v4953 = vpack.c.b16 %v4463, %v4456
    %v4954 = vpack.c.b16 %v4471, %v4464
    %v4955 = vpack.c.b16 %v4472, %v4465
    %v4956 = vpack.c.b16 %v4473, %v4466
    %v4957 = vpack.c.b16 %v4474, %v4467
    %v4958 = vpack.c.b16 %v4475, %v4468
    %v4959 = vpack.c.b16 %v4476, %v4469
    %v4960 = vpack.c.b16 %v4477, %v4470
    %v4961 = vpack.c.b16 %v4485, %v4478
    %v4962 = vpack.c.b16 %v4486, %v4479
    %v4963 = vpack.c.b16 %v4487, %v4480
    %v4964 = vpack.c.b16 %v4488, %v4481
    %v4965 = vpack.c.b16 %v4489, %v4482
    %v4966 = vpack.c.b16 %v4490, %v4483
    %v4967 = vpack.c.b16 %v4491, %v4484
    %v4968 = vpack.c.b16 %v4499, %v4492
    %v4969 = vpack.c.b16 %v4500, %v4493
    %v4970 = vpack.c.b16 %v4501, %v4494
    %v4971 = vpack.c.b16 %v4502, %v4495
    %v4972 = vpack.c.b16 %v4503, %v4496
    %v4973 = vpack.c.b16 %v4504, %v4497
    %v4974 = vpack.c.b16 %v4505, %v4498
    %v4975 = vpack.c.b16 %v4513, %v4506
    %v4976 = vpack.c.b16 %v4514, %v4507
    %v4977 = vpack.c.b16 %v4515, %v4508
    %v4978 = vpack.c.b16 %v4516, %v4509
    %v4979 = vpack.c.b16 %v4517, %v4510
    %v4980 = vpack.c.b16 %v4518, %v4511
    %v4981 = vpack.c.b16 %v4519, %v4512
    %v4982 = vpack.c.b16 %v4527, %v4520
    %v4983 = vpack.c.b16 %v4528, %v4521
    %v4984 = vpack.c.b16 %v4529, %v4522
    %v4985 = vpack.c.b16 %v4530, %v4523
    %v4986 = vpack.c.b16 %v4531, %v4524
    %v4987 = vpack.c.b16 %v4532, %v4525
    %v4988 = vpack.c.b16 %v4533, %v4526
    %v4989 = vpack.c.b16 %v4541, %v4534
    %v4990 = vpack.c.b16 %v4542, %v4535
    %v4991 = vpack.c.b16 %v4543, %v4536
    %v4992 = vpack.c.b16 %v4544, %v4537
    %v4993 = vpack.c.b16 %v4545, %v4538
    %v4994 = vpack.c.b16 %v4546, %v4539
    %v4995 = vpack.c.b16 %v4547, %v4540
    %5444 = vmatprep.subr.bf16.mxu0 %v4549
    %5445 = vmatpush1.bf16.msra.mxu0 %v4548
    %5446 = vmatprep.subr.bf16.mxu0 %v4556
    %5447 = vmatpush1.bf16.msra.mxu0 %v4555
    %5448 = vmatprep.subr.bf16.mxu0 %v4563
    %5449 = vmatpush1.bf16.msra.mxu0 %v4562
    %5450 = vmatprep.subr.bf16.mxu0 %v4570
    %5451 = vmatpush1.bf16.msra.mxu0 %v4569
    %5452 = vmatprep.subr.bf16.mxu0 %v4577
    %5453 = vmatpush1.bf16.msra.mxu0 %v4576
    %5454 = vmatprep.subr.bf16.mxu0 %v4584
    %5455 = vmatpush1.bf16.msra.mxu0 %v4583
    %5456 = vmatprep.subr.bf16.mxu0 %v4591
    %5457 = vmatpush1.bf16.msra.mxu0 %v4590
    %5458 = vmatprep.subr.bf16.mxu0 %v4598
    %5459 = vmatpush1.bf16.msra.mxu0 %v4597
    %5460 = vmatprep.subr.bf16.mxu0 %v4605
    %5461 = vmatpush1.bf16.msra.mxu0 %v4604
    %5462 = vmatprep.subr.bf16.mxu0 %v4612
    %5463 = vmatpush1.bf16.msra.mxu0 %v4611
    %5464 = vmatprep.subr.bf16.mxu0 %v4619
    %5465 = vmatpush1.bf16.msra.mxu0 %v4618
    %5466 = vmatprep.subr.bf16.mxu0 %v4626
    %5467 = vmatpush1.bf16.msra.mxu0 %v4625
    %5468 = vmatprep.subr.bf16.mxu0 %v4633
    %5469 = vmatpush1.bf16.msra.mxu0 %v4632
    %5470 = vmatprep.subr.bf16.mxu0 %v4640
    %5471 = vmatpush1.bf16.msra.mxu0 %v4639
    %5472 = vmatprep.subr.bf16.mxu0 %v4647
    %5473 = vmatpush1.bf16.msra.mxu0 %v4646
    %5474 = vmatprep.subr.bf16.mxu0 %v4654
    %5475 = vmatpush1.bf16.msra.mxu0 %v4653
    %5476 = vmatprep.mubr.bf16.mxu0 %v2584
    %5477 = vmatmul.mubr.bf16.gmra.mrb[0].mxu0 %v2583
    %v5478 = vpop.f32.mrb[0].mxu0
    %v5479 = vadd.f32 %v3108, %v5478
    %v5480 = vpop.f32.mrb[0].mxu0
    %v5481 = vadd.f32 %v3112, %v5480
    %v5482 = vpop.f32.mrb[0].mxu0
    %v5483 = vpop.f32.mrb[0].mxu0
    %5484 = vdwg.mxu0
    %5485 = vmatprep.subr.bf16.mxu0 %v4661
    %5486 = vmatpush1.bf16.msra.mxu0 %v4660
    %5487 = vmatprep.subr.bf16.mxu0 %v4668
    %5488 = vmatpush1.bf16.msra.mxu0 %v4667
    %5489 = vmatprep.subr.bf16.mxu0 %v4675
    %5490 = vmatpush1.bf16.msra.mxu0 %v4674
    %5491 = vmatprep.subr.bf16.mxu0 %v4682
    %5492 = vmatpush1.bf16.msra.mxu0 %v4681
    %5493 = vmatprep.subr.bf16.mxu0 %v4689
    %5494 = vmatpush1.bf16.msra.mxu0 %v4688
    %5495 = vmatprep.subr.bf16.mxu0 %v4696
    %5496 = vmatpush1.bf16.msra.mxu0 %v4695
    %5497 = vmatprep.subr.bf16.mxu0 %v4703
    %5498 = vmatpush1.bf16.msra.mxu0 %v4702
    %5499 = vmatprep.subr.bf16.mxu0 %v4710
    %5500 = vmatpush1.bf16.msra.mxu0 %v4709
    %5501 = vmatprep.subr.bf16.mxu0 %v4717
    %5502 = vmatpush1.bf16.msra.mxu0 %v4716
    %5503 = vmatprep.subr.bf16.mxu0 %v4724
    %5504 = vmatpush1.bf16.msra.mxu0 %v4723
    %5505 = vmatprep.subr.bf16.mxu0 %v4731
    %5506 = vmatpush1.bf16.msra.mxu0 %v4730
    %5507 = vmatprep.subr.bf16.mxu0 %v4738
    %5508 = vmatpush1.bf16.msra.mxu0 %v4737
    %5509 = vmatprep.subr.bf16.mxu0 %v4745
    %5510 = vmatpush1.bf16.msra.mxu0 %v4744
    %5511 = vmatprep.subr.bf16.mxu0 %v4752
    %5512 = vmatpush1.bf16.msra.mxu0 %v4751
    %5513 = vmatprep.subr.bf16.mxu0 %v4759
    %5514 = vmatpush1.bf16.msra.mxu0 %v4758
    %5515 = vmatprep.subr.bf16.mxu0 %v4766
    %5516 = vmatpush1.bf16.msra.mxu0 %v4765
    %5517 = vmatprep.mubr.bf16.mxu0 %v2586
    %5518 = vmatmul.mubr.bf16.gmra.mrb[0].mxu0 %v2585
    %v5519 = vpop.f32.mrb[0].mxu0
    %v5520 = vadd.f32 %v5479, %v5519
    %v5521 = vpop.f32.mrb[0].mxu0
    %v5522 = vadd.f32 %v5481, %v5521
    %v5523 = vpop.f32.mrb[0].mxu0
    %v5524 = vpop.f32.mrb[0].mxu0
    %5525 = vdwg.mxu0
    %5526 = vmatprep.subr.bf16.mxu0 %v4773
    %5527 = vmatpush1.bf16.msra.mxu0 %v4772
    %5528 = vmatprep.subr.bf16.mxu0 %v4780
    %5529 = vmatpush1.bf16.msra.mxu0 %v4779
    %5530 = vmatprep.subr.bf16.mxu0 %v4787
    %5531 = vmatpush1.bf16.msra.mxu0 %v4786
    %5532 = vmatprep.subr.bf16.mxu0 %v4794
    %5533 = vmatpush1.bf16.msra.mxu0 %v4793
    %5534 = vmatprep.subr.bf16.mxu0 %v4801
    %5535 = vmatpush1.bf16.msra.mxu0 %v4800
    %5536 = vmatprep.subr.bf16.mxu0 %v4808
    %5537 = vmatpush1.bf16.msra.mxu0 %v4807
    %5538 = vmatprep.subr.bf16.mxu0 %v4815
    %5539 = vmatpush1.bf16.msra.mxu0 %v4814
    %5540 = vmatprep.subr.bf16.mxu0 %v4822
    %5541 = vmatpush1.bf16.msra.mxu0 %v4821
    %5542 = vmatprep.subr.bf16.mxu0 %v4829
    %5543 = vmatpush1.bf16.msra.mxu0 %v4828
    %5544 = vmatprep.subr.bf16.mxu0 %v4836
    %5545 = vmatpush1.bf16.msra.mxu0 %v4835
    %5546 = vmatprep.subr.bf16.mxu0 %v4843
    %5547 = vmatpush1.bf16.msra.mxu0 %v4842
    %5548 = vmatprep.subr.bf16.mxu0 %v4850
    %5549 = vmatpush1.bf16.msra.mxu0 %v4849
    %5550 = vmatprep.subr.bf16.mxu0 %v4857
    %5551 = vmatpush1.bf16.msra.mxu0 %v4856
    %5552 = vmatprep.subr.bf16.mxu0 %v4864
    %5553 = vmatpush1.bf16.msra.mxu0 %v4863
    %5554 = vmatprep.subr.bf16.mxu0 %v4871
    %5555 = vmatpush1.bf16.msra.mxu0 %v4870
    %5556 = vmatprep.subr.bf16.mxu0 %v4878
    %5557 = vmatpush1.bf16.msra.mxu0 %v4877
    %5558 = vmatprep.mubr.bf16.mxu0 %v2588
    %5559 = vmatmul.mubr.bf16.gmra.mrb[0].mxu0 %v2587
    %v5560 = vpop.f32.mrb[0].mxu0
    %v5561 = vadd.f32 %v5520, %v5560
    %v5562 = vpop.f32.mrb[0].mxu0
    %v5563 = vadd.f32 %v5522, %v5562
    %v5564 = vpop.f32.mrb[0].mxu0
    %v5565 = vpop.f32.mrb[0].mxu0
    %5566 = vdwg.mxu0
    %5567 = vmatprep.subr.bf16.mxu0 %v4885
    %5568 = vmatpush1.bf16.msra.mxu0 %v4884
    %5569 = vmatprep.subr.bf16.mxu0 %v4892
    %5570 = vmatpush1.bf16.msra.mxu0 %v4891
    %5571 = vmatprep.subr.bf16.mxu0 %v4899
    %5572 = vmatpush1.bf16.msra.mxu0 %v4898
    %5573 = vmatprep.subr.bf16.mxu0 %v4906
    %5574 = vmatpush1.bf16.msra.mxu0 %v4905
    %5575 = vmatprep.subr.bf16.mxu0 %v4913
    %5576 = vmatpush1.bf16.msra.mxu0 %v4912
    %5577 = vmatprep.subr.bf16.mxu0 %v4920
    %5578 = vmatpush1.bf16.msra.mxu0 %v4919
    %5579 = vmatprep.subr.bf16.mxu0 %v4927
    %5580 = vmatpush1.bf16.msra.mxu0 %v4926
    %5581 = vmatprep.subr.bf16.mxu0 %v4934
    %5582 = vmatpush1.bf16.msra.mxu0 %v4933
    %5583 = vmatprep.subr.bf16.mxu0 %v4941
    %5584 = vmatpush1.bf16.msra.mxu0 %v4940
    %5585 = vmatprep.subr.bf16.mxu0 %v4948
    %5586 = vmatpush1.bf16.msra.mxu0 %v4947
    %5587 = vmatprep.subr.bf16.mxu0 %v4955
    %5588 = vmatpush1.bf16.msra.mxu0 %v4954
    %5589 = vmatprep.subr.bf16.mxu0 %v4962
    %5590 = vmatpush1.bf16.msra.mxu0 %v4961
    %5591 = vmatprep.subr.bf16.mxu0 %v4969
    %5592 = vmatpush1.bf16.msra.mxu0 %v4968
    %5593 = vmatprep.subr.bf16.mxu0 %v4976
    %5594 = vmatpush1.bf16.msra.mxu0 %v4975
    %5595 = vmatprep.subr.bf16.mxu0 %v4983
    %5596 = vmatpush1.bf16.msra.mxu0 %v4982
    %5597 = vmatprep.subr.bf16.mxu0 %v4990
    %5598 = vmatpush1.bf16.msra.mxu0 %v4989
    %5599 = vmatprep.mubr.bf16.mxu0 %v2590
    %5600 = vmatmul.mubr.bf16.gmra.mrb[0].mxu0 %v2589
    %v5601 = vpop.f32.mrb[0].mxu0
    %v5602 = vadd.f32 %v5561, %v5601
    %v5603 = vpop.f32.mrb[0].mxu0
    %v5604 = vadd.f32 %v5563, %v5603
    %v5605 = vpop.f32.mrb[0].mxu0
    %v5606 = vpop.f32.mrb[0].mxu0
    %5607 = vdwg.mxu0
    %5608 = vmatprep.subr.bf16.mxu0 %v4551
    %5609 = vmatpush1.bf16.msra.mxu0 %v4550
    %5610 = vmatprep.subr.bf16.mxu0 %v4558
    %5611 = vmatpush1.bf16.msra.mxu0 %v4557
    %5612 = vmatprep.subr.bf16.mxu0 %v4565
    %5613 = vmatpush1.bf16.msra.mxu0 %v4564
    %5614 = vmatprep.subr.bf16.mxu0 %v4572
    %5615 = vmatpush1.bf16.msra.mxu0 %v4571
    %5616 = vmatprep.subr.bf16.mxu0 %v4579
    %5617 = vmatpush1.bf16.msra.mxu0 %v4578
    %5618 = vmatprep.subr.bf16.mxu0 %v4586
    %5619 = vmatpush1.bf16.msra.mxu0 %v4585
    %5620 = vmatprep.subr.bf16.mxu0 %v4593
    %5621 = vmatpush1.bf16.msra.mxu0 %v4592
    %5622 = vmatprep.subr.bf16.mxu0 %v4600
    %5623 = vmatpush1.bf16.msra.mxu0 %v4599
    %5624 = vmatprep.subr.bf16.mxu0 %v4607
    %5625 = vmatpush1.bf16.msra.mxu0 %v4606
    %5626 = vmatprep.subr.bf16.mxu0 %v4614
    %5627 = vmatpush1.bf16.msra.mxu0 %v4613
    %5628 = vmatprep.subr.bf16.mxu0 %v4621
    %5629 = vmatpush1.bf16.msra.mxu0 %v4620
    %5630 = vmatprep.subr.bf16.mxu0 %v4628
    %5631 = vmatpush1.bf16.msra.mxu0 %v4627
    %5632 = vmatprep.subr.bf16.mxu0 %v4635
    %5633 = vmatpush1.bf16.msra.mxu0 %v4634
    %5634 = vmatprep.subr.bf16.mxu0 %v4642
    %5635 = vmatpush1.bf16.msra.mxu0 %v4641
    %5636 = vmatprep.subr.bf16.mxu0 %v4649
    %5637 = vmatpush1.bf16.msra.mxu0 %v4648
    %5638 = vmatprep.subr.bf16.mxu0 %v4656
    %5639 = vmatpush1.bf16.msra.mxu0 %v4655
    %5640 = vmatprep.mubr.bf16.mxu0 %v2584
    %5641 = vmatmul.mubr.bf16.gmra.mrb[0].mxu0 %v2583
    %v5642 = vpop.f32.mrb[0].mxu0
    %v5643 = vadd.f32 %v3116, %v5642
    %v5644 = vpop.f32.mrb[0].mxu0
    %v5645 = vadd.f32 %v3120, %v5644
    %v5646 = vpop.f32.mrb[0].mxu0
    %v5647 = vpop.f32.mrb[0].mxu0
    %5648 = vdwg.mxu0
    %5649 = vmatprep.subr.bf16.mxu0 %v4663
    %5650 = vmatpush1.bf16.msra.mxu0 %v4662
    %5651 = vmatprep.subr.bf16.mxu0 %v4670
    %5652 = vmatpush1.bf16.msra.mxu0 %v4669
    %5653 = vmatprep.subr.bf16.mxu0 %v4677
    %5654 = vmatpush1.bf16.msra.mxu0 %v4676
    %5655 = vmatprep.subr.bf16.mxu0 %v4684
    %5656 = vmatpush1.bf16.msra.mxu0 %v4683
    %5657 = vmatprep.subr.bf16.mxu0 %v4691
    %5658 = vmatpush1.bf16.msra.mxu0 %v4690
    %5659 = vmatprep.subr.bf16.mxu0 %v4698
    %5660 = vmatpush1.bf16.msra.mxu0 %v4697
    %5661 = vmatprep.subr.bf16.mxu0 %v4705
    %5662 = vmatpush1.bf16.msra.mxu0 %v4704
    %5663 = vmatprep.subr.bf16.mxu0 %v4712
    %5664 = vmatpush1.bf16.msra.mxu0 %v4711
    %5665 = vmatprep.subr.bf16.mxu0 %v4719
    %5666 = vmatpush1.bf16.msra.mxu0 %v4718
    %5667 = vmatprep.subr.bf16.mxu0 %v4726
    %5668 = vmatpush1.bf16.msra.mxu0 %v4725
    %5669 = vmatprep.subr.bf16.mxu0 %v4733
    %5670 = vmatpush1.bf16.msra.mxu0 %v4732
    %5671 = vmatprep.subr.bf16.mxu0 %v4740
    %5672 = vmatpush1.bf16.msra.mxu0 %v4739
    %5673 = vmatprep.subr.bf16.mxu0 %v4747
    %5674 = vmatpush1.bf16.msra.mxu0 %v4746
    %5675 = vmatprep.subr.bf16.mxu0 %v4754
    %5676 = vmatpush1.bf16.msra.mxu0 %v4753
    %5677 = vmatprep.subr.bf16.mxu0 %v4761
    %5678 = vmatpush1.bf16.msra.mxu0 %v4760
    %5679 = vmatprep.subr.bf16.mxu0 %v4768
    %5680 = vmatpush1.bf16.msra.mxu0 %v4767
    %5681 = vmatprep.mubr.bf16.mxu0 %v2586
    %5682 = vmatmul.mubr.bf16.gmra.mrb[0].mxu0 %v2585
    %v5683 = vpop.f32.mrb[0].mxu0
    %v5684 = vadd.f32 %v5643, %v5683
    %v5685 = vpop.f32.mrb[0].mxu0
    %v5686 = vadd.f32 %v5645, %v5685
    %v5687 = vpop.f32.mrb[0].mxu0
    %v5688 = vpop.f32.mrb[0].mxu0
    %5689 = vdwg.mxu0
    %5690 = vmatprep.subr.bf16.mxu0 %v4775
    %5691 = vmatpush1.bf16.msra.mxu0 %v4774
    %5692 = vmatprep.subr.bf16.mxu0 %v4782
    %5693 = vmatpush1.bf16.msra.mxu0 %v4781
    %5694 = vmatprep.subr.bf16.mxu0 %v4789
    %5695 = vmatpush1.bf16.msra.mxu0 %v4788
    %5696 = vmatprep.subr.bf16.mxu0 %v4796
    %5697 = vmatpush1.bf16.msra.mxu0 %v4795
    %5698 = vmatprep.subr.bf16.mxu0 %v4803
    %5699 = vmatpush1.bf16.msra.mxu0 %v4802
    %5700 = vmatprep.subr.bf16.mxu0 %v4810
    %5701 = vmatpush1.bf16.msra.mxu0 %v4809
    %5702 = vmatprep.subr.bf16.mxu0 %v4817
    %5703 = vmatpush1.bf16.msra.mxu0 %v4816
    %5704 = vmatprep.subr.bf16.mxu0 %v4824
    %5705 = vmatpush1.bf16.msra.mxu0 %v4823
    %5706 = vmatprep.subr.bf16.mxu0 %v4831
    %5707 = vmatpush1.bf16.msra.mxu0 %v4830
    %5708 = vmatprep.subr.bf16.mxu0 %v4838
    %5709 = vmatpush1.bf16.msra.mxu0 %v4837
    %5710 = vmatprep.subr.bf16.mxu0 %v4845
    %5711 = vmatpush1.bf16.msra.mxu0 %v4844
    %5712 = vmatprep.subr.bf16.mxu0 %v4852
    %5713 = vmatpush1.bf16.msra.mxu0 %v4851
    %5714 = vmatprep.subr.bf16.mxu0 %v4859
    %5715 = vmatpush1.bf16.msra.mxu0 %v4858
    %5716 = vmatprep.subr.bf16.mxu0 %v4866
    %5717 = vmatpush1.bf16.msra.mxu0 %v4865
    %5718 = vmatprep.subr.bf16.mxu0 %v4873
    %5719 = vmatpush1.bf16.msra.mxu0 %v4872
    %5720 = vmatprep.subr.bf16.mxu0 %v4880
    %5721 = vmatpush1.bf16.msra.mxu0 %v4879
    %5722 = vmatprep.mubr.bf16.mxu0 %v2588
    %5723 = vmatmul.mubr.bf16.gmra.mrb[0].mxu0 %v2587
    %v5724 = vpop.f32.mrb[0].mxu0
    %v5725 = vadd.f32 %v5684, %v5724
    %v5726 = vpop.f32.mrb[0].mxu0
    %v5727 = vadd.f32 %v5686, %v5726
    %v5728 = vpop.f32.mrb[0].mxu0
    %v5729 = vpop.f32.mrb[0].mxu0
    %5730 = vdwg.mxu0
    %5731 = vmatprep.subr.bf16.mxu0 %v4887
    %5732 = vmatpush1.bf16.msra.mxu0 %v4886
    %5733 = vmatprep.subr.bf16.mxu0 %v4894
    %5734 = vmatpush1.bf16.msra.mxu0 %v4893
    %5735 = vmatprep.subr.bf16.mxu0 %v4901
    %5736 = vmatpush1.bf16.msra.mxu0 %v4900
    %5737 = vmatprep.subr.bf16.mxu0 %v4908
    %5738 = vmatpush1.bf16.msra.mxu0 %v4907
    %5739 = vmatprep.subr.bf16.mxu0 %v4915
    %5740 = vmatpush1.bf16.msra.mxu0 %v4914
    %5741 = vmatprep.subr.bf16.mxu0 %v4922
    %5742 = vmatpush1.bf16.msra.mxu0 %v4921
    %5743 = vmatprep.subr.bf16.mxu0 %v4929
    %5744 = vmatpush1.bf16.msra.mxu0 %v4928
    %5745 = vmatprep.subr.bf16.mxu0 %v4936
    %5746 = vmatpush1.bf16.msra.mxu0 %v4935
    %5747 = vmatprep.subr.bf16.mxu0 %v4943
    %5748 = vmatpush1.bf16.msra.mxu0 %v4942
    %5749 = vmatprep.subr.bf16.mxu0 %v4950
    %5750 = vmatpush1.bf16.msra.mxu0 %v4949
    %5751 = vmatprep.subr.bf16.mxu0 %v4957
    %5752 = vmatpush1.bf16.msra.mxu0 %v4956
    %5753 = vmatprep.subr.bf16.mxu0 %v4964
    %5754 = vmatpush1.bf16.msra.mxu0 %v4963
    %5755 = vmatprep.subr.bf16.mxu0 %v4971
    %5756 = vmatpush1.bf16.msra.mxu0 %v4970
    %5757 = vmatprep.subr.bf16.mxu0 %v4978
    %5758 = vmatpush1.bf16.msra.mxu0 %v4977
    %5759 = vmatprep.subr.bf16.mxu0 %v4985
    %5760 = vmatpush1.bf16.msra.mxu0 %v4984
    %5761 = vmatprep.subr.bf16.mxu0 %v4992
    %5762 = vmatpush1.bf16.msra.mxu0 %v4991
    %5763 = vmatprep.mubr.bf16.mxu0 %v2590
    %5764 = vmatmul.mubr.bf16.gmra.mrb[0].mxu0 %v2589
    %v5765 = vpop.f32.mrb[0].mxu0
    %v5766 = vadd.f32 %v5725, %v5765
    %v5767 = vpop.f32.mrb[0].mxu0
    %v5768 = vadd.f32 %v5727, %v5767
    %v5769 = vpop.f32.mrb[0].mxu0
    %v5770 = vpop.f32.mrb[0].mxu0
    %5771 = vdwg.mxu0
    %5772 = vmatprep.subr.bf16.mxu0 %v4553
    %5773 = vmatpush1.bf16.msra.mxu0 %v4552
    %5774 = vmatprep.subr.bf16.mxu0 %v4560
    %5775 = vmatpush1.bf16.msra.mxu0 %v4559
    %5776 = vmatprep.subr.bf16.mxu0 %v4567
    %5777 = vmatpush1.bf16.msra.mxu0 %v4566
    %5778 = vmatprep.subr.bf16.mxu0 %v4574
    %5779 = vmatpush1.bf16.msra.mxu0 %v4573
    %5780 = vmatprep.subr.bf16.mxu0 %v4581
    %5781 = vmatpush1.bf16.msra.mxu0 %v4580
    %5782 = vmatprep.subr.bf16.mxu0 %v4588
    %5783 = vmatpush1.bf16.msra.mxu0 %v4587
    %5784 = vmatprep.subr.bf16.mxu0 %v4595
    %5785 = vmatpush1.bf16.msra.mxu0 %v4594
    %5786 = vmatprep.subr.bf16.mxu0 %v4602
    %5787 = vmatpush1.bf16.msra.mxu0 %v4601
    %5788 = vmatprep.subr.bf16.mxu0 %v4609
    %5789 = vmatpush1.bf16.msra.mxu0 %v4608
    %5790 = vmatprep.subr.bf16.mxu0 %v4616
    %5791 = vmatpush1.bf16.msra.mxu0 %v4615
    %5792 = vmatprep.subr.bf16.mxu0 %v4623
    %5793 = vmatpush1.bf16.msra.mxu0 %v4622
    %5794 = vmatprep.subr.bf16.mxu0 %v4630
    %5795 = vmatpush1.bf16.msra.mxu0 %v4629
    %5796 = vmatprep.subr.bf16.mxu0 %v4637
    %5797 = vmatpush1.bf16.msra.mxu0 %v4636
    %5798 = vmatprep.subr.bf16.mxu0 %v4644
    %5799 = vmatpush1.bf16.msra.mxu0 %v4643
    %5800 = vmatprep.subr.bf16.mxu0 %v4651
    %5801 = vmatpush1.bf16.msra.mxu0 %v4650
    %5802 = vmatprep.subr.bf16.mxu0 %v4658
    %5803 = vmatpush1.bf16.msra.mxu0 %v4657
    %5804 = vmatprep.mubr.bf16.mxu0 %v2584
    %5805 = vmatmul.mubr.bf16.gmra.mrb[0].mxu0 %v2583
    %v5806 = vpop.f32.mrb[0].mxu0
    %v5807 = vadd.f32 %v3124, %v5806
    %v5808 = vpop.f32.mrb[0].mxu0
    %v5809 = vadd.f32 %v3128, %v5808
    %v5810 = vpop.f32.mrb[0].mxu0
    %v5811 = vpop.f32.mrb[0].mxu0
    %5812 = vdwg.mxu0
    %5813 = vmatprep.subr.bf16.mxu0 %v4665
    %5814 = vmatpush1.bf16.msra.mxu0 %v4664
    %5815 = vmatprep.subr.bf16.mxu0 %v4672
    %5816 = vmatpush1.bf16.msra.mxu0 %v4671
    %5817 = vmatprep.subr.bf16.mxu0 %v4679
    %5818 = vmatpush1.bf16.msra.mxu0 %v4678
    %5819 = vmatprep.subr.bf16.mxu0 %v4686
    %5820 = vmatpush1.bf16.msra.mxu0 %v4685
    %5821 = vmatprep.subr.bf16.mxu0 %v4693
    %5822 = vmatpush1.bf16.msra.mxu0 %v4692
    %5823 = vmatprep.subr.bf16.mxu0 %v4700
    %5824 = vmatpush1.bf16.msra.mxu0 %v4699
    %5825 = vmatprep.subr.bf16.mxu0 %v4707
    %5826 = vmatpush1.bf16.msra.mxu0 %v4706
    %5827 = vmatprep.subr.bf16.mxu0 %v4714
    %5828 = vmatpush1.bf16.msra.mxu0 %v4713
    %5829 = vmatprep.subr.bf16.mxu0 %v4721
    %5830 = vmatpush1.bf16.msra.mxu0 %v4720
    %5831 = vmatprep.subr.bf16.mxu0 %v4728
    %5832 = vmatpush1.bf16.msra.mxu0 %v4727
    %5833 = vmatprep.subr.bf16.mxu0 %v4735
    %5834 = vmatpush1.bf16.msra.mxu0 %v4734
    %5835 = vmatprep.subr.bf16.mxu0 %v4742
    %5836 = vmatpush1.bf16.msra.mxu0 %v4741
    %5837 = vmatprep.subr.bf16.mxu0 %v4749
    %5838 = vmatpush1.bf16.msra.mxu0 %v4748
    %5839 = vmatprep.subr.bf16.mxu0 %v4756
    %5840 = vmatpush1.bf16.msra.mxu0 %v4755
    %5841 = vmatprep.subr.bf16.mxu0 %v4763
    %5842 = vmatpush1.bf16.msra.mxu0 %v4762
    %5843 = vmatprep.subr.bf16.mxu0 %v4770
    %5844 = vmatpush1.bf16.msra.mxu0 %v4769
    %5845 = vmatprep.mubr.bf16.mxu0 %v2586
    %5846 = vmatmul.mubr.bf16.gmra.mrb[0].mxu0 %v2585
    %v5847 = vpop.f32.mrb[0].mxu0
    %v5848 = vadd.f32 %v5807, %v5847
    %v5849 = vpop.f32.mrb[0].mxu0
    %v5850 = vadd.f32 %v5809, %v5849
    %v5851 = vpop.f32.mrb[0].mxu0
    %v5852 = vpop.f32.mrb[0].mxu0
    %5853 = vdwg.mxu0
    %5854 = vmatprep.subr.bf16.mxu0 %v4777
    %5855 = vmatpush1.bf16.msra.mxu0 %v4776
    %5856 = vmatprep.subr.bf16.mxu0 %v4784
    %5857 = vmatpush1.bf16.msra.mxu0 %v4783
    %5858 = vmatprep.subr.bf16.mxu0 %v4791
    %5859 = vmatpush1.bf16.msra.mxu0 %v4790
    %5860 = vmatprep.subr.bf16.mxu0 %v4798
    %5861 = vmatpush1.bf16.msra.mxu0 %v4797
    %5862 = vmatprep.subr.bf16.mxu0 %v4805
    %5863 = vmatpush1.bf16.msra.mxu0 %v4804
    %5864 = vmatprep.subr.bf16.mxu0 %v4812
    %5865 = vmatpush1.bf16.msra.mxu0 %v4811
    %5866 = vmatprep.subr.bf16.mxu0 %v4819
    %5867 = vmatpush1.bf16.msra.mxu0 %v4818
    %5868 = vmatprep.subr.bf16.mxu0 %v4826
    %5869 = vmatpush1.bf16.msra.mxu0 %v4825
    %5870 = vmatprep.subr.bf16.mxu0 %v4833
    %5871 = vmatpush1.bf16.msra.mxu0 %v4832
    %5872 = vmatprep.subr.bf16.mxu0 %v4840
    %5873 = vmatpush1.bf16.msra.mxu0 %v4839
    %5874 = vmatprep.subr.bf16.mxu0 %v4847
    %5875 = vmatpush1.bf16.msra.mxu0 %v4846
    %5876 = vmatprep.subr.bf16.mxu0 %v4854
    %5877 = vmatpush1.bf16.msra.mxu0 %v4853
    %5878 = vmatprep.subr.bf16.mxu0 %v4861
    %5879 = vmatpush1.bf16.msra.mxu0 %v4860
    %5880 = vmatprep.subr.bf16.mxu0 %v4868
    %5881 = vmatpush1.bf16.msra.mxu0 %v4867
    %5882 = vmatprep.subr.bf16.mxu0 %v4875
    %5883 = vmatpush1.bf16.msra.mxu0 %v4874
    %5884 = vmatprep.subr.bf16.mxu0 %v4882
    %5885 = vmatpush1.bf16.msra.mxu0 %v4881
    %5886 = vmatprep.mubr.bf16.mxu0 %v2588
    %5887 = vmatmul.mubr.bf16.gmra.mrb[0].mxu0 %v2587
    %v5888 = vpop.f32.mrb[0].mxu0
    %v5889 = vadd.f32 %v5848, %v5888
    %v5890 = vpop.f32.mrb[0].mxu0
    %v5891 = vadd.f32 %v5850, %v5890
    %v5892 = vpop.f32.mrb[0].mxu0
    %v5893 = vpop.f32.mrb[0].mxu0
    %5894 = vdwg.mxu0
    %5895 = vmatprep.subr.bf16.mxu0 %v4889
    %5896 = vmatpush1.bf16.msra.mxu0 %v4888
    %5897 = vmatprep.subr.bf16.mxu0 %v4896
    %5898 = vmatpush1.bf16.msra.mxu0 %v4895
    %5899 = vmatprep.subr.bf16.mxu0 %v4903
    %5900 = vmatpush1.bf16.msra.mxu0 %v4902
    %5901 = vmatprep.subr.bf16.mxu0 %v4910
    %5902 = vmatpush1.bf16.msra.mxu0 %v4909
    %5903 = vmatprep.subr.bf16.mxu0 %v4917
    %5904 = vmatpush1.bf16.msra.mxu0 %v4916
    %5905 = vmatprep.subr.bf16.mxu0 %v4924
    %5906 = vmatpush1.bf16.msra.mxu0 %v4923
    %5907 = vmatprep.subr.bf16.mxu0 %v4931
    %5908 = vmatpush1.bf16.msra.mxu0 %v4930
    %5909 = vmatprep.subr.bf16.mxu0 %v4938
    %5910 = vmatpush1.bf16.msra.mxu0 %v4937
    %5911 = vmatprep.subr.bf16.mxu0 %v4945
    %5912 = vmatpush1.bf16.msra.mxu0 %v4944
    %5913 = vmatprep.subr.bf16.mxu0 %v4952
    %5914 = vmatpush1.bf16.msra.mxu0 %v4951
    %5915 = vmatprep.subr.bf16.mxu0 %v4959
    %5916 = vmatpush1.bf16.msra.mxu0 %v4958
    %5917 = vmatprep.subr.bf16.mxu0 %v4966
    %5918 = vmatpush1.bf16.msra.mxu0 %v4965
    %5919 = vmatprep.subr.bf16.mxu0 %v4973
    %5920 = vmatpush1.bf16.msra.mxu0 %v4972
    %5921 = vmatprep.subr.bf16.mxu0 %v4980
    %5922 = vmatpush1.bf16.msra.mxu0 %v4979
    %5923 = vmatprep.subr.bf16.mxu0 %v4987
    %5924 = vmatpush1.bf16.msra.mxu0 %v4986
    %5925 = vmatprep.subr.bf16.mxu0 %v4994
    %5926 = vmatpush1.bf16.msra.mxu0 %v4993
    %5927 = vmatprep.mubr.bf16.mxu0 %v2590
    %5928 = vmatmul.mubr.bf16.gmra.mrb[0].mxu0 %v2589
    %v5929 = vpop.f32.mrb[0].mxu0
    %v5930 = vadd.f32 %v5889, %v5929
    %v5931 = vpop.f32.mrb[0].mxu0
    %v5932 = vadd.f32 %v5891, %v5931
    %v5933 = vpop.f32.mrb[0].mxu0
    %v5934 = vpop.f32.mrb[0].mxu0
    %5935 = vdwg.mxu0
    %5936 = vmatprep.subr.bf16.mxu0 0
    %5937 = vmatpush1.bf16.msra.mxu0 %v4554
    %5938 = vmatprep.subr.bf16.mxu0 0
    %5939 = vmatpush1.bf16.msra.mxu0 %v4561
    %5940 = vmatprep.subr.bf16.mxu0 0
    %5941 = vmatpush1.bf16.msra.mxu0 %v4568
    %5942 = vmatprep.subr.bf16.mxu0 0
    %5943 = vmatpush1.bf16.msra.mxu0 %v4575
    %5944 = vmatprep.subr.bf16.mxu0 0
    %5945 = vmatpush1.bf16.msra.mxu0 %v4582
    %5946 = vmatprep.subr.bf16.mxu0 0
    %5947 = vmatpush1.bf16.msra.mxu0 %v4589
    %5948 = vmatprep.subr.bf16.mxu0 0
    %5949 = vmatpush1.bf16.msra.mxu0 %v4596
    %5950 = vmatprep.subr.bf16.mxu0 0
    %5951 = vmatpush1.bf16.msra.mxu0 %v4603
    %5952 = vmatprep.subr.bf16.mxu0 0
    %5953 = vmatpush1.bf16.msra.mxu0 %v4610
    %5954 = vmatprep.subr.bf16.mxu0 0
    %5955 = vmatpush1.bf16.msra.mxu0 %v4617
    %5956 = vmatprep.subr.bf16.mxu0 0
    %5957 = vmatpush1.bf16.msra.mxu0 %v4624
    %5958 = vmatprep.subr.bf16.mxu0 0
    %5959 = vmatpush1.bf16.msra.mxu0 %v4631
    %5960 = vmatprep.subr.bf16.mxu0 0
    %5961 = vmatpush1.bf16.msra.mxu0 %v4638
    %5962 = vmatprep.subr.bf16.mxu0 0
    %5963 = vmatpush1.bf16.msra.mxu0 %v4645
    %5964 = vmatprep.subr.bf16.mxu0 0
    %5965 = vmatpush1.bf16.msra.mxu0 %v4652
    %5966 = vmatprep.subr.bf16.mxu0 0
    %5967 = vmatpush1.bf16.msra.mxu0 %v4659
    %5968 = vmatprep.mubr.bf16.mxu0 %v2584
    %5969 = vmatmul.mubr.bf16.gmra.mrb[0].mxu0 %v2583
    %v5970 = vpop.f32.mrb[0].mxu0
    %v5971 = vadd.f32 %v3132, %v5970
    %v5972 = vpop.f32.mrb[0].mxu0
    %v5973 = vpop.f32.mrb[0].mxu0
    %v5974 = vpop.f32.mrb[0].mxu0
    %5975 = vdwg.mxu0
    %5976 = vmatprep.subr.bf16.mxu0 0
    %5977 = vmatpush1.bf16.msra.mxu0 %v4666
    %5978 = vmatprep.subr.bf16.mxu0 0
    %5979 = vmatpush1.bf16.msra.mxu0 %v4673
    %5980 = vmatprep.subr.bf16.mxu0 0
    %5981 = vmatpush1.bf16.msra.mxu0 %v4680
    %5982 = vmatprep.subr.bf16.mxu0 0
    %5983 = vmatpush1.bf16.msra.mxu0 %v4687
    %5984 = vmatprep.subr.bf16.mxu0 0
    %5985 = vmatpush1.bf16.msra.mxu0 %v4694
    %5986 = vmatprep.subr.bf16.mxu0 0
    %5987 = vmatpush1.bf16.msra.mxu0 %v4701
    %5988 = vmatprep.subr.bf16.mxu0 0
    %5989 = vmatpush1.bf16.msra.mxu0 %v4708
    %5990 = vmatprep.subr.bf16.mxu0 0
    %5991 = vmatpush1.bf16.msra.mxu0 %v4715
    %5992 = vmatprep.subr.bf16.mxu0 0
    %5993 = vmatpush1.bf16.msra.mxu0 %v4722
    %5994 = vmatprep.subr.bf16.mxu0 0
    %5995 = vmatpush1.bf16.msra.mxu0 %v4729
    %5996 = vmatprep.subr.bf16.mxu0 0
    %5997 = vmatpush1.bf16.msra.mxu0 %v4736
    %5998 = vmatprep.subr.bf16.mxu0 0
    %5999 = vmatpush1.bf16.msra.mxu0 %v4743
    %6000 = vmatprep.subr.bf16.mxu0 0
    %6001 = vmatpush1.bf16.msra.mxu0 %v4750
    %6002 = vmatprep.subr.bf16.mxu0 0
    %6003 = vmatpush1.bf16.msra.mxu0 %v4757
    %6004 = vmatprep.subr.bf16.mxu0 0
    %6005 = vmatpush1.bf16.msra.mxu0 %v4764
    %6006 = vmatprep.subr.bf16.mxu0 0
    %6007 = vmatpush1.bf16.msra.mxu0 %v4771
    %6008 = vmatprep.mubr.bf16.mxu0 %v2586
    %6009 = vmatmul.mubr.bf16.gmra.mrb[0].mxu0 %v2585
    %v6010 = vpop.f32.mrb[0].mxu0
    %v6011 = vadd.f32 %v5971, %v6010
    %v6012 = vpop.f32.mrb[0].mxu0
    %v6013 = vpop.f32.mrb[0].mxu0
    %v6014 = vpop.f32.mrb[0].mxu0
    %6015 = vdwg.mxu0
    %6016 = vmatprep.subr.bf16.mxu0 0
    %6017 = vmatpush1.bf16.msra.mxu0 %v4778
    %6018 = vmatprep.subr.bf16.mxu0 0
    %6019 = vmatpush1.bf16.msra.mxu0 %v4785
    %6020 = vmatprep.subr.bf16.mxu0 0
    %6021 = vmatpush1.bf16.msra.mxu0 %v4792
    %6022 = vmatprep.subr.bf16.mxu0 0
    %6023 = vmatpush1.bf16.msra.mxu0 %v4799
    %6024 = vmatprep.subr.bf16.mxu0 0
    %6025 = vmatpush1.bf16.msra.mxu0 %v4806
    %6026 = vmatprep.subr.bf16.mxu0 0
    %6027 = vmatpush1.bf16.msra.mxu0 %v4813
    %6028 = vmatprep.subr.bf16.mxu0 0
    %6029 = vmatpush1.bf16.msra.mxu0 %v4820
    %6030 = vmatprep.subr.bf16.mxu0 0
    %6031 = vmatpush1.bf16.msra.mxu0 %v4827
    %6032 = vmatprep.subr.bf16.mxu0 0
    %6033 = vmatpush1.bf16.msra.mxu0 %v4834
    %6034 = vmatprep.subr.bf16.mxu0 0
    %6035 = vmatpush1.bf16.msra.mxu0 %v4841
    %6036 = vmatprep.subr.bf16.mxu0 0
    %6037 = vmatpush1.bf16.msra.mxu0 %v4848
    %6038 = vmatprep.subr.bf16.mxu0 0
    %6039 = vmatpush1.bf16.msra.mxu0 %v4855
    %6040 = vmatprep.subr.bf16.mxu0 0
    %6041 = vmatpush1.bf16.msra.mxu0 %v4862
    %6042 = vmatprep.subr.bf16.mxu0 0
    %6043 = vmatpush1.bf16.msra.mxu0 %v4869
    %6044 = vmatprep.subr.bf16.mxu0 0
    %6045 = vmatpush1.bf16.msra.mxu0 %v4876
    %6046 = vmatprep.subr.bf16.mxu0 0
    %6047 = vmatpush1.bf16.msra.mxu0 %v4883
    %6048 = vmatprep.mubr.bf16.mxu0 %v2588
    %6049 = vmatmul.mubr.bf16.gmra.mrb[0].mxu0 %v2587
    %v6050 = vpop.f32.mrb[0].mxu0
    %v6051 = vadd.f32 %v6011, %v6050
    %v6052 = vpop.f32.mrb[0].mxu0
    %v6053 = vpop.f32.mrb[0].mxu0
    %v6054 = vpop.f32.mrb[0].mxu0
    %6055 = vdwg.mxu0
    %6056 = vmatprep.subr.bf16.mxu0 0
    %6057 = vmatpush1.bf16.msra.mxu0 %v4890
    %6058 = vmatprep.subr.bf16.mxu0 0
    %6059 = vmatpush1.bf16.msra.mxu0 %v4897
    %6060 = vmatprep.subr.bf16.mxu0 0
    %6061 = vmatpush1.bf16.msra.mxu0 %v4904
    %6062 = vmatprep.subr.bf16.mxu0 0
    %6063 = vmatpush1.bf16.msra.mxu0 %v4911
    %6064 = vmatprep.subr.bf16.mxu0 0
    %6065 = vmatpush1.bf16.msra.mxu0 %v4918
    %6066 = vmatprep.subr.bf16.mxu0 0
    %6067 = vmatpush1.bf16.msra.mxu0 %v4925
    %6068 = vmatprep.subr.bf16.mxu0 0
    %6069 = vmatpush1.bf16.msra.mxu0 %v4932
    %6070 = vmatprep.subr.bf16.mxu0 0
    %6071 = vmatpush1.bf16.msra.mxu0 %v4939
    %6072 = vmatprep.subr.bf16.mxu0 0
    %6073 = vmatpush1.bf16.msra.mxu0 %v4946
    %6074 = vmatprep.subr.bf16.mxu0 0
    %6075 = vmatpush1.bf16.msra.mxu0 %v4953
    %6076 = vmatprep.subr.bf16.mxu0 0
    %6077 = vmatpush1.bf16.msra.mxu0 %v4960
    %6078 = vmatprep.subr.bf16.mxu0 0
    %6079 = vmatpush1.bf16.msra.mxu0 %v4967
    %6080 = vmatprep.subr.bf16.mxu0 0
    %6081 = vmatpush1.bf16.msra.mxu0 %v4974
    %6082 = vmatprep.subr.bf16.mxu0 0
    %6083 = vmatpush1.bf16.msra.mxu0 %v4981
    %6084 = vmatprep.subr.bf16.mxu0 0
    %6085 = vmatpush1.bf16.msra.mxu0 %v4988
    %6086 = vmatprep.subr.bf16.mxu0 0
    %6087 = vmatpush1.bf16.msra.mxu0 %v4995
    %6088 = vmatprep.mubr.bf16.mxu0 %v2590
    %6089 = vmatmul.mubr.bf16.gmra.mrb[0].mxu0 %v2589
    %v6090 = vpop.f32.mrb[0].mxu0
    %v6091 = vadd.f32 %v6051, %v6090
    %v6092 = vpop.f32.mrb[0].mxu0
    %v6093 = vpop.f32.mrb[0].mxu0
    %v6094 = vpop.f32.mrb[0].mxu0
    %6095 = vdwg.mxu0
    %v6096 = vtanh.pop %v5602
    %v6097 = vtanh.pop %v5604
    %v6098 = vtanh.pop %v5766
    %v6099 = vtanh.pop %v5768
    %v6100 = vtanh.pop %v5930
    %v6101 = vtanh.pop %v5932
    %v6102 = vtanh.pop %v6091
    %6103 = vst [vmem:[#allocation2] sm:$0xff] %v6096
    %6104 = vst [vmem:[#allocation2 + $0x8] sm:$0xff] %v6097
    %6105 = vst [vmem:[#allocation2 + $0x10] sm:$0xff] %v6098
    %6106 = vst [vmem:[#allocation2 + $0x18] sm:$0xff] %v6099
    %6107 = vst [vmem:[#allocation2 + $0x20] sm:$0xff] %v6100
    %6108 = vst [vmem:[#allocation2 + $0x28] sm:$0xff] %v6101
    %vm6109 = vcmask 130048
    %6110 = vst.msk [vmem:[#allocation2 + $0x30] sm:$0xff] %vm6109, %v6102
    // Predicated region
    $region38: #{tpu_custom_call.1} parent=1 // pred_check
      _
    $region39: #{tpu_custom_call.1} parent=1 // pred_check_branch
      %6112 = sbr.rel (0) target = $region41
    $region40: #{tpu_custom_call.1} parent=1 // pred_region
      %s6114 = ssub.s32 896, 896
      %6115 = vsyncadd [#allocation3], %s6114
      %s6117 = sshll.u32 [#allocation2], 4
      %s6118 = int_to_ptr.vmem [resolvable:$true] %s6117
      %6120 = dma.vmem_to_hbm [thread:$0]  %s6118, 896, %s9, [#allocation3]
    $region41: #{tpu_custom_call.1} parent=1 // pred_fallthru
      _
    // Predicated region
    $region42: #{tpu_custom_call.1} parent=1 // pred_check
      _
    $region43: #{tpu_custom_call.1} parent=1 // pred_check_branch
      %6122 = sbr.rel (0) target = $region45
    $region44: #{tpu_custom_call.1} parent=1 // pred_region
      %6123 = dma.done [#allocation3], 896
    $region45: #{tpu_custom_call.1} parent=1 // pred_fallthru
      _
    %6124 = vsyncpa [#allocation3], 1

</llo_original>
